<compile_context>
chip_gen: v7x
topology: tpu7x:2x2x1
jax: 0.10.0
libtpu: 0.0.40
codegen_flags: <defaults>
</compile_context>

<pallas_src>
import functools

import jax
import jax.numpy as jnp
from jax.experimental import pallas as pl
from jax.experimental.pallas import tpu as pltpu

# ---------------- small deterministic BERT config ----------------
B = 2          # batch
S = 8          # sequence length
H = 32         # hidden size
NH = 4         # attention heads
DH = H // NH   # head dim
I = 64         # intermediate (FFN) size
L = 2          # transformer layers
V = 64         # vocab size
P = 16         # max position embeddings
EPS = 1e-12    # BERT layernorm eps
DTYPE = jnp.float32
WDTYPE = jnp.bfloat16   # MXU operand dtype for weights


# ============================ fused encoder kernel ============================

def _encoder_kernel(emb_ref, mask_ref, eg_ref, ebeta_ref,
                    qkvw_ref, qkvb_ref, aow_ref, aob_ref,
                    ln1g_ref, ln1b_ref, iw_ref, ib_ref,
                    ow_ref, ob_ref, ln2g_ref, ln2b_ref,
                    pw_ref, pb_ref, out_ref,
                    *, num_layers, num_heads, head_dim, hidden, eps):
    """One grid step = one sequence.  Everything stays in VMEM/vregs."""
    x = emb_ref[0].astype(jnp.float32)                                  # (S, H)
    # additive attention-mask bias, computed once per sequence
    bias = (1.0 - mask_ref[0].astype(jnp.float32)) * -10000.0           # (1, S)

    def layernorm(v, g, b):
        mu = jnp.mean(v, axis=-1, keepdims=True)
        vc = v - mu
        var = jnp.mean(vc * vc, axis=-1, keepdims=True)
        return vc * jax.lax.rsqrt(var + eps) * g + b

    def dense(a, w, b):
        # bf16 operands -> MXU-native; f32 accumulation.
        return jnp.dot(a.astype(jnp.bfloat16), w,
                       preferred_element_type=jnp.float32) + b

    h = layernorm(x, eg_ref[...], ebeta_ref[...])                       # (S, H)
    scale = 1.0 / float(head_dim) ** 0.5

    for l in range(num_layers):                      # static unroll (L is small)
        # ---- self-attention: fused QKV projection, in-kernel head split/merge ----
        qkv = dense(h, qkvw_ref[l], qkvb_ref[l])                        # (S, 3H)
        q = qkv[:, 0 * hidden:1 * hidden]
        k = qkv[:, 1 * hidden:2 * hidden]
        v = qkv[:, 2 * hidden:3 * hidden]
        ctx_heads = []
        for n in range(num_heads):
            lo, hi = n * head_dim, (n + 1) * head_dim
            qh = q[:, lo:hi].astype(jnp.bfloat16)
            kh = k[:, lo:hi].astype(jnp.bfloat16)
            vh = v[:, lo:hi].astype(jnp.bfloat16)
            sc = jax.lax.dot_general(qh, kh, (((1,), (1,)), ((), ())),
                                     preferred_element_type=jnp.float32)
            sc = sc * scale + bias                                      # (S, S)
            mx = jnp.max(sc, axis=-1, keepdims=True)
            p = jnp.exp(sc - mx)
            p = p * pl.reciprocal(jnp.sum(p, axis=-1, keepdims=True), approx=True)
            ctx_heads.append(jnp.dot(p.astype(jnp.bfloat16), vh,
                                     preferred_element_type=jnp.float32))
        ctx = jnp.concatenate(ctx_heads, axis=-1)                       # (S, H)
        attn_out = dense(ctx, aow_ref[l], aob_ref[l])
        h1 = layernorm(attn_out + h, ln1g_ref[l], ln1b_ref[l])
        # ---- FFN ----
        inter = dense(h1, iw_ref[l], ib_ref[l])
        # TODO(synk): HF BERT uses exact erf-GELU; tanh approximation used here.
        inter = jax.nn.gelu(inter, approximate=True)
        ffn = dense(inter, ow_ref[l], ob_ref[l])
        h = layernorm(ffn + h1, ln2g_ref[l], ln2b_ref[l])

    # ---- HFBertEncoder head ----
    cls = h[0:1, :]                                  # last_hidden_state[:, 0, :]
    pooler = jnp.tanh(dense(cls, pw_ref[...], pb_ref[...]))
    # quirk: sequence_output = last_hidden + 0 * pooler_output.sum()
    # (0*sum taken per sequence here; identical for all finite values)
    pooled = cls + 0.0 * jnp.sum(pooler, keepdims=True)
    out_ref[0] = pooled.astype(out_ref.dtype)


def bert_encode(packed, input_ids, attention_mask):
    """Returns pooled_output (batch, H) — (last_hidden + 0*pooler.sum())[:, 0, :]."""
    b, s = input_ids.shape
    assert s <= P, "sequence length exceeds max position embeddings"
    # Embedding gather + add in plain JAX (data-dependent gather); LN is in-kernel.
    word = jnp.take(packed["word_emb"], input_ids, axis=0)              # (b, s, H)
    pos = packed["pos_emb"][:s][None, :, :]
    tok = packed["tok_emb"][0][None, None, :]                           # token_type 0
    emb = (word + pos + tok).astype(jnp.float32)                        # (b, s, H)
    mask3 = attention_mask.astype(jnp.float32).reshape(b, 1, s)
    # TODO(synk): dropout (p=0.1 set by init_encoder) omitted -> eval-mode semantics.

    kernel = functools.partial(_encoder_kernel, num_layers=L, num_heads=NH,
                               head_dim=DH, hidden=H, eps=EPS)
    const3 = lambda i: (0, 0, 0)
    const2 = lambda i: (0, 0)
    pooled = pl.pallas_call(
        kernel,
        out_shape=jax.ShapeDtypeStruct((b, 1, H), jnp.float32),
        grid_spec=pltpu.PrefetchScalarGridSpec(
            num_scalar_prefetch=0,
            grid=(b,),
            in_specs=[
                pl.BlockSpec((1, s, H), lambda i: (i, 0, 0)),       # embeddings
                pl.BlockSpec((1, 1, s), lambda i: (i, 0, 0)),       # attention mask
                pl.BlockSpec((1, H), const2),                       # emb LN gamma
                pl.BlockSpec((1, H), const2),                       # emb LN beta
                pl.BlockSpec((L, H, 3 * H), const3),                # fused QKV weight
                pl.BlockSpec((L, 1, 3 * H), const3),                # fused QKV bias
                pl.BlockSpec((L, H, H), const3),                    # attn out weight
                pl.BlockSpec((L, 1, H), const3),                    # attn out bias
                pl.BlockSpec((L, 1, H), const3),                    # LN1 gamma
                pl.BlockSpec((L, 1, H), const3),                    # LN1 beta
                pl.BlockSpec((L, H, I), const3),                    # FFN in weight
                pl.BlockSpec((L, 1, I), const3),                    # FFN in bias
                pl.BlockSpec((L, I, H), const3),                    # FFN out weight
                pl.BlockSpec((L, 1, H), const3),                    # FFN out bias
                pl.BlockSpec((L, 1, H), const3),                    # LN2 gamma
                pl.BlockSpec((L, 1, H), const3),                    # LN2 beta
                pl.BlockSpec((H, H), const2),                       # pooler weight
                pl.BlockSpec((1, H), const2),                       # pooler bias
            ],
            out_specs=pl.BlockSpec((1, 1, H), lambda i: (i, 0, 0)),
        ),
        compiler_params=pltpu.CompilerParams(
            dimension_semantics=("parallel",)),
    )(emb, mask3, packed["emb_ln_g"], packed["emb_ln_b"],
      packed["qkv_w"], packed["qkv_b"], packed["ao_w"], packed["ao_b"],
      packed["ln1_g"], packed["ln1_b"], packed["i_w"], packed["i_b"],
      packed["o_w"], packed["o_b"], packed["ln2_g"], packed["ln2_b"],
      packed["pooler_w"], packed["pooler_b"])
    return pooled[:, 0, :]


# ============================ contrastive loss kernel ============================

def _biencoder_loss_kernel(q_ref, a_ref, b_ref, o_ref):
    """loss = mean_i( -log_softmax([q·a_i, q·b_i])[0] )  (positive = column 0)."""
    q = q_ref[...].astype(jnp.float32)
    a = a_ref[...].astype(jnp.float32)
    b = b_ref[...].astype(jnp.float32)
    sa = jnp.sum(q * a, axis=-1, keepdims=True)           # (B, 1)
    sb = jnp.sum(q * b, axis=-1, keepdims=True)           # (B, 1)
    mx = jnp.maximum(sa, sb)
    lse = mx + jnp.log(jnp.exp(sa - mx) + jnp.exp(sb - mx))
    loss = -(sa - lse)                                     # -lsm[:, 0]
    o_ref[...] = jnp.mean(loss, axis=(0, 1), keepdims=True).astype(o_ref.dtype)


def biencoder_loss(q_embs, a_embs, b_embs):
    out = pl.pallas_call(
        _biencoder_loss_kernel,
        out_shape=jax.ShapeDtypeStruct((1, 1), jnp.float32),
    )(q_embs, a_embs, b_embs)
    return out[0, 0]


# ============================ parameters ============================

def _normal(key, shape, std=0.02):
    return (std * jax.random.normal(key, shape, dtype=jnp.float32)).astype(DTYPE)


def init_bert_params(key):
    keys = jax.random.split(key, 4 + 7 * L)
    ki = iter(range(len(keys)))
    p = {
        "word_emb": _normal(keys[next(ki)], (V, H)),
        "pos_emb": _normal(keys[next(ki)], (P, H)),
        "tok_emb": _normal(keys[next(ki)], (2, H)),
        "emb_ln_g": jnp.ones((H,), DTYPE),
        "emb_ln_b": jnp.zeros((H,), DTYPE),
        "pooler_w": _normal(keys[next(ki)], (H, H)),
        "pooler_b": jnp.zeros((H,), DTYPE),
    }
    layers = []
    for _ in range(L):
        layers.append({
            "q_w": _normal(keys[next(ki)], (H, H)), "q_b": jnp.zeros((H,), DTYPE),
            "k_w": _normal(keys[next(ki)], (H, H)), "k_b": jnp.zeros((H,), DTYPE),
            "v_w": _normal(keys[next(ki)], (H, H)), "v_b": jnp.zeros((H,), DTYPE),
            "ao_w": _normal(keys[next(ki)], (H, H)), "ao_b": jnp.zeros((H,), DTYPE),
            "ln1_g": jnp.ones((H,), DTYPE), "ln1_b": jnp.zeros((H,), DTYPE),
            "i_w": _normal(keys[next(ki)], (H, I)), "i_b": jnp.zeros((I,), DTYPE),
            "o_w": _normal(keys[next(ki)], (I, H)), "o_b": jnp.zeros((H,), DTYPE),
            "ln2_g": jnp.ones((H,), DTYPE), "ln2_b": jnp.zeros((H,), DTYPE),
        })
    p["layers"] = layers
    return p


def pack_params(p):
    """Stack per-layer weights into (L, ...) arrays; weights in bf16 for the MXU."""
    layers = p["layers"]
    return {
        "word_emb": p["word_emb"],
        "pos_emb": p["pos_emb"],
        "tok_emb": p["tok_emb"],
        "emb_ln_g": p["emb_ln_g"].reshape(1, H),
        "emb_ln_b": p["emb_ln_b"].reshape(1, H),
        "qkv_w": jnp.stack([jnp.concatenate([lp["q_w"], lp["k_w"], lp["v_w"]], axis=1)
                            for lp in layers]).astype(WDTYPE),              # (L,H,3H)
        "qkv_b": jnp.stack([jnp.concatenate([lp["q_b"], lp["k_b"], lp["v_b"]])[None, :]
                            for lp in layers]),                             # (L,1,3H)
        "ao_w": jnp.stack([lp["ao_w"] for lp in layers]).astype(WDTYPE),    # (L,H,H)
        "ao_b": jnp.stack([lp["ao_b"][None, :] for lp in layers]),          # (L,1,H)
        "ln1_g": jnp.stack([lp["ln1_g"][None, :] for lp in layers]),
        "ln1_b": jnp.stack([lp["ln1_b"][None, :] for lp in layers]),
        "i_w": jnp.stack([lp["i_w"] for lp in layers]).astype(WDTYPE),      # (L,H,I)
        "i_b": jnp.stack([lp["i_b"][None, :] for lp in layers]),            # (L,1,I)
        "o_w": jnp.stack([lp["o_w"] for lp in layers]).astype(WDTYPE),      # (L,I,H)
        "o_b": jnp.stack([lp["o_b"][None, :] for lp in layers]),
        "ln2_g": jnp.stack([lp["ln2_g"][None, :] for lp in layers]),
        "ln2_b": jnp.stack([lp["ln2_b"][None, :] for lp in layers]),
        "pooler_w": p["pooler_w"].astype(WDTYPE),
        "pooler_b": p["pooler_b"].reshape(1, H),
    }


# ============================ jitted forward paths ============================

bert_encode_jit = jax.jit(bert_encode)


@jax.jit
def _two_tower_forward(q_packed, c_packed, query_ids, mask_q, ids_a, mask_a):
    return (bert_encode(q_packed, query_ids, mask_q),
            bert_encode(c_packed, ids_a, mask_a))


@jax.jit
def _contrastive_forward(q_packed, c_packed, query_ids, mask_q,
                         ids_a, mask_a, ids_b, mask_b):
    q_embs = bert_encode(q_packed, query_ids, mask_q)
    # Batch positives + hard negatives through the shared ctx tower in ONE call.
    ids_ab = jnp.concatenate([ids_a, ids_b], axis=0)
    mask_ab = jnp.concatenate([mask_a, mask_b], axis=0)
    ab_embs = bert_encode(c_packed, ids_ab, mask_ab)
    nb = ids_a.shape[0]
    return biencoder_loss(q_embs, ab_embs[:nb], ab_embs[nb:])


# ============================ BiBertEncoder ============================

class BiBertEncoder:
    def __init__(self, key, share_weight=False):
        kq, kc = jax.random.split(key)
        self.question_packed = pack_params(init_bert_params(kq))
        self.ctx_packed = (self.question_packed if share_weight
                           else pack_params(init_bert_params(kc)))

    def query_emb(self, input_ids, attention_mask):
        return bert_encode_jit(self.question_packed, input_ids, attention_mask)

    def body_emb(self, input_ids, attention_mask):
        return bert_encode_jit(self.ctx_packed, input_ids, attention_mask)

    def forward(self, query_ids, attention_mask_q,
                input_ids_a=None, attention_mask_a=None,
                input_ids_b=None, attention_mask_b=None):
        if input_ids_b is None:
            q_embs, a_embs = _two_tower_forward(
                self.question_packed, self.ctx_packed,
                query_ids, attention_mask_q, input_ids_a, attention_mask_a)
            return (q_embs, a_embs)
        loss = _contrastive_forward(
            self.question_packed, self.ctx_packed,
            query_ids, attention_mask_q,
            input_ids_a, attention_mask_a,
            input_ids_b, attention_mask_b)
        return (loss,)


# ============================ main ============================

if __name__ == "__main__":
    key = jax.random.PRNGKey(0)
    k_model, k_q, k_a, k_b = jax.random.split(key, 4)

    model = BiBertEncoder(k_model)

    query_ids = jax.random.randint(k_q, (B, S), 0, V, dtype=jnp.int32)
    input_ids_a = jax.random.randint(k_a, (B, S), 0, V, dtype=jnp.int32)
    input_ids_b = jax.random.randint(k_b, (B, S), 0, V, dtype=jnp.int32)
    mask_q = jnp.array([[1] * S, [1] * (S - 2) + [0, 0]], dtype=jnp.float32)
    mask_a = jnp.ones((B, S), dtype=jnp.float32)
    mask_b = jnp.array([[1] * (S - 3) + [0] * 3, [1] * S], dtype=jnp.float32)

    # two-tower path (no negatives) -> (q_embs, a_embs)
    q_embs, a_embs = model.forward(query_ids, mask_q, input_ids_a, mask_a)
    # contrastive path with hard negatives -> (loss,)
    (loss,) = model.forward(query_ids, mask_q, input_ids_a, mask_a,
                            input_ids_b, mask_b)

    jax.block_until_ready((q_embs, a_embs, loss))
    assert q_embs.shape == (B, H) and a_embs.shape == (B, H)
    assert loss.shape == () and bool(jnp.isfinite(loss))
    print("KERNEL_OK")
</pallas_src>

<mosaic_0001>
module attributes {stable_mosaic.version = 11 : i64} {
  func.func @_encoder_kernel(%arg0: i32, %arg1: memref<1x8x32xf32, #tpu.memory_space<vmem>>, %arg2: memref<1x1x8xf32, #tpu.memory_space<vmem>>, %arg3: memref<1x32xf32, #tpu.memory_space<vmem>>, %arg4: memref<1x32xf32, #tpu.memory_space<vmem>>, %arg5: memref<2x32x96xbf16, #tpu.memory_space<vmem>>, %arg6: memref<2x1x96xf32, #tpu.memory_space<vmem>>, %arg7: memref<2x32x32xbf16, #tpu.memory_space<vmem>>, %arg8: memref<2x1x32xf32, #tpu.memory_space<vmem>>, %arg9: memref<2x1x32xf32, #tpu.memory_space<vmem>>, %arg10: memref<2x1x32xf32, #tpu.memory_space<vmem>>, %arg11: memref<2x32x64xbf16, #tpu.memory_space<vmem>>, %arg12: memref<2x1x64xf32, #tpu.memory_space<vmem>>, %arg13: memref<2x64x32xbf16, #tpu.memory_space<vmem>>, %arg14: memref<2x1x32xf32, #tpu.memory_space<vmem>>, %arg15: memref<2x1x32xf32, #tpu.memory_space<vmem>>, %arg16: memref<2x1x32xf32, #tpu.memory_space<vmem>>, %arg17: memref<32x32xbf16, #tpu.memory_space<vmem>>, %arg18: memref<1x32xf32, #tpu.memory_space<vmem>>, %arg19: memref<1x1x32xf32, #tpu.memory_space<vmem>>) attributes {dimension_semantics = [#tpu.dimension_semantics<parallel>], iteration_bounds = array<i64: 2>, scalar_prefetch = 0 : i64, scratch_operands = 0 : i64, tpu.core_type = #tpu.core_type<tc>, window_params = [{transform_indices = @transform_0, window_bounds = array<i64: 1, 8, 32>}, {transform_indices = @transform_1, window_bounds = array<i64: 1, 1, 8>}, {pipeline_mode = #tpu.pipeline_mode<synchronous>, transform_indices = @transform_2, window_bounds = array<i64: 1, 32>}, {pipeline_mode = #tpu.pipeline_mode<synchronous>, transform_indices = @transform_3, window_bounds = array<i64: 1, 32>}, {pipeline_mode = #tpu.pipeline_mode<synchronous>, transform_indices = @transform_4, window_bounds = array<i64: 2, 32, 96>}, {pipeline_mode = #tpu.pipeline_mode<synchronous>, transform_indices = @transform_5, window_bounds = array<i64: 2, 1, 96>}, {pipeline_mode = #tpu.pipeline_mode<synchronous>, transform_indices = @transform_6, window_bounds = array<i64: 2, 32, 32>}, {pipeline_mode = #tpu.pipeline_mode<synchronous>, transform_indices = @transform_7, window_bounds = array<i64: 2, 1, 32>}, {pipeline_mode = #tpu.pipeline_mode<synchronous>, transform_indices = @transform_8, window_bounds = array<i64: 2, 1, 32>}, {pipeline_mode = #tpu.pipeline_mode<synchronous>, transform_indices = @transform_9, window_bounds = array<i64: 2, 1, 32>}, {pipeline_mode = #tpu.pipeline_mode<synchronous>, transform_indices = @transform_10, window_bounds = array<i64: 2, 32, 64>}, {pipeline_mode = #tpu.pipeline_mode<synchronous>, transform_indices = @transform_11, window_bounds = array<i64: 2, 1, 64>}, {pipeline_mode = #tpu.pipeline_mode<synchronous>, transform_indices = @transform_12, window_bounds = array<i64: 2, 64, 32>}, {pipeline_mode = #tpu.pipeline_mode<synchronous>, transform_indices = @transform_13, window_bounds = array<i64: 2, 1, 32>}, {pipeline_mode = #tpu.pipeline_mode<synchronous>, transform_indices = @transform_14, window_bounds = array<i64: 2, 1, 32>}, {pipeline_mode = #tpu.pipeline_mode<synchronous>, transform_indices = @transform_15, window_bounds = array<i64: 2, 1, 32>}, {pipeline_mode = #tpu.pipeline_mode<synchronous>, transform_indices = @transform_16, window_bounds = array<i64: 32, 32>}, {pipeline_mode = #tpu.pipeline_mode<synchronous>, transform_indices = @transform_17, window_bounds = array<i64: 1, 32>}, {transform_indices = @transform_18, window_bounds = array<i64: 1, 1, 32>}]} {
    %c0 = arith.constant 0 : index
    %c0_0 = arith.constant 0 : index
    %c0_1 = arith.constant 0 : index
    %0 = vector.load %arg1[%c0, %c0_0, %c0_1] : memref<1x8x32xf32, #tpu.memory_space<vmem>>, vector<1x8x32xf32>
    %1 = vector.shape_cast %0 : vector<1x8x32xf32> to vector<8x32xf32>
    %c0_2 = arith.constant 0 : index
    %c0_3 = arith.constant 0 : index
    %c0_4 = arith.constant 0 : index
    %2 = vector.load %arg2[%c0_2, %c0_3, %c0_4] : memref<1x1x8xf32, #tpu.memory_space<vmem>>, vector<1x1x8xf32>
    %3 = vector.shape_cast %2 : vector<1x1x8xf32> to vector<1x8xf32>
    %cst = arith.constant 1.000000e+00 : f32
    %4 = vector.broadcast %cst : f32 to vector<1x8xf32>
    %5 = arith.subf %4, %3 : vector<1x8xf32>
    %cst_5 = arith.constant -1.000000e+04 : f32
    %6 = vector.broadcast %cst_5 : f32 to vector<1x8xf32>
    %7 = arith.mulf %5, %6 : vector<1x8xf32>
    %c0_6 = arith.constant 0 : index
    %c0_7 = arith.constant 0 : index
    %8 = vector.load %arg3[%c0_6, %c0_7] : memref<1x32xf32, #tpu.memory_space<vmem>>, vector<1x32xf32>
    %c0_8 = arith.constant 0 : index
    %c0_9 = arith.constant 0 : index
    %9 = vector.load %arg4[%c0_8, %c0_9] : memref<1x32xf32, #tpu.memory_space<vmem>>, vector<1x32xf32>
    %cst_10 = arith.constant dense<0.000000e+00> : vector<8xf32>
    %10 = vector.multi_reduction <add>, %1, %cst_10 [1] : vector<8x32xf32> to vector<8xf32>
    %11 = vector.shape_cast %10 : vector<8xf32> to vector<8x1xf32>
    %cst_11 = arith.constant 3.200000e+01 : f32
    %12 = vector.broadcast %cst_11 : f32 to vector<8x1xf32>
    %13 = arith.divf %11, %12 : vector<8x1xf32>
    %14 = vector.broadcast %13 : vector<8x1xf32> to vector<8x32xf32>
    %15 = arith.subf %1, %14 : vector<8x32xf32>
    %16 = arith.mulf %15, %15 : vector<8x32xf32>
    %cst_12 = arith.constant dense<0.000000e+00> : vector<8xf32>
    %17 = vector.multi_reduction <add>, %16, %cst_12 [1] : vector<8x32xf32> to vector<8xf32>
    %18 = vector.shape_cast %17 : vector<8xf32> to vector<8x1xf32>
    %cst_13 = arith.constant 3.200000e+01 : f32
    %19 = vector.broadcast %cst_13 : f32 to vector<8x1xf32>
    %20 = arith.divf %18, %19 : vector<8x1xf32>
    %cst_14 = arith.constant 9.99999996E-13 : f32
    %21 = vector.broadcast %cst_14 : f32 to vector<8x1xf32>
    %22 = arith.addf %20, %21 : vector<8x1xf32>
    %23 = math.rsqrt %22 : vector<8x1xf32>
    %24 = vector.broadcast %23 : vector<8x1xf32> to vector<8x32xf32>
    %25 = arith.mulf %15, %24 : vector<8x32xf32>
    %26 = vector.broadcast %8 : vector<1x32xf32> to vector<8x32xf32>
    %27 = arith.mulf %25, %26 : vector<8x32xf32>
    %28 = vector.broadcast %9 : vector<1x32xf32> to vector<8x32xf32>
    %29 = arith.addf %27, %28 : vector<8x32xf32>
    %c0_15 = arith.constant 0 : index
    %c0_16 = arith.constant 0 : index
    %c0_17 = arith.constant 0 : index
    %30 = vector.load %arg5[%c0_15, %c0_16, %c0_17] : memref<2x32x96xbf16, #tpu.memory_space<vmem>>, vector<1x32x96xbf16>
    %31 = vector.shape_cast %30 : vector<1x32x96xbf16> to vector<32x96xbf16>
    %c0_18 = arith.constant 0 : index
    %c0_19 = arith.constant 0 : index
    %c0_20 = arith.constant 0 : index
    %32 = vector.load %arg6[%c0_18, %c0_19, %c0_20] : memref<2x1x96xf32, #tpu.memory_space<vmem>>, vector<1x1x96xf32>
    %33 = vector.shape_cast %32 : vector<1x1x96xf32> to vector<1x96xf32>
    %34 = arith.truncf %29 : vector<8x32xf32> to vector<8x32xbf16>
    %cst_21 = arith.constant dense<0.000000e+00> : vector<8x96xf32>
    %35 = tpu.matmul %34, %31, %cst_21 {dimension_numbers = #tpu.dot_dimension_numbers<[1], [0], [0], [1], [0, 0, 1, 1], [], []>} : vector<8x32xbf16>, vector<32x96xbf16>, vector<8x96xf32> -> vector<8x96xf32>
    %36 = vector.broadcast %33 : vector<1x96xf32> to vector<8x96xf32>
    %37 = arith.addf %35, %36 : vector<8x96xf32>
    %38 = vector.extract_strided_slice %37 {offsets = [0, 0], sizes = [8, 32], strides = [1, 1]} : vector<8x96xf32> to vector<8x32xf32>
    %39 = vector.extract_strided_slice %37 {offsets = [0, 32], sizes = [8, 32], strides = [1, 1]} : vector<8x96xf32> to vector<8x32xf32>
    %40 = vector.extract_strided_slice %37 {offsets = [0, 64], sizes = [8, 32], strides = [1, 1]} : vector<8x96xf32> to vector<8x32xf32>
    %41 = vector.extract_strided_slice %38 {offsets = [0, 0], sizes = [8, 8], strides = [1, 1]} : vector<8x32xf32> to vector<8x8xf32>
    %42 = arith.truncf %41 : vector<8x8xf32> to vector<8x8xbf16>
    %43 = vector.extract_strided_slice %39 {offsets = [0, 0], sizes = [8, 8], strides = [1, 1]} : vector<8x32xf32> to vector<8x8xf32>
    %44 = arith.truncf %43 : vector<8x8xf32> to vector<8x8xbf16>
    %45 = vector.extract_strided_slice %40 {offsets = [0, 0], sizes = [8, 8], strides = [1, 1]} : vector<8x32xf32> to vector<8x8xf32>
    %46 = arith.truncf %45 : vector<8x8xf32> to vector<8x8xbf16>
    %cst_22 = arith.constant dense<0.000000e+00> : vector<8x8xf32>
    %47 = tpu.matmul %42, %44, %cst_22 {dimension_numbers = #tpu.dot_dimension_numbers<[1], [1], [0], [0], [0, 0, 1, 0], [], []>} : vector<8x8xbf16>, vector<8x8xbf16>, vector<8x8xf32> -> vector<8x8xf32>
    %cst_23 = arith.constant 0.353553385 : f32
    %48 = vector.broadcast %cst_23 : f32 to vector<8x8xf32>
    %49 = arith.mulf %47, %48 : vector<8x8xf32>
    %50 = vector.broadcast %7 : vector<1x8xf32> to vector<8x8xf32>
    %51 = arith.addf %49, %50 : vector<8x8xf32>
    %cst_24 = arith.constant dense<0xFF800000> : vector<8xf32>
    %52 = vector.multi_reduction <maximumf>, %51, %cst_24 [1] : vector<8x8xf32> to vector<8xf32>
    %53 = vector.shape_cast %52 : vector<8xf32> to vector<8x1xf32>
    %54 = vector.broadcast %53 : vector<8x1xf32> to vector<8x8xf32>
    %55 = arith.subf %51, %54 : vector<8x8xf32>
    %56 = math.exp %55 : vector<8x8xf32>
    %cst_25 = arith.constant dense<0.000000e+00> : vector<8xf32>
    %57 = vector.multi_reduction <add>, %56, %cst_25 [1] : vector<8x8xf32> to vector<8xf32>
    %58 = vector.shape_cast %57 : vector<8xf32> to vector<8x1xf32>
    %59 = tpu.reciprocal %58 {approx = true} : vector<8x1xf32> -> vector<8x1xf32>
    %60 = vector.broadcast %59 : vector<8x1xf32> to vector<8x8xf32>
    %61 = arith.mulf %56, %60 : vector<8x8xf32>
    %62 = arith.truncf %61 : vector<8x8xf32> to vector<8x8xbf16>
    %cst_26 = arith.constant dense<0.000000e+00> : vector<8x8xf32>
    %63 = tpu.matmul %62, %46, %cst_26 {dimension_numbers = #tpu.dot_dimension_numbers<[1], [0], [0], [1], [0, 0, 1, 1], [], []>} : vector<8x8xbf16>, vector<8x8xbf16>, vector<8x8xf32> -> vector<8x8xf32>
    %64 = vector.extract_strided_slice %38 {offsets = [0, 8], sizes = [8, 8], strides = [1, 1]} : vector<8x32xf32> to vector<8x8xf32>
    %65 = arith.truncf %64 : vector<8x8xf32> to vector<8x8xbf16>
    %66 = vector.extract_strided_slice %39 {offsets = [0, 8], sizes = [8, 8], strides = [1, 1]} : vector<8x32xf32> to vector<8x8xf32>
    %67 = arith.truncf %66 : vector<8x8xf32> to vector<8x8xbf16>
    %68 = vector.extract_strided_slice %40 {offsets = [0, 8], sizes = [8, 8], strides = [1, 1]} : vector<8x32xf32> to vector<8x8xf32>
    %69 = arith.truncf %68 : vector<8x8xf32> to vector<8x8xbf16>
    %cst_27 = arith.constant dense<0.000000e+00> : vector<8x8xf32>
    %70 = tpu.matmul %65, %67, %cst_27 {dimension_numbers = #tpu.dot_dimension_numbers<[1], [1], [0], [0], [0, 0, 1, 0], [], []>} : vector<8x8xbf16>, vector<8x8xbf16>, vector<8x8xf32> -> vector<8x8xf32>
    %cst_28 = arith.constant 0.353553385 : f32
    %71 = vector.broadcast %cst_28 : f32 to vector<8x8xf32>
    %72 = arith.mulf %70, %71 : vector<8x8xf32>
    %73 = vector.broadcast %7 : vector<1x8xf32> to vector<8x8xf32>
    %74 = arith.addf %72, %73 : vector<8x8xf32>
    %cst_29 = arith.constant dense<0xFF800000> : vector<8xf32>
    %75 = vector.multi_reduction <maximumf>, %74, %cst_29 [1] : vector<8x8xf32> to vector<8xf32>
    %76 = vector.shape_cast %75 : vector<8xf32> to vector<8x1xf32>
    %77 = vector.broadcast %76 : vector<8x1xf32> to vector<8x8xf32>
    %78 = arith.subf %74, %77 : vector<8x8xf32>
    %79 = math.exp %78 : vector<8x8xf32>
    %cst_30 = arith.constant dense<0.000000e+00> : vector<8xf32>
    %80 = vector.multi_reduction <add>, %79, %cst_30 [1] : vector<8x8xf32> to vector<8xf32>
    %81 = vector.shape_cast %80 : vector<8xf32> to vector<8x1xf32>
    %82 = tpu.reciprocal %81 {approx = true} : vector<8x1xf32> -> vector<8x1xf32>
    %83 = vector.broadcast %82 : vector<8x1xf32> to vector<8x8xf32>
    %84 = arith.mulf %79, %83 : vector<8x8xf32>
    %85 = arith.truncf %84 : vector<8x8xf32> to vector<8x8xbf16>
    %cst_31 = arith.constant dense<0.000000e+00> : vector<8x8xf32>
    %86 = tpu.matmul %85, %69, %cst_31 {dimension_numbers = #tpu.dot_dimension_numbers<[1], [0], [0], [1], [0, 0, 1, 1], [], []>} : vector<8x8xbf16>, vector<8x8xbf16>, vector<8x8xf32> -> vector<8x8xf32>
    %87 = vector.extract_strided_slice %38 {offsets = [0, 16], sizes = [8, 8], strides = [1, 1]} : vector<8x32xf32> to vector<8x8xf32>
    %88 = arith.truncf %87 : vector<8x8xf32> to vector<8x8xbf16>
    %89 = vector.extract_strided_slice %39 {offsets = [0, 16], sizes = [8, 8], strides = [1, 1]} : vector<8x32xf32> to vector<8x8xf32>
    %90 = arith.truncf %89 : vector<8x8xf32> to vector<8x8xbf16>
    %91 = vector.extract_strided_slice %40 {offsets = [0, 16], sizes = [8, 8], strides = [1, 1]} : vector<8x32xf32> to vector<8x8xf32>
    %92 = arith.truncf %91 : vector<8x8xf32> to vector<8x8xbf16>
    %cst_32 = arith.constant dense<0.000000e+00> : vector<8x8xf32>
    %93 = tpu.matmul %88, %90, %cst_32 {dimension_numbers = #tpu.dot_dimension_numbers<[1], [1], [0], [0], [0, 0, 1, 0], [], []>} : vector<8x8xbf16>, vector<8x8xbf16>, vector<8x8xf32> -> vector<8x8xf32>
    %cst_33 = arith.constant 0.353553385 : f32
    %94 = vector.broadcast %cst_33 : f32 to vector<8x8xf32>
    %95 = arith.mulf %93, %94 : vector<8x8xf32>
    %96 = vector.broadcast %7 : vector<1x8xf32> to vector<8x8xf32>
    %97 = arith.addf %95, %96 : vector<8x8xf32>
    %cst_34 = arith.constant dense<0xFF800000> : vector<8xf32>
    %98 = vector.multi_reduction <maximumf>, %97, %cst_34 [1] : vector<8x8xf32> to vector<8xf32>
    %99 = vector.shape_cast %98 : vector<8xf32> to vector<8x1xf32>
    %100 = vector.broadcast %99 : vector<8x1xf32> to vector<8x8xf32>
    %101 = arith.subf %97, %100 : vector<8x8xf32>
    %102 = math.exp %101 : vector<8x8xf32>
    %cst_35 = arith.constant dense<0.000000e+00> : vector<8xf32>
    %103 = vector.multi_reduction <add>, %102, %cst_35 [1] : vector<8x8xf32> to vector<8xf32>
    %104 = vector.shape_cast %103 : vector<8xf32> to vector<8x1xf32>
    %105 = tpu.reciprocal %104 {approx = true} : vector<8x1xf32> -> vector<8x1xf32>
    %106 = vector.broadcast %105 : vector<8x1xf32> to vector<8x8xf32>
    %107 = arith.mulf %102, %106 : vector<8x8xf32>
    %108 = arith.truncf %107 : vector<8x8xf32> to vector<8x8xbf16>
    %cst_36 = arith.constant dense<0.000000e+00> : vector<8x8xf32>
    %109 = tpu.matmul %108, %92, %cst_36 {dimension_numbers = #tpu.dot_dimension_numbers<[1], [0], [0], [1], [0, 0, 1, 1], [], []>} : vector<8x8xbf16>, vector<8x8xbf16>, vector<8x8xf32> -> vector<8x8xf32>
    %110 = vector.extract_strided_slice %38 {offsets = [0, 24], sizes = [8, 8], strides = [1, 1]} : vector<8x32xf32> to vector<8x8xf32>
    %111 = arith.truncf %110 : vector<8x8xf32> to vector<8x8xbf16>
    %112 = vector.extract_strided_slice %39 {offsets = [0, 24], sizes = [8, 8], strides = [1, 1]} : vector<8x32xf32> to vector<8x8xf32>
    %113 = arith.truncf %112 : vector<8x8xf32> to vector<8x8xbf16>
    %114 = vector.extract_strided_slice %40 {offsets = [0, 24], sizes = [8, 8], strides = [1, 1]} : vector<8x32xf32> to vector<8x8xf32>
    %115 = arith.truncf %114 : vector<8x8xf32> to vector<8x8xbf16>
    %cst_37 = arith.constant dense<0.000000e+00> : vector<8x8xf32>
    %116 = tpu.matmul %111, %113, %cst_37 {dimension_numbers = #tpu.dot_dimension_numbers<[1], [1], [0], [0], [0, 0, 1, 0], [], []>} : vector<8x8xbf16>, vector<8x8xbf16>, vector<8x8xf32> -> vector<8x8xf32>
    %cst_38 = arith.constant 0.353553385 : f32
    %117 = vector.broadcast %cst_38 : f32 to vector<8x8xf32>
    %118 = arith.mulf %116, %117 : vector<8x8xf32>
    %119 = vector.broadcast %7 : vector<1x8xf32> to vector<8x8xf32>
    %120 = arith.addf %118, %119 : vector<8x8xf32>
    %cst_39 = arith.constant dense<0xFF800000> : vector<8xf32>
    %121 = vector.multi_reduction <maximumf>, %120, %cst_39 [1] : vector<8x8xf32> to vector<8xf32>
    %122 = vector.shape_cast %121 : vector<8xf32> to vector<8x1xf32>
    %123 = vector.broadcast %122 : vector<8x1xf32> to vector<8x8xf32>
    %124 = arith.subf %120, %123 : vector<8x8xf32>
    %125 = math.exp %124 : vector<8x8xf32>
    %cst_40 = arith.constant dense<0.000000e+00> : vector<8xf32>
    %126 = vector.multi_reduction <add>, %125, %cst_40 [1] : vector<8x8xf32> to vector<8xf32>
    %127 = vector.shape_cast %126 : vector<8xf32> to vector<8x1xf32>
    %128 = tpu.reciprocal %127 {approx = true} : vector<8x1xf32> -> vector<8x1xf32>
    %129 = vector.broadcast %128 : vector<8x1xf32> to vector<8x8xf32>
    %130 = arith.mulf %125, %129 : vector<8x8xf32>
    %131 = arith.truncf %130 : vector<8x8xf32> to vector<8x8xbf16>
    %cst_41 = arith.constant dense<0.000000e+00> : vector<8x8xf32>
    %132 = tpu.matmul %131, %115, %cst_41 {dimension_numbers = #tpu.dot_dimension_numbers<[1], [0], [0], [1], [0, 0, 1, 1], [], []>} : vector<8x8xbf16>, vector<8x8xbf16>, vector<8x8xf32> -> vector<8x8xf32>
    %133 = tpu.concatenate %63, %86, %109, %132 in 1 : vector<8x8xf32>, vector<8x8xf32>, vector<8x8xf32>, vector<8x8xf32> -> vector<8x32xf32>
    %c0_42 = arith.constant 0 : index
    %c0_43 = arith.constant 0 : index
    %c0_44 = arith.constant 0 : index
    %134 = vector.load %arg7[%c0_42, %c0_43, %c0_44] : memref<2x32x32xbf16, #tpu.memory_space<vmem>>, vector<1x32x32xbf16>
    %135 = vector.shape_cast %134 : vector<1x32x32xbf16> to vector<32x32xbf16>
    %c0_45 = arith.constant 0 : index
    %c0_46 = arith.constant 0 : index
    %c0_47 = arith.constant 0 : index
    %136 = vector.load %arg8[%c0_45, %c0_46, %c0_47] : memref<2x1x32xf32, #tpu.memory_space<vmem>>, vector<1x1x32xf32>
    %137 = vector.shape_cast %136 : vector<1x1x32xf32> to vector<1x32xf32>
    %138 = arith.truncf %133 : vector<8x32xf32> to vector<8x32xbf16>
    %cst_48 = arith.constant dense<0.000000e+00> : vector<8x32xf32>
    %139 = tpu.matmul %138, %135, %cst_48 {dimension_numbers = #tpu.dot_dimension_numbers<[1], [0], [0], [1], [0, 0, 1, 1], [], []>} : vector<8x32xbf16>, vector<32x32xbf16>, vector<8x32xf32> -> vector<8x32xf32>
    %140 = vector.broadcast %137 : vector<1x32xf32> to vector<8x32xf32>
    %141 = arith.addf %139, %140 : vector<8x32xf32>
    %142 = arith.addf %141, %29 : vector<8x32xf32>
    %c0_49 = arith.constant 0 : index
    %c0_50 = arith.constant 0 : index
    %c0_51 = arith.constant 0 : index
    %143 = vector.load %arg9[%c0_49, %c0_50, %c0_51] : memref<2x1x32xf32, #tpu.memory_space<vmem>>, vector<1x1x32xf32>
    %144 = vector.shape_cast %143 : vector<1x1x32xf32> to vector<1x32xf32>
    %c0_52 = arith.constant 0 : index
    %c0_53 = arith.constant 0 : index
    %c0_54 = arith.constant 0 : index
    %145 = vector.load %arg10[%c0_52, %c0_53, %c0_54] : memref<2x1x32xf32, #tpu.memory_space<vmem>>, vector<1x1x32xf32>
    %146 = vector.shape_cast %145 : vector<1x1x32xf32> to vector<1x32xf32>
    %cst_55 = arith.constant dense<0.000000e+00> : vector<8xf32>
    %147 = vector.multi_reduction <add>, %142, %cst_55 [1] : vector<8x32xf32> to vector<8xf32>
    %148 = vector.shape_cast %147 : vector<8xf32> to vector<8x1xf32>
    %cst_56 = arith.constant 3.200000e+01 : f32
    %149 = vector.broadcast %cst_56 : f32 to vector<8x1xf32>
    %150 = arith.divf %148, %149 : vector<8x1xf32>
    %151 = vector.broadcast %150 : vector<8x1xf32> to vector<8x32xf32>
    %152 = arith.subf %142, %151 : vector<8x32xf32>
    %153 = arith.mulf %152, %152 : vector<8x32xf32>
    %cst_57 = arith.constant dense<0.000000e+00> : vector<8xf32>
    %154 = vector.multi_reduction <add>, %153, %cst_57 [1] : vector<8x32xf32> to vector<8xf32>
    %155 = vector.shape_cast %154 : vector<8xf32> to vector<8x1xf32>
    %cst_58 = arith.constant 3.200000e+01 : f32
    %156 = vector.broadcast %cst_58 : f32 to vector<8x1xf32>
    %157 = arith.divf %155, %156 : vector<8x1xf32>
    %cst_59 = arith.constant 9.99999996E-13 : f32
    %158 = vector.broadcast %cst_59 : f32 to vector<8x1xf32>
    %159 = arith.addf %157, %158 : vector<8x1xf32>
    %160 = math.rsqrt %159 : vector<8x1xf32>
    %161 = vector.broadcast %160 : vector<8x1xf32> to vector<8x32xf32>
    %162 = arith.mulf %152, %161 : vector<8x32xf32>
    %163 = vector.broadcast %144 : vector<1x32xf32> to vector<8x32xf32>
    %164 = arith.mulf %162, %163 : vector<8x32xf32>
    %165 = vector.broadcast %146 : vector<1x32xf32> to vector<8x32xf32>
    %166 = arith.addf %164, %165 : vector<8x32xf32>
    %c0_60 = arith.constant 0 : index
    %c0_61 = arith.constant 0 : index
    %c0_62 = arith.constant 0 : index
    %167 = vector.load %arg11[%c0_60, %c0_61, %c0_62] : memref<2x32x64xbf16, #tpu.memory_space<vmem>>, vector<1x32x64xbf16>
    %168 = vector.shape_cast %167 : vector<1x32x64xbf16> to vector<32x64xbf16>
    %c0_63 = arith.constant 0 : index
    %c0_64 = arith.constant 0 : index
    %c0_65 = arith.constant 0 : index
    %169 = vector.load %arg12[%c0_63, %c0_64, %c0_65] : memref<2x1x64xf32, #tpu.memory_space<vmem>>, vector<1x1x64xf32>
    %170 = vector.shape_cast %169 : vector<1x1x64xf32> to vector<1x64xf32>
    %171 = arith.truncf %166 : vector<8x32xf32> to vector<8x32xbf16>
    %cst_66 = arith.constant dense<0.000000e+00> : vector<8x64xf32>
    %172 = tpu.matmul %171, %168, %cst_66 {dimension_numbers = #tpu.dot_dimension_numbers<[1], [0], [0], [1], [0, 0, 1, 1], [], []>} : vector<8x32xbf16>, vector<32x64xbf16>, vector<8x64xf32> -> vector<8x64xf32>
    %173 = vector.broadcast %170 : vector<1x64xf32> to vector<8x64xf32>
    %174 = arith.addf %172, %173 : vector<8x64xf32>
    %175 = arith.mulf %174, %174 : vector<8x64xf32>
    %176 = arith.mulf %174, %175 : vector<8x64xf32>
    %cst_67 = arith.constant 4.471500e-02 : f32
    %177 = vector.broadcast %cst_67 : f32 to vector<8x64xf32>
    %178 = arith.mulf %177, %176 : vector<8x64xf32>
    %179 = arith.addf %174, %178 : vector<8x64xf32>
    %cst_68 = arith.constant 0.797884583 : f32
    %180 = vector.broadcast %cst_68 : f32 to vector<8x64xf32>
    %181 = arith.mulf %180, %179 : vector<8x64xf32>
    %182 = math.tanh %181 : vector<8x64xf32>
    %cst_69 = arith.constant 1.000000e+00 : f32
    %183 = vector.broadcast %cst_69 : f32 to vector<8x64xf32>
    %184 = arith.addf %183, %182 : vector<8x64xf32>
    %cst_70 = arith.constant 5.000000e-01 : f32
    %185 = vector.broadcast %cst_70 : f32 to vector<8x64xf32>
    %186 = arith.mulf %185, %184 : vector<8x64xf32>
    %187 = arith.mulf %174, %186 : vector<8x64xf32>
    %c0_71 = arith.constant 0 : index
    %c0_72 = arith.constant 0 : index
    %c0_73 = arith.constant 0 : index
    %188 = vector.load %arg13[%c0_71, %c0_72, %c0_73] : memref<2x64x32xbf16, #tpu.memory_space<vmem>>, vector<1x64x32xbf16>
    %189 = vector.shape_cast %188 : vector<1x64x32xbf16> to vector<64x32xbf16>
    %c0_74 = arith.constant 0 : index
    %c0_75 = arith.constant 0 : index
    %c0_76 = arith.constant 0 : index
    %190 = vector.load %arg14[%c0_74, %c0_75, %c0_76] : memref<2x1x32xf32, #tpu.memory_space<vmem>>, vector<1x1x32xf32>
    %191 = vector.shape_cast %190 : vector<1x1x32xf32> to vector<1x32xf32>
    %192 = arith.truncf %187 : vector<8x64xf32> to vector<8x64xbf16>
    %cst_77 = arith.constant dense<0.000000e+00> : vector<8x32xf32>
    %193 = tpu.matmul %192, %189, %cst_77 {dimension_numbers = #tpu.dot_dimension_numbers<[1], [0], [0], [1], [0, 0, 1, 1], [], []>} : vector<8x64xbf16>, vector<64x32xbf16>, vector<8x32xf32> -> vector<8x32xf32>
    %194 = vector.broadcast %191 : vector<1x32xf32> to vector<8x32xf32>
    %195 = arith.addf %193, %194 : vector<8x32xf32>
    %196 = arith.addf %195, %166 : vector<8x32xf32>
    %c0_78 = arith.constant 0 : index
    %c0_79 = arith.constant 0 : index
    %c0_80 = arith.constant 0 : index
    %197 = vector.load %arg15[%c0_78, %c0_79, %c0_80] : memref<2x1x32xf32, #tpu.memory_space<vmem>>, vector<1x1x32xf32>
    %198 = vector.shape_cast %197 : vector<1x1x32xf32> to vector<1x32xf32>
    %c0_81 = arith.constant 0 : index
    %c0_82 = arith.constant 0 : index
    %c0_83 = arith.constant 0 : index
    %199 = vector.load %arg16[%c0_81, %c0_82, %c0_83] : memref<2x1x32xf32, #tpu.memory_space<vmem>>, vector<1x1x32xf32>
    %200 = vector.shape_cast %199 : vector<1x1x32xf32> to vector<1x32xf32>
    %cst_84 = arith.constant dense<0.000000e+00> : vector<8xf32>
    %201 = vector.multi_reduction <add>, %196, %cst_84 [1] : vector<8x32xf32> to vector<8xf32>
    %202 = vector.shape_cast %201 : vector<8xf32> to vector<8x1xf32>
    %cst_85 = arith.constant 3.200000e+01 : f32
    %203 = vector.broadcast %cst_85 : f32 to vector<8x1xf32>
    %204 = arith.divf %202, %203 : vector<8x1xf32>
    %205 = vector.broadcast %204 : vector<8x1xf32> to vector<8x32xf32>
    %206 = arith.subf %196, %205 : vector<8x32xf32>
    %207 = arith.mulf %206, %206 : vector<8x32xf32>
    %cst_86 = arith.constant dense<0.000000e+00> : vector<8xf32>
    %208 = vector.multi_reduction <add>, %207, %cst_86 [1] : vector<8x32xf32> to vector<8xf32>
    %209 = vector.shape_cast %208 : vector<8xf32> to vector<8x1xf32>
    %cst_87 = arith.constant 3.200000e+01 : f32
    %210 = vector.broadcast %cst_87 : f32 to vector<8x1xf32>
    %211 = arith.divf %209, %210 : vector<8x1xf32>
    %cst_88 = arith.constant 9.99999996E-13 : f32
    %212 = vector.broadcast %cst_88 : f32 to vector<8x1xf32>
    %213 = arith.addf %211, %212 : vector<8x1xf32>
    %214 = math.rsqrt %213 : vector<8x1xf32>
    %215 = vector.broadcast %214 : vector<8x1xf32> to vector<8x32xf32>
    %216 = arith.mulf %206, %215 : vector<8x32xf32>
    %217 = vector.broadcast %198 : vector<1x32xf32> to vector<8x32xf32>
    %218 = arith.mulf %216, %217 : vector<8x32xf32>
    %219 = vector.broadcast %200 : vector<1x32xf32> to vector<8x32xf32>
    %220 = arith.addf %218, %219 : vector<8x32xf32>
    %c1 = arith.constant 1 : index
    %c0_89 = arith.constant 0 : index
    %c0_90 = arith.constant 0 : index
    %221 = vector.load %arg5[%c1, %c0_89, %c0_90] : memref<2x32x96xbf16, #tpu.memory_space<vmem>>, vector<1x32x96xbf16>
    %222 = vector.shape_cast %221 : vector<1x32x96xbf16> to vector<32x96xbf16>
    %c1_91 = arith.constant 1 : index
    %c0_92 = arith.constant 0 : index
    %c0_93 = arith.constant 0 : index
    %223 = vector.load %arg6[%c1_91, %c0_92, %c0_93] : memref<2x1x96xf32, #tpu.memory_space<vmem>>, vector<1x1x96xf32>
    %224 = vector.shape_cast %223 : vector<1x1x96xf32> to vector<1x96xf32>
    %225 = arith.truncf %220 : vector<8x32xf32> to vector<8x32xbf16>
    %cst_94 = arith.constant dense<0.000000e+00> : vector<8x96xf32>
    %226 = tpu.matmul %225, %222, %cst_94 {dimension_numbers = #tpu.dot_dimension_numbers<[1], [0], [0], [1], [0, 0, 1, 1], [], []>} : vector<8x32xbf16>, vector<32x96xbf16>, vector<8x96xf32> -> vector<8x96xf32>
    %227 = vector.broadcast %224 : vector<1x96xf32> to vector<8x96xf32>
    %228 = arith.addf %226, %227 : vector<8x96xf32>
    %229 = vector.extract_strided_slice %228 {offsets = [0, 0], sizes = [8, 32], strides = [1, 1]} : vector<8x96xf32> to vector<8x32xf32>
    %230 = vector.extract_strided_slice %228 {offsets = [0, 32], sizes = [8, 32], strides = [1, 1]} : vector<8x96xf32> to vector<8x32xf32>
    %231 = vector.extract_strided_slice %228 {offsets = [0, 64], sizes = [8, 32], strides = [1, 1]} : vector<8x96xf32> to vector<8x32xf32>
    %232 = vector.extract_strided_slice %229 {offsets = [0, 0], sizes = [8, 8], strides = [1, 1]} : vector<8x32xf32> to vector<8x8xf32>
    %233 = arith.truncf %232 : vector<8x8xf32> to vector<8x8xbf16>
    %234 = vector.extract_strided_slice %230 {offsets = [0, 0], sizes = [8, 8], strides = [1, 1]} : vector<8x32xf32> to vector<8x8xf32>
    %235 = arith.truncf %234 : vector<8x8xf32> to vector<8x8xbf16>
    %236 = vector.extract_strided_slice %231 {offsets = [0, 0], sizes = [8, 8], strides = [1, 1]} : vector<8x32xf32> to vector<8x8xf32>
    %237 = arith.truncf %236 : vector<8x8xf32> to vector<8x8xbf16>
    %cst_95 = arith.constant dense<0.000000e+00> : vector<8x8xf32>
    %238 = tpu.matmul %233, %235, %cst_95 {dimension_numbers = #tpu.dot_dimension_numbers<[1], [1], [0], [0], [0, 0, 1, 0], [], []>} : vector<8x8xbf16>, vector<8x8xbf16>, vector<8x8xf32> -> vector<8x8xf32>
    %cst_96 = arith.constant 0.353553385 : f32
    %239 = vector.broadcast %cst_96 : f32 to vector<8x8xf32>
    %240 = arith.mulf %238, %239 : vector<8x8xf32>
    %241 = vector.broadcast %7 : vector<1x8xf32> to vector<8x8xf32>
    %242 = arith.addf %240, %241 : vector<8x8xf32>
    %cst_97 = arith.constant dense<0xFF800000> : vector<8xf32>
    %243 = vector.multi_reduction <maximumf>, %242, %cst_97 [1] : vector<8x8xf32> to vector<8xf32>
    %244 = vector.shape_cast %243 : vector<8xf32> to vector<8x1xf32>
    %245 = vector.broadcast %244 : vector<8x1xf32> to vector<8x8xf32>
    %246 = arith.subf %242, %245 : vector<8x8xf32>
    %247 = math.exp %246 : vector<8x8xf32>
    %cst_98 = arith.constant dense<0.000000e+00> : vector<8xf32>
    %248 = vector.multi_reduction <add>, %247, %cst_98 [1] : vector<8x8xf32> to vector<8xf32>
    %249 = vector.shape_cast %248 : vector<8xf32> to vector<8x1xf32>
    %250 = tpu.reciprocal %249 {approx = true} : vector<8x1xf32> -> vector<8x1xf32>
    %251 = vector.broadcast %250 : vector<8x1xf32> to vector<8x8xf32>
    %252 = arith.mulf %247, %251 : vector<8x8xf32>
    %253 = arith.truncf %252 : vector<8x8xf32> to vector<8x8xbf16>
    %cst_99 = arith.constant dense<0.000000e+00> : vector<8x8xf32>
    %254 = tpu.matmul %253, %237, %cst_99 {dimension_numbers = #tpu.dot_dimension_numbers<[1], [0], [0], [1], [0, 0, 1, 1], [], []>} : vector<8x8xbf16>, vector<8x8xbf16>, vector<8x8xf32> -> vector<8x8xf32>
    %255 = vector.extract_strided_slice %229 {offsets = [0, 8], sizes = [8, 8], strides = [1, 1]} : vector<8x32xf32> to vector<8x8xf32>
    %256 = arith.truncf %255 : vector<8x8xf32> to vector<8x8xbf16>
    %257 = vector.extract_strided_slice %230 {offsets = [0, 8], sizes = [8, 8], strides = [1, 1]} : vector<8x32xf32> to vector<8x8xf32>
    %258 = arith.truncf %257 : vector<8x8xf32> to vector<8x8xbf16>
    %259 = vector.extract_strided_slice %231 {offsets = [0, 8], sizes = [8, 8], strides = [1, 1]} : vector<8x32xf32> to vector<8x8xf32>
    %260 = arith.truncf %259 : vector<8x8xf32> to vector<8x8xbf16>
    %cst_100 = arith.constant dense<0.000000e+00> : vector<8x8xf32>
    %261 = tpu.matmul %256, %258, %cst_100 {dimension_numbers = #tpu.dot_dimension_numbers<[1], [1], [0], [0], [0, 0, 1, 0], [], []>} : vector<8x8xbf16>, vector<8x8xbf16>, vector<8x8xf32> -> vector<8x8xf32>
    %cst_101 = arith.constant 0.353553385 : f32
    %262 = vector.broadcast %cst_101 : f32 to vector<8x8xf32>
    %263 = arith.mulf %261, %262 : vector<8x8xf32>
    %264 = vector.broadcast %7 : vector<1x8xf32> to vector<8x8xf32>
    %265 = arith.addf %263, %264 : vector<8x8xf32>
    %cst_102 = arith.constant dense<0xFF800000> : vector<8xf32>
    %266 = vector.multi_reduction <maximumf>, %265, %cst_102 [1] : vector<8x8xf32> to vector<8xf32>
    %267 = vector.shape_cast %266 : vector<8xf32> to vector<8x1xf32>
    %268 = vector.broadcast %267 : vector<8x1xf32> to vector<8x8xf32>
    %269 = arith.subf %265, %268 : vector<8x8xf32>
    %270 = math.exp %269 : vector<8x8xf32>
    %cst_103 = arith.constant dense<0.000000e+00> : vector<8xf32>
    %271 = vector.multi_reduction <add>, %270, %cst_103 [1] : vector<8x8xf32> to vector<8xf32>
    %272 = vector.shape_cast %271 : vector<8xf32> to vector<8x1xf32>
    %273 = tpu.reciprocal %272 {approx = true} : vector<8x1xf32> -> vector<8x1xf32>
    %274 = vector.broadcast %273 : vector<8x1xf32> to vector<8x8xf32>
    %275 = arith.mulf %270, %274 : vector<8x8xf32>
    %276 = arith.truncf %275 : vector<8x8xf32> to vector<8x8xbf16>
    %cst_104 = arith.constant dense<0.000000e+00> : vector<8x8xf32>
    %277 = tpu.matmul %276, %260, %cst_104 {dimension_numbers = #tpu.dot_dimension_numbers<[1], [0], [0], [1], [0, 0, 1, 1], [], []>} : vector<8x8xbf16>, vector<8x8xbf16>, vector<8x8xf32> -> vector<8x8xf32>
    %278 = vector.extract_strided_slice %229 {offsets = [0, 16], sizes = [8, 8], strides = [1, 1]} : vector<8x32xf32> to vector<8x8xf32>
    %279 = arith.truncf %278 : vector<8x8xf32> to vector<8x8xbf16>
    %280 = vector.extract_strided_slice %230 {offsets = [0, 16], sizes = [8, 8], strides = [1, 1]} : vector<8x32xf32> to vector<8x8xf32>
    %281 = arith.truncf %280 : vector<8x8xf32> to vector<8x8xbf16>
    %282 = vector.extract_strided_slice %231 {offsets = [0, 16], sizes = [8, 8], strides = [1, 1]} : vector<8x32xf32> to vector<8x8xf32>
    %283 = arith.truncf %282 : vector<8x8xf32> to vector<8x8xbf16>
    %cst_105 = arith.constant dense<0.000000e+00> : vector<8x8xf32>
    %284 = tpu.matmul %279, %281, %cst_105 {dimension_numbers = #tpu.dot_dimension_numbers<[1], [1], [0], [0], [0, 0, 1, 0], [], []>} : vector<8x8xbf16>, vector<8x8xbf16>, vector<8x8xf32> -> vector<8x8xf32>
    %cst_106 = arith.constant 0.353553385 : f32
    %285 = vector.broadcast %cst_106 : f32 to vector<8x8xf32>
    %286 = arith.mulf %284, %285 : vector<8x8xf32>
    %287 = vector.broadcast %7 : vector<1x8xf32> to vector<8x8xf32>
    %288 = arith.addf %286, %287 : vector<8x8xf32>
    %cst_107 = arith.constant dense<0xFF800000> : vector<8xf32>
    %289 = vector.multi_reduction <maximumf>, %288, %cst_107 [1] : vector<8x8xf32> to vector<8xf32>
    %290 = vector.shape_cast %289 : vector<8xf32> to vector<8x1xf32>
    %291 = vector.broadcast %290 : vector<8x1xf32> to vector<8x8xf32>
    %292 = arith.subf %288, %291 : vector<8x8xf32>
    %293 = math.exp %292 : vector<8x8xf32>
    %cst_108 = arith.constant dense<0.000000e+00> : vector<8xf32>
    %294 = vector.multi_reduction <add>, %293, %cst_108 [1] : vector<8x8xf32> to vector<8xf32>
    %295 = vector.shape_cast %294 : vector<8xf32> to vector<8x1xf32>
    %296 = tpu.reciprocal %295 {approx = true} : vector<8x1xf32> -> vector<8x1xf32>
    %297 = vector.broadcast %296 : vector<8x1xf32> to vector<8x8xf32>
    %298 = arith.mulf %293, %297 : vector<8x8xf32>
    %299 = arith.truncf %298 : vector<8x8xf32> to vector<8x8xbf16>
    %cst_109 = arith.constant dense<0.000000e+00> : vector<8x8xf32>
    %300 = tpu.matmul %299, %283, %cst_109 {dimension_numbers = #tpu.dot_dimension_numbers<[1], [0], [0], [1], [0, 0, 1, 1], [], []>} : vector<8x8xbf16>, vector<8x8xbf16>, vector<8x8xf32> -> vector<8x8xf32>
    %301 = vector.extract_strided_slice %229 {offsets = [0, 24], sizes = [8, 8], strides = [1, 1]} : vector<8x32xf32> to vector<8x8xf32>
    %302 = arith.truncf %301 : vector<8x8xf32> to vector<8x8xbf16>
    %303 = vector.extract_strided_slice %230 {offsets = [0, 24], sizes = [8, 8], strides = [1, 1]} : vector<8x32xf32> to vector<8x8xf32>
    %304 = arith.truncf %303 : vector<8x8xf32> to vector<8x8xbf16>
    %305 = vector.extract_strided_slice %231 {offsets = [0, 24], sizes = [8, 8], strides = [1, 1]} : vector<8x32xf32> to vector<8x8xf32>
    %306 = arith.truncf %305 : vector<8x8xf32> to vector<8x8xbf16>
    %cst_110 = arith.constant dense<0.000000e+00> : vector<8x8xf32>
    %307 = tpu.matmul %302, %304, %cst_110 {dimension_numbers = #tpu.dot_dimension_numbers<[1], [1], [0], [0], [0, 0, 1, 0], [], []>} : vector<8x8xbf16>, vector<8x8xbf16>, vector<8x8xf32> -> vector<8x8xf32>
    %cst_111 = arith.constant 0.353553385 : f32
    %308 = vector.broadcast %cst_111 : f32 to vector<8x8xf32>
    %309 = arith.mulf %307, %308 : vector<8x8xf32>
    %310 = vector.broadcast %7 : vector<1x8xf32> to vector<8x8xf32>
    %311 = arith.addf %309, %310 : vector<8x8xf32>
    %cst_112 = arith.constant dense<0xFF800000> : vector<8xf32>
    %312 = vector.multi_reduction <maximumf>, %311, %cst_112 [1] : vector<8x8xf32> to vector<8xf32>
    %313 = vector.shape_cast %312 : vector<8xf32> to vector<8x1xf32>
    %314 = vector.broadcast %313 : vector<8x1xf32> to vector<8x8xf32>
    %315 = arith.subf %311, %314 : vector<8x8xf32>
    %316 = math.exp %315 : vector<8x8xf32>
    %cst_113 = arith.constant dense<0.000000e+00> : vector<8xf32>
    %317 = vector.multi_reduction <add>, %316, %cst_113 [1] : vector<8x8xf32> to vector<8xf32>
    %318 = vector.shape_cast %317 : vector<8xf32> to vector<8x1xf32>
    %319 = tpu.reciprocal %318 {approx = true} : vector<8x1xf32> -> vector<8x1xf32>
    %320 = vector.broadcast %319 : vector<8x1xf32> to vector<8x8xf32>
    %321 = arith.mulf %316, %320 : vector<8x8xf32>
    %322 = arith.truncf %321 : vector<8x8xf32> to vector<8x8xbf16>
    %cst_114 = arith.constant dense<0.000000e+00> : vector<8x8xf32>
    %323 = tpu.matmul %322, %306, %cst_114 {dimension_numbers = #tpu.dot_dimension_numbers<[1], [0], [0], [1], [0, 0, 1, 1], [], []>} : vector<8x8xbf16>, vector<8x8xbf16>, vector<8x8xf32> -> vector<8x8xf32>
    %324 = tpu.concatenate %254, %277, %300, %323 in 1 : vector<8x8xf32>, vector<8x8xf32>, vector<8x8xf32>, vector<8x8xf32> -> vector<8x32xf32>
    %c1_115 = arith.constant 1 : index
    %c0_116 = arith.constant 0 : index
    %c0_117 = arith.constant 0 : index
    %325 = vector.load %arg7[%c1_115, %c0_116, %c0_117] : memref<2x32x32xbf16, #tpu.memory_space<vmem>>, vector<1x32x32xbf16>
    %326 = vector.shape_cast %325 : vector<1x32x32xbf16> to vector<32x32xbf16>
    %c1_118 = arith.constant 1 : index
    %c0_119 = arith.constant 0 : index
    %c0_120 = arith.constant 0 : index
    %327 = vector.load %arg8[%c1_118, %c0_119, %c0_120] : memref<2x1x32xf32, #tpu.memory_space<vmem>>, vector<1x1x32xf32>
    %328 = vector.shape_cast %327 : vector<1x1x32xf32> to vector<1x32xf32>
    %329 = arith.truncf %324 : vector<8x32xf32> to vector<8x32xbf16>
    %cst_121 = arith.constant dense<0.000000e+00> : vector<8x32xf32>
    %330 = tpu.matmul %329, %326, %cst_121 {dimension_numbers = #tpu.dot_dimension_numbers<[1], [0], [0], [1], [0, 0, 1, 1], [], []>} : vector<8x32xbf16>, vector<32x32xbf16>, vector<8x32xf32> -> vector<8x32xf32>
    %331 = vector.broadcast %328 : vector<1x32xf32> to vector<8x32xf32>
    %332 = arith.addf %330, %331 : vector<8x32xf32>
    %333 = arith.addf %332, %220 : vector<8x32xf32>
    %c1_122 = arith.constant 1 : index
    %c0_123 = arith.constant 0 : index
    %c0_124 = arith.constant 0 : index
    %334 = vector.load %arg9[%c1_122, %c0_123, %c0_124] : memref<2x1x32xf32, #tpu.memory_space<vmem>>, vector<1x1x32xf32>
    %335 = vector.shape_cast %334 : vector<1x1x32xf32> to vector<1x32xf32>
    %c1_125 = arith.constant 1 : index
    %c0_126 = arith.constant 0 : index
    %c0_127 = arith.constant 0 : index
    %336 = vector.load %arg10[%c1_125, %c0_126, %c0_127] : memref<2x1x32xf32, #tpu.memory_space<vmem>>, vector<1x1x32xf32>
    %337 = vector.shape_cast %336 : vector<1x1x32xf32> to vector<1x32xf32>
    %cst_128 = arith.constant dense<0.000000e+00> : vector<8xf32>
    %338 = vector.multi_reduction <add>, %333, %cst_128 [1] : vector<8x32xf32> to vector<8xf32>
    %339 = vector.shape_cast %338 : vector<8xf32> to vector<8x1xf32>
    %cst_129 = arith.constant 3.200000e+01 : f32
    %340 = vector.broadcast %cst_129 : f32 to vector<8x1xf32>
    %341 = arith.divf %339, %340 : vector<8x1xf32>
    %342 = vector.broadcast %341 : vector<8x1xf32> to vector<8x32xf32>
    %343 = arith.subf %333, %342 : vector<8x32xf32>
    %344 = arith.mulf %343, %343 : vector<8x32xf32>
    %cst_130 = arith.constant dense<0.000000e+00> : vector<8xf32>
    %345 = vector.multi_reduction <add>, %344, %cst_130 [1] : vector<8x32xf32> to vector<8xf32>
    %346 = vector.shape_cast %345 : vector<8xf32> to vector<8x1xf32>
    %cst_131 = arith.constant 3.200000e+01 : f32
    %347 = vector.broadcast %cst_131 : f32 to vector<8x1xf32>
    %348 = arith.divf %346, %347 : vector<8x1xf32>
    %cst_132 = arith.constant 9.99999996E-13 : f32
    %349 = vector.broadcast %cst_132 : f32 to vector<8x1xf32>
    %350 = arith.addf %348, %349 : vector<8x1xf32>
    %351 = math.rsqrt %350 : vector<8x1xf32>
    %352 = vector.broadcast %351 : vector<8x1xf32> to vector<8x32xf32>
    %353 = arith.mulf %343, %352 : vector<8x32xf32>
    %354 = vector.broadcast %335 : vector<1x32xf32> to vector<8x32xf32>
    %355 = arith.mulf %353, %354 : vector<8x32xf32>
    %356 = vector.broadcast %337 : vector<1x32xf32> to vector<8x32xf32>
    %357 = arith.addf %355, %356 : vector<8x32xf32>
    %c1_133 = arith.constant 1 : index
    %c0_134 = arith.constant 0 : index
    %c0_135 = arith.constant 0 : index
    %358 = vector.load %arg11[%c1_133, %c0_134, %c0_135] : memref<2x32x64xbf16, #tpu.memory_space<vmem>>, vector<1x32x64xbf16>
    %359 = vector.shape_cast %358 : vector<1x32x64xbf16> to vector<32x64xbf16>
    %c1_136 = arith.constant 1 : index
    %c0_137 = arith.constant 0 : index
    %c0_138 = arith.constant 0 : index
    %360 = vector.load %arg12[%c1_136, %c0_137, %c0_138] : memref<2x1x64xf32, #tpu.memory_space<vmem>>, vector<1x1x64xf32>
    %361 = vector.shape_cast %360 : vector<1x1x64xf32> to vector<1x64xf32>
    %362 = arith.truncf %357 : vector<8x32xf32> to vector<8x32xbf16>
    %cst_139 = arith.constant dense<0.000000e+00> : vector<8x64xf32>
    %363 = tpu.matmul %362, %359, %cst_139 {dimension_numbers = #tpu.dot_dimension_numbers<[1], [0], [0], [1], [0, 0, 1, 1], [], []>} : vector<8x32xbf16>, vector<32x64xbf16>, vector<8x64xf32> -> vector<8x64xf32>
    %364 = vector.broadcast %361 : vector<1x64xf32> to vector<8x64xf32>
    %365 = arith.addf %363, %364 : vector<8x64xf32>
    %366 = arith.mulf %365, %365 : vector<8x64xf32>
    %367 = arith.mulf %365, %366 : vector<8x64xf32>
    %cst_140 = arith.constant 4.471500e-02 : f32
    %368 = vector.broadcast %cst_140 : f32 to vector<8x64xf32>
    %369 = arith.mulf %368, %367 : vector<8x64xf32>
    %370 = arith.addf %365, %369 : vector<8x64xf32>
    %cst_141 = arith.constant 0.797884583 : f32
    %371 = vector.broadcast %cst_141 : f32 to vector<8x64xf32>
    %372 = arith.mulf %371, %370 : vector<8x64xf32>
    %373 = math.tanh %372 : vector<8x64xf32>
    %cst_142 = arith.constant 1.000000e+00 : f32
    %374 = vector.broadcast %cst_142 : f32 to vector<8x64xf32>
    %375 = arith.addf %374, %373 : vector<8x64xf32>
    %cst_143 = arith.constant 5.000000e-01 : f32
    %376 = vector.broadcast %cst_143 : f32 to vector<8x64xf32>
    %377 = arith.mulf %376, %375 : vector<8x64xf32>
    %378 = arith.mulf %365, %377 : vector<8x64xf32>
    %c1_144 = arith.constant 1 : index
    %c0_145 = arith.constant 0 : index
    %c0_146 = arith.constant 0 : index
    %379 = vector.load %arg13[%c1_144, %c0_145, %c0_146] : memref<2x64x32xbf16, #tpu.memory_space<vmem>>, vector<1x64x32xbf16>
    %380 = vector.shape_cast %379 : vector<1x64x32xbf16> to vector<64x32xbf16>
    %c1_147 = arith.constant 1 : index
    %c0_148 = arith.constant 0 : index
    %c0_149 = arith.constant 0 : index
    %381 = vector.load %arg14[%c1_147, %c0_148, %c0_149] : memref<2x1x32xf32, #tpu.memory_space<vmem>>, vector<1x1x32xf32>
    %382 = vector.shape_cast %381 : vector<1x1x32xf32> to vector<1x32xf32>
    %383 = arith.truncf %378 : vector<8x64xf32> to vector<8x64xbf16>
    %cst_150 = arith.constant dense<0.000000e+00> : vector<8x32xf32>
    %384 = tpu.matmul %383, %380, %cst_150 {dimension_numbers = #tpu.dot_dimension_numbers<[1], [0], [0], [1], [0, 0, 1, 1], [], []>} : vector<8x64xbf16>, vector<64x32xbf16>, vector<8x32xf32> -> vector<8x32xf32>
    %385 = vector.broadcast %382 : vector<1x32xf32> to vector<8x32xf32>
    %386 = arith.addf %384, %385 : vector<8x32xf32>
    %387 = arith.addf %386, %357 : vector<8x32xf32>
    %c1_151 = arith.constant 1 : index
    %c0_152 = arith.constant 0 : index
    %c0_153 = arith.constant 0 : index
    %388 = vector.load %arg15[%c1_151, %c0_152, %c0_153] : memref<2x1x32xf32, #tpu.memory_space<vmem>>, vector<1x1x32xf32>
    %389 = vector.shape_cast %388 : vector<1x1x32xf32> to vector<1x32xf32>
    %c1_154 = arith.constant 1 : index
    %c0_155 = arith.constant 0 : index
    %c0_156 = arith.constant 0 : index
    %390 = vector.load %arg16[%c1_154, %c0_155, %c0_156] : memref<2x1x32xf32, #tpu.memory_space<vmem>>, vector<1x1x32xf32>
    %391 = vector.shape_cast %390 : vector<1x1x32xf32> to vector<1x32xf32>
    %cst_157 = arith.constant dense<0.000000e+00> : vector<8xf32>
    %392 = vector.multi_reduction <add>, %387, %cst_157 [1] : vector<8x32xf32> to vector<8xf32>
    %393 = vector.shape_cast %392 : vector<8xf32> to vector<8x1xf32>
    %cst_158 = arith.constant 3.200000e+01 : f32
    %394 = vector.broadcast %cst_158 : f32 to vector<8x1xf32>
    %395 = arith.divf %393, %394 : vector<8x1xf32>
    %396 = vector.broadcast %395 : vector<8x1xf32> to vector<8x32xf32>
    %397 = arith.subf %387, %396 : vector<8x32xf32>
    %398 = arith.mulf %397, %397 : vector<8x32xf32>
    %cst_159 = arith.constant dense<0.000000e+00> : vector<8xf32>
    %399 = vector.multi_reduction <add>, %398, %cst_159 [1] : vector<8x32xf32> to vector<8xf32>
    %400 = vector.shape_cast %399 : vector<8xf32> to vector<8x1xf32>
    %cst_160 = arith.constant 3.200000e+01 : f32
    %401 = vector.broadcast %cst_160 : f32 to vector<8x1xf32>
    %402 = arith.divf %400, %401 : vector<8x1xf32>
    %cst_161 = arith.constant 9.99999996E-13 : f32
    %403 = vector.broadcast %cst_161 : f32 to vector<8x1xf32>
    %404 = arith.addf %402, %403 : vector<8x1xf32>
    %405 = math.rsqrt %404 : vector<8x1xf32>
    %406 = vector.broadcast %405 : vector<8x1xf32> to vector<8x32xf32>
    %407 = arith.mulf %397, %406 : vector<8x32xf32>
    %408 = vector.broadcast %389 : vector<1x32xf32> to vector<8x32xf32>
    %409 = arith.mulf %407, %408 : vector<8x32xf32>
    %410 = vector.broadcast %391 : vector<1x32xf32> to vector<8x32xf32>
    %411 = arith.addf %409, %410 : vector<8x32xf32>
    %412 = vector.extract_strided_slice %411 {offsets = [0, 0], sizes = [1, 32], strides = [1, 1]} : vector<8x32xf32> to vector<1x32xf32>
    %c0_162 = arith.constant 0 : index
    %c0_163 = arith.constant 0 : index
    %413 = vector.load %arg17[%c0_162, %c0_163] : memref<32x32xbf16, #tpu.memory_space<vmem>>, vector<32x32xbf16>
    %c0_164 = arith.constant 0 : index
    %c0_165 = arith.constant 0 : index
    %414 = vector.load %arg18[%c0_164, %c0_165] : memref<1x32xf32, #tpu.memory_space<vmem>>, vector<1x32xf32>
    %415 = arith.truncf %412 : vector<1x32xf32> to vector<1x32xbf16>
    %cst_166 = arith.constant dense<0.000000e+00> : vector<1x32xf32>
    %416 = tpu.matmul %415, %413, %cst_166 {dimension_numbers = #tpu.dot_dimension_numbers<[1], [0], [0], [1], [0, 0, 1, 1], [], []>} : vector<1x32xbf16>, vector<32x32xbf16>, vector<1x32xf32> -> vector<1x32xf32>
    %417 = arith.addf %416, %414 : vector<1x32xf32>
    %418 = math.tanh %417 : vector<1x32xf32>
    %419 = vector.shape_cast %418 : vector<1x32xf32> to vector<1x1x32xf32>
    %cst_167 = arith.constant dense<0.000000e+00> : vector<1xf32>
    %420 = vector.multi_reduction <add>, %419, %cst_167 [1, 2] : vector<1x1x32xf32> to vector<1xf32>
    %421 = vector.shape_cast %420 : vector<1xf32> to vector<1x1x1xf32>
    %422 = vector.extract %421[0, 0, 0] : f32 from vector<1x1x1xf32>
    %423 = vector.broadcast %422 : f32 to vector<1x1xf32>
    %cst_168 = arith.constant 0.000000e+00 : f32
    %424 = vector.broadcast %cst_168 : f32 to vector<1x1xf32>
    %425 = arith.mulf %424, %423 : vector<1x1xf32>
    %426 = vector.broadcast %425 : vector<1x1xf32> to vector<1x32xf32>
    %427 = arith.addf %412, %426 : vector<1x32xf32>
    %c0_169 = arith.constant 0 : index
    %c0_170 = arith.constant 0 : index
    %c0_171 = arith.constant 0 : index
    %428 = vector.load %arg19[%c0_169, %c0_170, %c0_171] : memref<1x1x32xf32, #tpu.memory_space<vmem>>, vector<1x1x32xf32>
    %429 = vector.shape_cast %428 : vector<1x1x32xf32> to vector<1x32xf32>
    %430 = vector.shape_cast %427 : vector<1x32xf32> to vector<1x1x32xf32>
    tpu.vector_store %arg19[%c0_169, %c0_170, %c0_171], %430 {strides = array<i32>} : memref<1x1x32xf32, #tpu.memory_space<vmem>>, vector<1x1x32xf32>,
    return
  }
  func.func @transform_0(%arg0: i32) -> (i32, i32, i32) {
    %c0_i32 = arith.constant 0 : i32
    %c0_i32_0 = arith.constant 0 : i32
    %c0_i32_1 = arith.constant 0 : i32
    return %arg0, %c0_i32, %c0_i32_0 : i32, i32, i32
  }
  func.func @transform_1(%arg0: i32) -> (i32, i32, i32) {
    %c0_i32 = arith.constant 0 : i32
    %c0_i32_0 = arith.constant 0 : i32
    %c0_i32_1 = arith.constant 0 : i32
    return %arg0, %c0_i32, %c0_i32_0 : i32, i32, i32
  }
  func.func @transform_2(%arg0: i32) -> (i32, i32) {
    %c0_i32 = arith.constant 0 : i32
    %c0_i32_0 = arith.constant 0 : i32
    %c0_i32_1 = arith.constant 0 : i32
    return %c0_i32, %c0_i32_0 : i32, i32
  }
  func.func @transform_3(%arg0: i32) -> (i32, i32) {
    %c0_i32 = arith.constant 0 : i32
    %c0_i32_0 = arith.constant 0 : i32
    %c0_i32_1 = arith.constant 0 : i32
    return %c0_i32, %c0_i32_0 : i32, i32
  }
  func.func @transform_4(%arg0: i32) -> (i32, i32, i32) {
    %c0_i32 = arith.constant 0 : i32
    %c0_i32_0 = arith.constant 0 : i32
    %c0_i32_1 = arith.constant 0 : i32
    %c0_i32_2 = arith.constant 0 : i32
    return %c0_i32, %c0_i32_0, %c0_i32_1 : i32, i32, i32
  }
  func.func @transform_5(%arg0: i32) -> (i32, i32, i32) {
    %c0_i32 = arith.constant 0 : i32
    %c0_i32_0 = arith.constant 0 : i32
    %c0_i32_1 = arith.constant 0 : i32
    %c0_i32_2 = arith.constant 0 : i32
    return %c0_i32, %c0_i32_0, %c0_i32_1 : i32, i32, i32
  }
  func.func @transform_6(%arg0: i32) -> (i32, i32, i32) {
    %c0_i32 = arith.constant 0 : i32
    %c0_i32_0 = arith.constant 0 : i32
    %c0_i32_1 = arith.constant 0 : i32
    %c0_i32_2 = arith.constant 0 : i32
    return %c0_i32, %c0_i32_0, %c0_i32_1 : i32, i32, i32
  }
  func.func @transform_7(%arg0: i32) -> (i32, i32, i32) {
    %c0_i32 = arith.constant 0 : i32
    %c0_i32_0 = arith.constant 0 : i32
    %c0_i32_1 = arith.constant 0 : i32
    %c0_i32_2 = arith.constant 0 : i32
    return %c0_i32, %c0_i32_0, %c0_i32_1 : i32, i32, i32
  }
  func.func @transform_8(%arg0: i32) -> (i32, i32, i32) {
    %c0_i32 = arith.constant 0 : i32
    %c0_i32_0 = arith.constant 0 : i32
    %c0_i32_1 = arith.constant 0 : i32
    %c0_i32_2 = arith.constant 0 : i32
    return %c0_i32, %c0_i32_0, %c0_i32_1 : i32, i32, i32
  }
  func.func @transform_9(%arg0: i32) -> (i32, i32, i32) {
    %c0_i32 = arith.constant 0 : i32
    %c0_i32_0 = arith.constant 0 : i32
    %c0_i32_1 = arith.constant 0 : i32
    %c0_i32_2 = arith.constant 0 : i32
    return %c0_i32, %c0_i32_0, %c0_i32_1 : i32, i32, i32
  }
  func.func @transform_10(%arg0: i32) -> (i32, i32, i32) {
    %c0_i32 = arith.constant 0 : i32
    %c0_i32_0 = arith.constant 0 : i32
    %c0_i32_1 = arith.constant 0 : i32
    %c0_i32_2 = arith.constant 0 : i32
    return %c0_i32, %c0_i32_0, %c0_i32_1 : i32, i32, i32
  }
  func.func @transform_11(%arg0: i32) -> (i32, i32, i32) {
    %c0_i32 = arith.constant 0 : i32
    %c0_i32_0 = arith.constant 0 : i32
    %c0_i32_1 = arith.constant 0 : i32
    %c0_i32_2 = arith.constant 0 : i32
    return %c0_i32, %c0_i32_0, %c0_i32_1 : i32, i32, i32
  }
  func.func @transform_12(%arg0: i32) -> (i32, i32, i32) {
    %c0_i32 = arith.constant 0 : i32
    %c0_i32_0 = arith.constant 0 : i32
    %c0_i32_1 = arith.constant 0 : i32
    %c0_i32_2 = arith.constant 0 : i32
    return %c0_i32, %c0_i32_0, %c0_i32_1 : i32, i32, i32
  }
  func.func @transform_13(%arg0: i32) -> (i32, i32, i32) {
    %c0_i32 = arith.constant 0 : i32
    %c0_i32_0 = arith.constant 0 : i32
    %c0_i32_1 = arith.constant 0 : i32
    %c0_i32_2 = arith.constant 0 : i32
    return %c0_i32, %c0_i32_0, %c0_i32_1 : i32, i32, i32
  }
  func.func @transform_14(%arg0: i32) -> (i32, i32, i32) {
    %c0_i32 = arith.constant 0 : i32
    %c0_i32_0 = arith.constant 0 : i32
    %c0_i32_1 = arith.constant 0 : i32
    %c0_i32_2 = arith.constant 0 : i32
    return %c0_i32, %c0_i32_0, %c0_i32_1 : i32, i32, i32
  }
  func.func @transform_15(%arg0: i32) -> (i32, i32, i32) {
    %c0_i32 = arith.constant 0 : i32
    %c0_i32_0 = arith.constant 0 : i32
    %c0_i32_1 = arith.constant 0 : i32
    %c0_i32_2 = arith.constant 0 : i32
    return %c0_i32, %c0_i32_0, %c0_i32_1 : i32, i32, i32
  }
  func.func @transform_16(%arg0: i32) -> (i32, i32) {
    %c0_i32 = arith.constant 0 : i32
    %c0_i32_0 = arith.constant 0 : i32
    %c0_i32_1 = arith.constant 0 : i32
    return %c0_i32, %c0_i32_0 : i32, i32
  }
  func.func @transform_17(%arg0: i32) -> (i32, i32) {
    %c0_i32 = arith.constant 0 : i32
    %c0_i32_0 = arith.constant 0 : i32
    %c0_i32_1 = arith.constant 0 : i32
    return %c0_i32, %c0_i32_0 : i32, i32
  }
  func.func @transform_18(%arg0: i32) -> (i32, i32, i32) {
    %c0_i32 = arith.constant 0 : i32
    %c0_i32_0 = arith.constant 0 : i32
    %c0_i32_1 = arith.constant 0 : i32
    return %arg0, %c0_i32, %c0_i32_0 : i32, i32, i32
  }
}

</mosaic_0001>

<llo_original>
// kernel: _two_tower_forward.2
$region0: #{_two_tower_forward.2}
  #allocation0 [shape = 'u32[]', space=smem, size = 0x4, offset = 0x4, fixed_abs, tag = 'smem constant byte address 0x4 - core index']
  #allocation1 [shape = 'u32[144,128]{1,0:T(1,128)}', space=vmem, size = 0x12000, scoped, tag = 'internal scratch']
  %s0 = inlined_call_operand.vmem [shape: f32[2,8,32], index: 0, kind: input, shape index: {}]
  %s1 = inlined_call_operand.vmem [shape: f32[2,1,8], index: 1, kind: input, shape index: {}]
  %s2 = inlined_call_operand.vmem [shape: f32[1,32], index: 2, kind: input, shape index: {}]
  %s3 = inlined_call_operand.vmem [shape: f32[1,32], index: 3, kind: input, shape index: {}]
  %s4 = inlined_call_operand.vmem [shape: bf16[2,32,96], index: 4, kind: input, shape index: {}]
  %s5 = inlined_call_operand.vmem [shape: f32[2,1,96], index: 5, kind: input, shape index: {}]
  %s6 = inlined_call_operand.vmem [shape: bf16[2,32,32], index: 6, kind: input, shape index: {}]
  %s7 = inlined_call_operand.vmem [shape: f32[2,1,32], index: 7, kind: input, shape index: {}]
  %s8 = inlined_call_operand.vmem [shape: f32[2,1,32], index: 8, kind: input, shape index: {}]
  %s9 = inlined_call_operand.vmem [shape: f32[2,1,32], index: 9, kind: input, shape index: {}]
  %s10 = inlined_call_operand.vmem [shape: bf16[2,32,64], index: 10, kind: input, shape index: {}]
  %s11 = inlined_call_operand.vmem [shape: f32[2,1,64], index: 11, kind: input, shape index: {}]
  %s12 = inlined_call_operand.vmem [shape: bf16[2,64,32], index: 12, kind: input, shape index: {}]
  %s13 = inlined_call_operand.vmem [shape: f32[2,1,32], index: 13, kind: input, shape index: {}]
  %s14 = inlined_call_operand.vmem [shape: f32[2,1,32], index: 14, kind: input, shape index: {}]
  %s15 = inlined_call_operand.vmem [shape: f32[2,1,32], index: 15, kind: input, shape index: {}]
  %s16 = inlined_call_operand.vmem [shape: bf16[32,32], index: 16, kind: input, shape index: {}]
  %s17 = inlined_call_operand.vmem [shape: f32[1,32], index: 17, kind: input, shape index: {}]
  %s18 = inlined_call_operand.hbm [shape: f32[2,1,32], index: 18, kind: output, shape index: {}]
  %s19 = sld [smem:[#allocation0]]
  $region105: #{_two_tower_forward.2} parent=0
    _
  %s21 = ssub.s32 1, %s19
  %s22 = scalar_select 0, %s21, %s19
  $region1: #{_two_tower_forward.2} parent=0
    #allocation2 [shape = 'u8[1024]{0}', space=vmem, size = 0x400, scoped, tag = 'output window, operand 0']
    #allocation3 [shape = 's32[2]{0}', space=sflag, size = 0x8, scoped, tag = 'scoped memory for _two_tower_forward.2']
    %23 = vsyncpa [#allocation3], 0
    %s24 = scalar_lea.sflag [#allocation3], 1
    %25 = vsyncpa %s24, 0
    loop: start=0, step=1, limit=4
    $region2: #{_two_tower_forward.2} parent=1 // loop_pre_header
      _
    $region3: #{_two_tower_forward.2} parent=1 // loop_header
      %s27 = sphi 0, %s31
      %p28 = scmp.ge.s32.totalorder %s27, 4
      %s37 = sphi 0, %s39
      %s40 = sphi 0, %s37
      %s41 = sphi 0, %s40
      %s57 = sphi 0, %s41
      %s63 = sphi 0, %s65
      %s66 = sphi 0, %s63
      %s67 = sphi 0, %s66
      %s83 = sphi 0, %s67
      %s87 = sphi 0, %s87
      %s89 = sphi 0, %s87
      %s90 = sphi 0, %s89
      %s104 = sphi 0, %s90
      %s108 = sphi 0, %s108
      %s110 = sphi 0, %s108
      %s111 = sphi 0, %s110
      %s125 = sphi 0, %s111
      %s129 = sphi 0, %s129
      %s131 = sphi 0, %s129
      %s132 = sphi 0, %s131
      %s146 = sphi 0, %s132
      %s150 = sphi 0, %s150
      %s152 = sphi 0, %s150
      %s153 = sphi 0, %s152
      %s167 = sphi 0, %s153
      %s171 = sphi 0, %s171
      %s173 = sphi 0, %s171
      %s174 = sphi 0, %s173
      %s188 = sphi 0, %s174
      %s192 = sphi 0, %s192
      %s194 = sphi 0, %s192
      %s195 = sphi 0, %s194
      %s209 = sphi 0, %s195
      %s213 = sphi 0, %s213
      %s215 = sphi 0, %s213
      %s216 = sphi 0, %s215
      %s230 = sphi 0, %s216
      %s234 = sphi 0, %s234
      %s236 = sphi 0, %s234
      %s237 = sphi 0, %s236
      %s251 = sphi 0, %s237
      %s255 = sphi 0, %s255
      %s257 = sphi 0, %s255
      %s258 = sphi 0, %s257
      %s272 = sphi 0, %s258
      %s276 = sphi 0, %s276
      %s278 = sphi 0, %s276
      %s279 = sphi 0, %s278
      %s293 = sphi 0, %s279
      %s297 = sphi 0, %s297
      %s299 = sphi 0, %s297
      %s300 = sphi 0, %s299
      %s314 = sphi 0, %s300
      %s318 = sphi 0, %s318
      %s320 = sphi 0, %s318
      %s321 = sphi 0, %s320
      %s335 = sphi 0, %s321
      %s339 = sphi 0, %s339
      %s341 = sphi 0, %s339
      %s342 = sphi 0, %s341
      %s356 = sphi 0, %s342
      %s360 = sphi 0, %s360
      %s362 = sphi 0, %s360
      %s363 = sphi 0, %s362
      %s377 = sphi 0, %s363
      %s381 = sphi 0, %s381
      %s383 = sphi 0, %s381
      %s384 = sphi 0, %s383
      %s398 = sphi 0, %s384
      %s402 = sphi 0, %s402
      %s404 = sphi 0, %s402
      %s405 = sphi 0, %s404
      %s419 = sphi 0, %s405
      %s425 = sphi 0, %s427
      %s428 = sphi 0, %s425
      %s429 = sphi 0, %s428
      %s445 = sphi 0, %s429
    $region4: #{_two_tower_forward.2} parent=1 // loop_header_branch
      %30 = sbr.rel (%p28) target = $region8
    $region5: #{_two_tower_forward.2} parent=1 // loop_body
      %s32 = ssub.s32 %s27, 1
      %s33 = ssub.s32 %s27, 2
      %s34 = sadd.s32 %s27, 1
      %s35 = ssub.s32 %s27, %s34
      %p36 = scmp.eq.s32.totalorder %s35, 0
      %s38 = sadd.s32 %s37, 1
      %s39 = scalar_select %p36, %s37, %s38
      %p42 = pneg %p36
      %p43 = scmp.eq.s32.totalorder %s27, 1
      %p44 = por %p42, %p43
      %p45 = scmp.ne.s32.totalorder %s37, %s40
      %p46 = scmp.eq.s32.totalorder %s27, 0
      %p47 = por %p45, %p46
      %p48 = scmp.ne.s32.totalorder %s37, %s40
      %p49 = scmp.eq.s32.totalorder %s32, 1
      %p50 = por %p48, %p49
      %p51 = scmp.ne.s32.totalorder %s40, %s41
      %p52 = scmp.eq.s32.totalorder %s32, 0
      %p53 = por %p51, %p52
      %p54 = scmp.ne.s32.totalorder %s40, %s41
      %p55 = scmp.eq.s32.totalorder %s33, 1
      %p56 = por %p54, %p55
      %p58 = scmp.ne.s32.totalorder %s41, %s57
      %p59 = scmp.eq.s32.totalorder %s33, 0
      %p60 = por %p58, %p59
      %s61 = ssub.s32 %s27, %s34
      %p62 = scmp.eq.s32.totalorder %s61, 0
      %s64 = sadd.s32 %s63, 1
      %s65 = scalar_select %p62, %s63, %s64
      %p68 = pneg %p62
      %p69 = scmp.eq.s32.totalorder %s27, 1
      %p70 = por %p68, %p69
      %p71 = scmp.ne.s32.totalorder %s63, %s66
      %p72 = scmp.eq.s32.totalorder %s27, 0
      %p73 = por %p71, %p72
      %p74 = scmp.ne.s32.totalorder %s63, %s66
      %p75 = scmp.eq.s32.totalorder %s32, 1
      %p76 = por %p74, %p75
      %p77 = scmp.ne.s32.totalorder %s66, %s67
      %p78 = scmp.eq.s32.totalorder %s32, 0
      %p79 = por %p77, %p78
      %p80 = scmp.ne.s32.totalorder %s66, %s67
      %p81 = scmp.eq.s32.totalorder %s33, 1
      %p82 = por %p80, %p81
      %p84 = scmp.ne.s32.totalorder %s67, %s83
      %p85 = scmp.eq.s32.totalorder %s33, 0
      %p86 = por %p84, %p85
      %s88 = sadd.s32 %s87, 1
      %p91 = scmp.eq.s32.totalorder %s27, 1
      %p92 = scmp.ne.s32.totalorder %s87, %s89
      %p93 = scmp.eq.s32.totalorder %s27, 0
      %p94 = por %p92, %p93
      %p95 = scmp.ne.s32.totalorder %s87, %s89
      %p96 = scmp.eq.s32.totalorder %s32, 1
      %p97 = por %p95, %p96
      %p98 = scmp.ne.s32.totalorder %s89, %s90
      %p99 = scmp.eq.s32.totalorder %s32, 0
      %p100 = por %p98, %p99
      %p101 = scmp.ne.s32.totalorder %s89, %s90
      %p102 = scmp.eq.s32.totalorder %s33, 1
      %p103 = por %p101, %p102
      %p105 = scmp.ne.s32.totalorder %s90, %s104
      %p106 = scmp.eq.s32.totalorder %s33, 0
      %p107 = por %p105, %p106
      %s109 = sadd.s32 %s108, 1
      %p112 = scmp.eq.s32.totalorder %s27, 1
      %p113 = scmp.ne.s32.totalorder %s108, %s110
      %p114 = scmp.eq.s32.totalorder %s27, 0
      %p115 = por %p113, %p114
      %p116 = scmp.ne.s32.totalorder %s108, %s110
      %p117 = scmp.eq.s32.totalorder %s32, 1
      %p118 = por %p116, %p117
      %p119 = scmp.ne.s32.totalorder %s110, %s111
      %p120 = scmp.eq.s32.totalorder %s32, 0
      %p121 = por %p119, %p120
      %p122 = scmp.ne.s32.totalorder %s110, %s111
      %p123 = scmp.eq.s32.totalorder %s33, 1
      %p124 = por %p122, %p123
      %p126 = scmp.ne.s32.totalorder %s111, %s125
      %p127 = scmp.eq.s32.totalorder %s33, 0
      %p128 = por %p126, %p127
      %s130 = sadd.s32 %s129, 1
      %p133 = scmp.eq.s32.totalorder %s27, 1
      %p134 = scmp.ne.s32.totalorder %s129, %s131
      %p135 = scmp.eq.s32.totalorder %s27, 0
      %p136 = por %p134, %p135
      %p137 = scmp.ne.s32.totalorder %s129, %s131
      %p138 = scmp.eq.s32.totalorder %s32, 1
      %p139 = por %p137, %p138
      %p140 = scmp.ne.s32.totalorder %s131, %s132
      %p141 = scmp.eq.s32.totalorder %s32, 0
      %p142 = por %p140, %p141
      %p143 = scmp.ne.s32.totalorder %s131, %s132
      %p144 = scmp.eq.s32.totalorder %s33, 1
      %p145 = por %p143, %p144
      %p147 = scmp.ne.s32.totalorder %s132, %s146
      %p148 = scmp.eq.s32.totalorder %s33, 0
      %p149 = por %p147, %p148
      %s151 = sadd.s32 %s150, 1
      %p154 = scmp.eq.s32.totalorder %s27, 1
      %p155 = scmp.ne.s32.totalorder %s150, %s152
      %p156 = scmp.eq.s32.totalorder %s27, 0
      %p157 = por %p155, %p156
      %p158 = scmp.ne.s32.totalorder %s150, %s152
      %p159 = scmp.eq.s32.totalorder %s32, 1
      %p160 = por %p158, %p159
      %p161 = scmp.ne.s32.totalorder %s152, %s153
      %p162 = scmp.eq.s32.totalorder %s32, 0
      %p163 = por %p161, %p162
      %p164 = scmp.ne.s32.totalorder %s152, %s153
      %p165 = scmp.eq.s32.totalorder %s33, 1
      %p166 = por %p164, %p165
      %p168 = scmp.ne.s32.totalorder %s153, %s167
      %p169 = scmp.eq.s32.totalorder %s33, 0
      %p170 = por %p168, %p169
      %s172 = sadd.s32 %s171, 1
      %p175 = scmp.eq.s32.totalorder %s27, 1
      %p176 = scmp.ne.s32.totalorder %s171, %s173
      %p177 = scmp.eq.s32.totalorder %s27, 0
      %p178 = por %p176, %p177
      %p179 = scmp.ne.s32.totalorder %s171, %s173
      %p180 = scmp.eq.s32.totalorder %s32, 1
      %p181 = por %p179, %p180
      %p182 = scmp.ne.s32.totalorder %s173, %s174
      %p183 = scmp.eq.s32.totalorder %s32, 0
      %p184 = por %p182, %p183
      %p185 = scmp.ne.s32.totalorder %s173, %s174
      %p186 = scmp.eq.s32.totalorder %s33, 1
      %p187 = por %p185, %p186
      %p189 = scmp.ne.s32.totalorder %s174, %s188
      %p190 = scmp.eq.s32.totalorder %s33, 0
      %p191 = por %p189, %p190
      %s193 = sadd.s32 %s192, 1
      %p196 = scmp.eq.s32.totalorder %s27, 1
      %p197 = scmp.ne.s32.totalorder %s192, %s194
      %p198 = scmp.eq.s32.totalorder %s27, 0
      %p199 = por %p197, %p198
      %p200 = scmp.ne.s32.totalorder %s192, %s194
      %p201 = scmp.eq.s32.totalorder %s32, 1
      %p202 = por %p200, %p201
      %p203 = scmp.ne.s32.totalorder %s194, %s195
      %p204 = scmp.eq.s32.totalorder %s32, 0
      %p205 = por %p203, %p204
      %p206 = scmp.ne.s32.totalorder %s194, %s195
      %p207 = scmp.eq.s32.totalorder %s33, 1
      %p208 = por %p206, %p207
      %p210 = scmp.ne.s32.totalorder %s195, %s209
      %p211 = scmp.eq.s32.totalorder %s33, 0
      %p212 = por %p210, %p211
      %s214 = sadd.s32 %s213, 1
      %p217 = scmp.eq.s32.totalorder %s27, 1
      %p218 = scmp.ne.s32.totalorder %s213, %s215
      %p219 = scmp.eq.s32.totalorder %s27, 0
      %p220 = por %p218, %p219
      %p221 = scmp.ne.s32.totalorder %s213, %s215
      %p222 = scmp.eq.s32.totalorder %s32, 1
      %p223 = por %p221, %p222
      %p224 = scmp.ne.s32.totalorder %s215, %s216
      %p225 = scmp.eq.s32.totalorder %s32, 0
      %p226 = por %p224, %p225
      %p227 = scmp.ne.s32.totalorder %s215, %s216
      %p228 = scmp.eq.s32.totalorder %s33, 1
      %p229 = por %p227, %p228
      %p231 = scmp.ne.s32.totalorder %s216, %s230
      %p232 = scmp.eq.s32.totalorder %s33, 0
      %p233 = por %p231, %p232
      %s235 = sadd.s32 %s234, 1
      %p238 = scmp.eq.s32.totalorder %s27, 1
      %p239 = scmp.ne.s32.totalorder %s234, %s236
      %p240 = scmp.eq.s32.totalorder %s27, 0
      %p241 = por %p239, %p240
      %p242 = scmp.ne.s32.totalorder %s234, %s236
      %p243 = scmp.eq.s32.totalorder %s32, 1
      %p244 = por %p242, %p243
      %p245 = scmp.ne.s32.totalorder %s236, %s237
      %p246 = scmp.eq.s32.totalorder %s32, 0
      %p247 = por %p245, %p246
      %p248 = scmp.ne.s32.totalorder %s236, %s237
      %p249 = scmp.eq.s32.totalorder %s33, 1
      %p250 = por %p248, %p249
      %p252 = scmp.ne.s32.totalorder %s237, %s251
      %p253 = scmp.eq.s32.totalorder %s33, 0
      %p254 = por %p252, %p253
      %s256 = sadd.s32 %s255, 1
      %p259 = scmp.eq.s32.totalorder %s27, 1
      %p260 = scmp.ne.s32.totalorder %s255, %s257
      %p261 = scmp.eq.s32.totalorder %s27, 0
      %p262 = por %p260, %p261
      %p263 = scmp.ne.s32.totalorder %s255, %s257
      %p264 = scmp.eq.s32.totalorder %s32, 1
      %p265 = por %p263, %p264
      %p266 = scmp.ne.s32.totalorder %s257, %s258
      %p267 = scmp.eq.s32.totalorder %s32, 0
      %p268 = por %p266, %p267
      %p269 = scmp.ne.s32.totalorder %s257, %s258
      %p270 = scmp.eq.s32.totalorder %s33, 1
      %p271 = por %p269, %p270
      %p273 = scmp.ne.s32.totalorder %s258, %s272
      %p274 = scmp.eq.s32.totalorder %s33, 0
      %p275 = por %p273, %p274
      %s277 = sadd.s32 %s276, 1
      %p280 = scmp.eq.s32.totalorder %s27, 1
      %p281 = scmp.ne.s32.totalorder %s276, %s278
      %p282 = scmp.eq.s32.totalorder %s27, 0
      %p283 = por %p281, %p282
      %p284 = scmp.ne.s32.totalorder %s276, %s278
      %p285 = scmp.eq.s32.totalorder %s32, 1
      %p286 = por %p284, %p285
      %p287 = scmp.ne.s32.totalorder %s278, %s279
      %p288 = scmp.eq.s32.totalorder %s32, 0
      %p289 = por %p287, %p288
      %p290 = scmp.ne.s32.totalorder %s278, %s279
      %p291 = scmp.eq.s32.totalorder %s33, 1
      %p292 = por %p290, %p291
      %p294 = scmp.ne.s32.totalorder %s279, %s293
      %p295 = scmp.eq.s32.totalorder %s33, 0
      %p296 = por %p294, %p295
      %s298 = sadd.s32 %s297, 1
      %p301 = scmp.eq.s32.totalorder %s27, 1
      %p302 = scmp.ne.s32.totalorder %s297, %s299
      %p303 = scmp.eq.s32.totalorder %s27, 0
      %p304 = por %p302, %p303
      %p305 = scmp.ne.s32.totalorder %s297, %s299
      %p306 = scmp.eq.s32.totalorder %s32, 1
      %p307 = por %p305, %p306
      %p308 = scmp.ne.s32.totalorder %s299, %s300
      %p309 = scmp.eq.s32.totalorder %s32, 0
      %p310 = por %p308, %p309
      %p311 = scmp.ne.s32.totalorder %s299, %s300
      %p312 = scmp.eq.s32.totalorder %s33, 1
      %p313 = por %p311, %p312
      %p315 = scmp.ne.s32.totalorder %s300, %s314
      %p316 = scmp.eq.s32.totalorder %s33, 0
      %p317 = por %p315, %p316
      %s319 = sadd.s32 %s318, 1
      %p322 = scmp.eq.s32.totalorder %s27, 1
      %p323 = scmp.ne.s32.totalorder %s318, %s320
      %p324 = scmp.eq.s32.totalorder %s27, 0
      %p325 = por %p323, %p324
      %p326 = scmp.ne.s32.totalorder %s318, %s320
      %p327 = scmp.eq.s32.totalorder %s32, 1
      %p328 = por %p326, %p327
      %p329 = scmp.ne.s32.totalorder %s320, %s321
      %p330 = scmp.eq.s32.totalorder %s32, 0
      %p331 = por %p329, %p330
      %p332 = scmp.ne.s32.totalorder %s320, %s321
      %p333 = scmp.eq.s32.totalorder %s33, 1
      %p334 = por %p332, %p333
      %p336 = scmp.ne.s32.totalorder %s321, %s335
      %p337 = scmp.eq.s32.totalorder %s33, 0
      %p338 = por %p336, %p337
      %s340 = sadd.s32 %s339, 1
      %p343 = scmp.eq.s32.totalorder %s27, 1
      %p344 = scmp.ne.s32.totalorder %s339, %s341
      %p345 = scmp.eq.s32.totalorder %s27, 0
      %p346 = por %p344, %p345
      %p347 = scmp.ne.s32.totalorder %s339, %s341
      %p348 = scmp.eq.s32.totalorder %s32, 1
      %p349 = por %p347, %p348
      %p350 = scmp.ne.s32.totalorder %s341, %s342
      %p351 = scmp.eq.s32.totalorder %s32, 0
      %p352 = por %p350, %p351
      %p353 = scmp.ne.s32.totalorder %s341, %s342
      %p354 = scmp.eq.s32.totalorder %s33, 1
      %p355 = por %p353, %p354
      %p357 = scmp.ne.s32.totalorder %s342, %s356
      %p358 = scmp.eq.s32.totalorder %s33, 0
      %p359 = por %p357, %p358
      %s361 = sadd.s32 %s360, 1
      %p364 = scmp.eq.s32.totalorder %s27, 1
      %p365 = scmp.ne.s32.totalorder %s360, %s362
      %p366 = scmp.eq.s32.totalorder %s27, 0
      %p367 = por %p365, %p366
      %p368 = scmp.ne.s32.totalorder %s360, %s362
      %p369 = scmp.eq.s32.totalorder %s32, 1
      %p370 = por %p368, %p369
      %p371 = scmp.ne.s32.totalorder %s362, %s363
      %p372 = scmp.eq.s32.totalorder %s32, 0
      %p373 = por %p371, %p372
      %p374 = scmp.ne.s32.totalorder %s362, %s363
      %p375 = scmp.eq.s32.totalorder %s33, 1
      %p376 = por %p374, %p375
      %p378 = scmp.ne.s32.totalorder %s363, %s377
      %p379 = scmp.eq.s32.totalorder %s33, 0
      %p380 = por %p378, %p379
      %s382 = sadd.s32 %s381, 1
      %p385 = scmp.eq.s32.totalorder %s27, 1
      %p386 = scmp.ne.s32.totalorder %s381, %s383
      %p387 = scmp.eq.s32.totalorder %s27, 0
      %p388 = por %p386, %p387
      %p389 = scmp.ne.s32.totalorder %s381, %s383
      %p390 = scmp.eq.s32.totalorder %s32, 1
      %p391 = por %p389, %p390
      %p392 = scmp.ne.s32.totalorder %s383, %s384
      %p393 = scmp.eq.s32.totalorder %s32, 0
      %p394 = por %p392, %p393
      %p395 = scmp.ne.s32.totalorder %s383, %s384
      %p396 = scmp.eq.s32.totalorder %s33, 1
      %p397 = por %p395, %p396
      %p399 = scmp.ne.s32.totalorder %s384, %s398
      %p400 = scmp.eq.s32.totalorder %s33, 0
      %p401 = por %p399, %p400
      %s403 = sadd.s32 %s402, 1
      %p406 = scmp.eq.s32.totalorder %s27, 1
      %p407 = scmp.ne.s32.totalorder %s402, %s404
      %p408 = scmp.eq.s32.totalorder %s27, 0
      %p409 = por %p407, %p408
      %p410 = scmp.ne.s32.totalorder %s402, %s404
      %p411 = scmp.eq.s32.totalorder %s32, 1
      %p412 = por %p410, %p411
      %p413 = scmp.ne.s32.totalorder %s404, %s405
      %p414 = scmp.eq.s32.totalorder %s32, 0
      %p415 = por %p413, %p414
      %p416 = scmp.ne.s32.totalorder %s404, %s405
      %p417 = scmp.eq.s32.totalorder %s33, 1
      %p418 = por %p416, %p417
      %p420 = scmp.ne.s32.totalorder %s405, %s419
      %p421 = scmp.eq.s32.totalorder %s33, 0
      %p422 = por %p420, %p421
      %s423 = ssub.s32 %s27, %s34
      %p424 = scmp.eq.s32.totalorder %s423, 0
      %s426 = sadd.s32 %s425, 1
      %s427 = scalar_select %p424, %s425, %s426
      %p430 = pneg %p424
      %p431 = scmp.eq.s32.totalorder %s27, 1
      %p432 = por %p430, %p431
      %p433 = scmp.ne.s32.totalorder %s425, %s428
      %p434 = scmp.eq.s32.totalorder %s27, 0
      %p435 = por %p433, %p434
      %p436 = scmp.ne.s32.totalorder %s425, %s428
      %p437 = scmp.eq.s32.totalorder %s32, 1
      %p438 = por %p436, %p437
      %p439 = scmp.ne.s32.totalorder %s428, %s429
      %p440 = scmp.eq.s32.totalorder %s32, 0
      %p441 = por %p439, %p440
      %p442 = scmp.ne.s32.totalorder %s428, %s429
      %p443 = scmp.eq.s32.totalorder %s33, 1
      %p444 = por %p442, %p443
      %p446 = scmp.ne.s32.totalorder %s429, %s445
      %p447 = scmp.eq.s32.totalorder %s33, 0
      %p448 = por %p446, %p447
      %p449 = scmp.le.s32.totalorder 1, %s27
      %p450 = scmp.lt.s32.totalorder %s27, 3
      %p451 = pnand %p449, %p450
      %p452 = pneg %p451
      // Predicated region
      $region9: #{_two_tower_forward.2} parent=5 // pred_check
        _
      $region10: #{_two_tower_forward.2} parent=5 // pred_check_branch
        %454 = sbr.rel (%p451) target = $region12
      $region11: #{_two_tower_forward.2} parent=5 // pred_region
        %s455 = ssub.s32 %s27, 1
        // Predicated region
        $region13: #{_two_tower_forward.2} parent=11 // pred_check
          %p456 = pneg %p100
        $region14: #{_two_tower_forward.2} parent=11 // pred_check_branch
          %458 = sbr.rel (%p456) target = $region16
        $region15: #{_two_tower_forward.2} parent=11 // pred_region
          _
        $region16: #{_two_tower_forward.2} parent=11 // pred_fallthru
          _
        // Predicated region
        $region17: #{_two_tower_forward.2} parent=11 // pred_check
          %p459 = pneg %p121
        $region18: #{_two_tower_forward.2} parent=11 // pred_check_branch
          %461 = sbr.rel (%p459) target = $region20
        $region19: #{_two_tower_forward.2} parent=11 // pred_region
          _
        $region20: #{_two_tower_forward.2} parent=11 // pred_fallthru
          _
        // Predicated region
        $region21: #{_two_tower_forward.2} parent=11 // pred_check
          %p462 = pneg %p142
        $region22: #{_two_tower_forward.2} parent=11 // pred_check_branch
          %464 = sbr.rel (%p462) target = $region24
        $region23: #{_two_tower_forward.2} parent=11 // pred_region
          _
        $region24: #{_two_tower_forward.2} parent=11 // pred_fallthru
          _
        // Predicated region
        $region25: #{_two_tower_forward.2} parent=11 // pred_check
          %p465 = pneg %p163
        $region26: #{_two_tower_forward.2} parent=11 // pred_check_branch
          %467 = sbr.rel (%p465) target = $region28
        $region27: #{_two_tower_forward.2} parent=11 // pred_region
          _
        $region28: #{_two_tower_forward.2} parent=11 // pred_fallthru
          _
        // Predicated region
        $region29: #{_two_tower_forward.2} parent=11 // pred_check
          %p468 = pneg %p184
        $region30: #{_two_tower_forward.2} parent=11 // pred_check_branch
          %470 = sbr.rel (%p468) target = $region32
        $region31: #{_two_tower_forward.2} parent=11 // pred_region
          _
        $region32: #{_two_tower_forward.2} parent=11 // pred_fallthru
          _
        // Predicated region
        $region33: #{_two_tower_forward.2} parent=11 // pred_check
          %p471 = pneg %p205
        $region34: #{_two_tower_forward.2} parent=11 // pred_check_branch
          %473 = sbr.rel (%p471) target = $region36
        $region35: #{_two_tower_forward.2} parent=11 // pred_region
          _
        $region36: #{_two_tower_forward.2} parent=11 // pred_fallthru
          _
        // Predicated region
        $region37: #{_two_tower_forward.2} parent=11 // pred_check
          %p474 = pneg %p226
        $region38: #{_two_tower_forward.2} parent=11 // pred_check_branch
          %476 = sbr.rel (%p474) target = $region40
        $region39: #{_two_tower_forward.2} parent=11 // pred_region
          _
        $region40: #{_two_tower_forward.2} parent=11 // pred_fallthru
          _
        // Predicated region
        $region41: #{_two_tower_forward.2} parent=11 // pred_check
          %p477 = pneg %p247
        $region42: #{_two_tower_forward.2} parent=11 // pred_check_branch
          %479 = sbr.rel (%p477) target = $region44
        $region43: #{_two_tower_forward.2} parent=11 // pred_region
          _
        $region44: #{_two_tower_forward.2} parent=11 // pred_fallthru
          _
        // Predicated region
        $region45: #{_two_tower_forward.2} parent=11 // pred_check
          %p480 = pneg %p268
        $region46: #{_two_tower_forward.2} parent=11 // pred_check_branch
          %482 = sbr.rel (%p480) target = $region48
        $region47: #{_two_tower_forward.2} parent=11 // pred_region
          _
        $region48: #{_two_tower_forward.2} parent=11 // pred_fallthru
          _
        // Predicated region
        $region49: #{_two_tower_forward.2} parent=11 // pred_check
          %p483 = pneg %p289
        $region50: #{_two_tower_forward.2} parent=11 // pred_check_branch
          %485 = sbr.rel (%p483) target = $region52
        $region51: #{_two_tower_forward.2} parent=11 // pred_region
          _
        $region52: #{_two_tower_forward.2} parent=11 // pred_fallthru
          _
        // Predicated region
        $region53: #{_two_tower_forward.2} parent=11 // pred_check
          %p486 = pneg %p310
        $region54: #{_two_tower_forward.2} parent=11 // pred_check_branch
          %488 = sbr.rel (%p486) target = $region56
        $region55: #{_two_tower_forward.2} parent=11 // pred_region
          _
        $region56: #{_two_tower_forward.2} parent=11 // pred_fallthru
          _
        // Predicated region
        $region57: #{_two_tower_forward.2} parent=11 // pred_check
          %p489 = pneg %p331
        $region58: #{_two_tower_forward.2} parent=11 // pred_check_branch
          %491 = sbr.rel (%p489) target = $region60
        $region59: #{_two_tower_forward.2} parent=11 // pred_region
          _
        $region60: #{_two_tower_forward.2} parent=11 // pred_fallthru
          _
        // Predicated region
        $region61: #{_two_tower_forward.2} parent=11 // pred_check
          %p492 = pneg %p352
        $region62: #{_two_tower_forward.2} parent=11 // pred_check_branch
          %494 = sbr.rel (%p492) target = $region64
        $region63: #{_two_tower_forward.2} parent=11 // pred_region
          _
        $region64: #{_two_tower_forward.2} parent=11 // pred_fallthru
          _
        // Predicated region
        $region65: #{_two_tower_forward.2} parent=11 // pred_check
          %p495 = pneg %p373
        $region66: #{_two_tower_forward.2} parent=11 // pred_check_branch
          %497 = sbr.rel (%p495) target = $region68
        $region67: #{_two_tower_forward.2} parent=11 // pred_region
          _
        $region68: #{_two_tower_forward.2} parent=11 // pred_fallthru
          _
        // Predicated region
        $region69: #{_two_tower_forward.2} parent=11 // pred_check
          %p498 = pneg %p394
        $region70: #{_two_tower_forward.2} parent=11 // pred_check_branch
          %500 = sbr.rel (%p498) target = $region72
        $region71: #{_two_tower_forward.2} parent=11 // pred_region
          _
        $region72: #{_two_tower_forward.2} parent=11 // pred_fallthru
          _
        // Predicated region
        $region73: #{_two_tower_forward.2} parent=11 // pred_check
          %p501 = pneg %p415
        $region74: #{_two_tower_forward.2} parent=11 // pred_check_branch
          %503 = sbr.rel (%p501) target = $region76
        $region75: #{_two_tower_forward.2} parent=11 // pred_region
          _
        $region76: #{_two_tower_forward.2} parent=11 // pred_fallthru
          _
      $region12: #{_two_tower_forward.2} parent=5 // pred_fallthru
        _
      %p504 = scmp.lt.s32.totalorder %s27, 2
      // Predicated region
      $region77: #{_two_tower_forward.2} parent=5 // pred_check
        %p505 = pneg %p504
      $region78: #{_two_tower_forward.2} parent=5 // pred_check_branch
        %507 = sbr.rel (%p505) target = $region80
      $region79: #{_two_tower_forward.2} parent=5 // pred_region
        // Predicated region
        $region81: #{_two_tower_forward.2} parent=79 // pred_check
          %p508 = pneg %p47
        $region82: #{_two_tower_forward.2} parent=79 // pred_check_branch
          %510 = sbr.rel (%p508) target = $region84
        $region83: #{_two_tower_forward.2} parent=79 // pred_region
          %p511 = scmp.lt.s32.totalorder %s27, 1
          %s512 = scalar_select %p511, %s27, 1
          %s513 = smul.addr %s512, 8
          %s514 = scalar_lea.vmem %s0, %s513
        $region84: #{_two_tower_forward.2} parent=79 // pred_fallthru
          _
        // Predicated region
        $region85: #{_two_tower_forward.2} parent=79 // pred_check
          %p515 = pneg %p73
        $region86: #{_two_tower_forward.2} parent=79 // pred_check_branch
          %517 = sbr.rel (%p515) target = $region88
        $region87: #{_two_tower_forward.2} parent=79 // pred_region
          %p518 = scmp.lt.s32.totalorder %s27, 1
          %s519 = scalar_select %p518, %s27, 1
          %s520 = scalar_lea.vmem %s1, %s519
        $region88: #{_two_tower_forward.2} parent=79 // pred_fallthru
          _
      $region80: #{_two_tower_forward.2} parent=5 // pred_fallthru
        _
      %p521 = scmp.le.s32.totalorder 1, %s27
      %p522 = scmp.lt.s32.totalorder %s27, 3
      %p523 = pnand %p521, %p522
      %p524 = pneg %p523
      // Predicated region
      $region89: #{_two_tower_forward.2} parent=5 // pred_check
        _
      $region90: #{_two_tower_forward.2} parent=5 // pred_check_branch
        %526 = sbr.rel (%p523) target = $region92
      $region91: #{_two_tower_forward.2} parent=5 // pred_region
        %s527 = ssub.s32 %s27, 1
        %p528 = scmp.lt.s32.totalorder %s32, 1
        %s529 = scalar_select %p528, %s32, 1
        %s530 = smul.addr %s529, 8
        %s531 = scalar_lea.vmem %s0, %s530
        %p532 = pneg %p53
        %p533 = pneg %p50
        %p534 = scmp.lt.s32.totalorder %s32, 1
        %s535 = scalar_select %p534, %s32, 1
        %s536 = scalar_lea.vmem %s1, %s535
        %p537 = pneg %p79
        %p538 = pneg %p76
        %p539 = pneg %p100
        %p540 = pneg %p97
        %p541 = pneg %p121
        %p542 = pneg %p118
        %p543 = pneg %p142
        %p544 = pneg %p139
        %p545 = pneg %p163
        %p546 = pneg %p160
        %p547 = pneg %p184
        %p548 = pneg %p181
        %p549 = pneg %p205
        %p550 = pneg %p202
        %p551 = pneg %p226
        %p552 = pneg %p223
        %p553 = pneg %p247
        %p554 = pneg %p244
        %p555 = pneg %p268
        %p556 = pneg %p265
        %p557 = pneg %p289
        %p558 = pneg %p286
        %p559 = pneg %p310
        %p560 = pneg %p307
        %p561 = pneg %p331
        %p562 = pneg %p328
        %p563 = pneg %p352
        %p564 = pneg %p349
        %p565 = pneg %p373
        %p566 = pneg %p370
        %p567 = pneg %p394
        %p568 = pneg %p391
        %p569 = pneg %p415
        %p570 = pneg %p412
        %p571 = pneg %p441
        %p572 = pneg %p438
        %s573 = sand.u32 %s428, 1
        %s574 = scalar_lea.sflag [#allocation3], %s573
        %s575 = sand.u32 %s428, 1
        %s576 = scalar_lea.vmem [#allocation2], %s575
        %p577 = scmp.lt.s32.totalorder %s32, 1
        %s578 = scalar_select %p577, %s32, 1
        %s579 = smul.addr %s578, 8
        %s580 = scalar_lea.vmem %s0, %s579
        %p581 = scmp.lt.s32.totalorder %s32, 1
        %s582 = scalar_select %p581, %s32, 1
        %s583 = scalar_lea.vmem %s1, %s582
        %v585 = vld [vmem:[%s580] sm:$0xff]
        %v586 = vld [vmem:[%s583] sm:$0x1]
        %v587 = vsub.f32 1.0, %v586
        %v588 = vmul.f32 %v587, -10000.0
        %v589 = vld [vmem:[%s2] sm:$0x1]
        %v590 = vld [vmem:[%s3] sm:$0x1]
        %vm591 = vcmask 261120
        %v592 = vsel %vm591, %v585, 0.0
        %593 = vadd.xlane.f32.xlu0 %v592
        %v594 = vpop.xlane.xlu0 %593
        %v595 = vrcp.pop 32.0
        %v596 = vmul.f32 %v594, %v595
        %v597 = vsub.f32 %v585, %v596
        %v598 = vmul.f32 %v597, %v597
        %v599 = vsel %vm591, %v598, 0.0
        %600 = vadd.xlane.f32.xlu0 %v599
        %v601 = vpop.xlane.xlu0 %600
        %v602 = vmul.f32 %v601, %v595
        %v603 = vadd.f32 %v602, 1e-12
        %v604 = vrsqrt.pop %v603
        %v605 = vmul.f32 %v597, %v604
        %v607 = vlaneseq
        %v608 = vshrl.u32 %v607, 7
        %v609 = vsub.s32 0, %v608
        %v610 = vrot.slane %v589, %v609
        %v612 = vmul.f32 %v605, %v610
        %v614 = vlaneseq
        %v615 = vshrl.u32 %v614, 7
        %v616 = vsub.s32 0, %v615
        %v617 = vrot.slane %v590, %v616
        %v619 = vadd.f32 %v612, %v617
        %v620 = vld [vmem:[%s4] sm:$0xf]
        %v621 = vld [vmem:[%s4 + $0x4] sm:$0xf]
        %v622 = vld [vmem:[%s4 + $0x8] sm:$0xf]
        %v623 = vld [vmem:[%s4 + $0xc] sm:$0xf]
        %v624 = vld [vmem:[%s5] sm:$0x1]
        %v625 = vpack.c.bf16 %v619, %v619
        %v627 = vlaneseq
        %v628 = vshrl.u32 %v627, 7
        %v629 = vsub.s32 0, %v628
        %v630 = vrot.slane %v624, %v629
        %v636 = vunpack.c.l.b16 %v620
        %v637 = vunpack.c.l.b16 %v621
        %v638 = vunpack.c.l.b16 %v622
        %v639 = vunpack.c.l.b16 %v623
        %v640 = vpack.c.b16 %v637, %v636
        %v641 = vpack.c.b16 %v639, %v638
        %v645 = vsel %vm591, %v625, 0
        %647 = vmatprep.subr.bf16.mxu0 0
        %648 = vmatpush1.bf16.msra.mxu0 %v640
        %649 = vmatprep.subr.bf16.mxu0 0
        %650 = vmatpush1.bf16.msra.mxu0 %v641
        %651 = vmatprep.subr.bf16.mxu0 0
        %652 = vmatpush1.bf16.msra.mxu0 0
        %653 = vmatprep.subr.bf16.mxu0 0
        %654 = vmatpush1.bf16.msra.mxu0 0
        %655 = vmatprep.subr.bf16.mxu0 0
        %656 = vmatpush1.bf16.msra.mxu0 0
        %657 = vmatprep.subr.bf16.mxu0 0
        %658 = vmatpush1.bf16.msra.mxu0 0
        %659 = vmatprep.subr.bf16.mxu0 0
        %660 = vmatpush1.bf16.msra.mxu0 0
        %661 = vmatprep.subr.bf16.mxu0 0
        %662 = vmatpush1.bf16.msra.mxu0 0
        %663 = vmatprep.subr.bf16.mxu0 0
        %664 = vmatpush1.bf16.msra.mxu0 0
        %665 = vmatprep.subr.bf16.mxu0 0
        %666 = vmatpush1.bf16.msra.mxu0 0
        %667 = vmatprep.subr.bf16.mxu0 0
        %668 = vmatpush1.bf16.msra.mxu0 0
        %669 = vmatprep.subr.bf16.mxu0 0
        %670 = vmatpush1.bf16.msra.mxu0 0
        %671 = vmatprep.subr.bf16.mxu0 0
        %672 = vmatpush1.bf16.msra.mxu0 0
        %673 = vmatprep.subr.bf16.mxu0 0
        %674 = vmatpush1.bf16.msra.mxu0 0
        %675 = vmatprep.subr.bf16.mxu0 0
        %676 = vmatpush1.bf16.msra.mxu0 0
        %677 = vmatprep.subr.bf16.mxu0 0
        %678 = vmatpush1.bf16.msra.mxu0 0
        %679 = vmatprep.mubr.bf16.mxu0 0
        %680 = vmatmul.mubr.bf16.gmra.mrb[0].mxu0 %v645
        %v681 = vpop.f32.mrb[0].mxu0
        %v682 = vadd.f32 %v630, %v681
        %v683 = vpop.f32.mrb[0].mxu0
        %v684 = vpop.f32.mrb[0].mxu0
        %v685 = vpop.f32.mrb[0].mxu0
        %686 = vdwg.mxu0
        %v687 = vpack.c.bf16 %v682, %v682
        %689 = vrot.lane.b32.xlu0 %v687, 96
        %v690 = vpop.permute.xlu0 %689
        %vm691 = vcmask 64512
        %v693 = vsel %vm691, %v687, 0
        %v696 = vsel %vm691, %v690, 0
        %698 = vmatprep.subr.bf16.mxu0 0
        %699 = vmatpush1.bf16.xpose.msra.mxu0 %v696
        %700 = vmatprep.subr.bf16.mxu0 0
        %701 = vmatpush1.bf16.xpose.msra.mxu0 0
        %702 = vmatprep.subr.bf16.mxu0 0
        %703 = vmatpush1.bf16.xpose.msra.mxu0 0
        %704 = vmatprep.subr.bf16.mxu0 0
        %705 = vmatpush1.bf16.xpose.msra.mxu0 0
        %706 = vmatprep.subr.bf16.mxu0 0
        %707 = vmatpush1.bf16.xpose.msra.mxu0 0
        %708 = vmatprep.subr.bf16.mxu0 0
        %709 = vmatpush1.bf16.xpose.msra.mxu0 0
        %710 = vmatprep.subr.bf16.mxu0 0
        %711 = vmatpush1.bf16.xpose.msra.mxu0 0
        %712 = vmatprep.subr.bf16.mxu0 0
        %713 = vmatpush1.bf16.xpose.msra.mxu0 0
        %714 = vmatprep.subr.bf16.mxu0 0
        %715 = vmatpush1.bf16.xpose.msra.mxu0 0
        %716 = vmatprep.subr.bf16.mxu0 0
        %717 = vmatpush1.bf16.xpose.msra.mxu0 0
        %718 = vmatprep.subr.bf16.mxu0 0
        %719 = vmatpush1.bf16.xpose.msra.mxu0 0
        %720 = vmatprep.subr.bf16.mxu0 0
        %721 = vmatpush1.bf16.xpose.msra.mxu0 0
        %722 = vmatprep.subr.bf16.mxu0 0
        %723 = vmatpush1.bf16.xpose.msra.mxu0 0
        %724 = vmatprep.subr.bf16.mxu0 0
        %725 = vmatpush1.bf16.xpose.msra.mxu0 0
        %726 = vmatprep.subr.bf16.mxu0 0
        %727 = vmatpush1.bf16.xpose.msra.mxu0 0
        %728 = vmatprep.subr.bf16.mxu0 0
        %729 = vmatpush1.bf16.xpose.msra.mxu0 0
        %730 = vmatprep.mubr.bf16.mxu0 0
        %731 = vmatmul.mubr.bf16.gmra.mrb[0].mxu0 %v693
        %v732 = vpop.f32.mrb[0].mxu0
        %v733 = vadd.f32 0.0, %v732
        %v734 = vpop.f32.mrb[0].mxu0
        %v735 = vpop.f32.mrb[0].mxu0
        %v736 = vpop.f32.mrb[0].mxu0
        %737 = vdwg.mxu0
        %v738 = vmul.f32 %v733, 0.35355338
        %v740 = vlaneseq
        %v741 = vshrl.u32 %v740, 7
        %v742 = vsub.s32 0, %v741
        %v743 = vrot.slane %v588, %v742
        %v745 = vadd.f32 %v738, %v743
        %v746 = vsel %vm691, %v745, -inf
        %747 = vmax.xlane.f32.xlu0 %v746
        %v748 = vpop.xlane.xlu0 %747
        %v749 = vsub.f32 %v745, %v748
        %v750 = vmul.f32 %v749, 1.442695
        %v751 = vpow.pop %v750
        %v752 = vsel %vm691, %v751, 0.0
        %753 = vadd.xlane.f32.xlu0 %v752
        %v754 = vpop.xlane.xlu0 %753
        %v755 = vrcp.pop %v754
        %v756 = vmul.f32 %v751, %v755
        %v757 = vpack.c.bf16 %v756, %v756
        %758 = vrot.lane.b32.xlu0 %v687, 64
        %v759 = vpop.permute.xlu0 %758
        %v761 = vsel %vm691, %v757, 0
        %vm763 = vcmask 1043456
        %v765 = vsel %vm763, %v759, 0
        %767 = vmatprep.subr.bf16.mxu0 0
        %768 = vmatpush1.bf16.msra.mxu0 %v765
        %769 = vmatprep.subr.bf16.mxu0 0
        %770 = vmatpush1.bf16.msra.mxu0 0
        %771 = vmatprep.subr.bf16.mxu0 0
        %772 = vmatpush1.bf16.msra.mxu0 0
        %773 = vmatprep.subr.bf16.mxu0 0
        %774 = vmatpush1.bf16.msra.mxu0 0
        %775 = vmatprep.subr.bf16.mxu0 0
        %776 = vmatpush1.bf16.msra.mxu0 0
        %777 = vmatprep.subr.bf16.mxu0 0
        %778 = vmatpush1.bf16.msra.mxu0 0
        %779 = vmatprep.subr.bf16.mxu0 0
        %780 = vmatpush1.bf16.msra.mxu0 0
        %781 = vmatprep.subr.bf16.mxu0 0
        %782 = vmatpush1.bf16.msra.mxu0 0
        %783 = vmatprep.subr.bf16.mxu0 0
        %784 = vmatpush1.bf16.msra.mxu0 0
        %785 = vmatprep.subr.bf16.mxu0 0
        %786 = vmatpush1.bf16.msra.mxu0 0
        %787 = vmatprep.subr.bf16.mxu0 0
        %788 = vmatpush1.bf16.msra.mxu0 0
        %789 = vmatprep.subr.bf16.mxu0 0
        %790 = vmatpush1.bf16.msra.mxu0 0
        %791 = vmatprep.subr.bf16.mxu0 0
        %792 = vmatpush1.bf16.msra.mxu0 0
        %793 = vmatprep.subr.bf16.mxu0 0
        %794 = vmatpush1.bf16.msra.mxu0 0
        %795 = vmatprep.subr.bf16.mxu0 0
        %796 = vmatpush1.bf16.msra.mxu0 0
        %797 = vmatprep.subr.bf16.mxu0 0
        %798 = vmatpush1.bf16.msra.mxu0 0
        %799 = vmatprep.mubr.bf16.mxu0 0
        %800 = vmatmul.mubr.bf16.gmra.mrb[0].mxu0 %v761
        %v801 = vpop.f32.mrb[0].mxu0
        %v802 = vadd.f32 0.0, %v801
        %v803 = vpop.f32.mrb[0].mxu0
        %v804 = vpop.f32.mrb[0].mxu0
        %v805 = vpop.f32.mrb[0].mxu0
        %806 = vdwg.mxu0
        %807 = vrot.lane.b32.xlu0 %v687, 120
        %v808 = vpop.permute.xlu0 %807
        %809 = vrot.lane.b32.xlu0 %v687, 88
        %v810 = vpop.permute.xlu0 %809
        %v812 = vsel %vm691, %v808, 0
        %v815 = vsel %vm691, %v810, 0
        %817 = vmatprep.subr.bf16.mxu0 0
        %818 = vmatpush1.bf16.xpose.msra.mxu0 %v815
        %819 = vmatprep.subr.bf16.mxu0 0
        %820 = vmatpush1.bf16.xpose.msra.mxu0 0
        %821 = vmatprep.subr.bf16.mxu0 0
        %822 = vmatpush1.bf16.xpose.msra.mxu0 0
        %823 = vmatprep.subr.bf16.mxu0 0
        %824 = vmatpush1.bf16.xpose.msra.mxu0 0
        %825 = vmatprep.subr.bf16.mxu0 0
        %826 = vmatpush1.bf16.xpose.msra.mxu0 0
        %827 = vmatprep.subr.bf16.mxu0 0
        %828 = vmatpush1.bf16.xpose.msra.mxu0 0
        %829 = vmatprep.subr.bf16.mxu0 0
        %830 = vmatpush1.bf16.xpose.msra.mxu0 0
        %831 = vmatprep.subr.bf16.mxu0 0
        %832 = vmatpush1.bf16.xpose.msra.mxu0 0
        %833 = vmatprep.subr.bf16.mxu0 0
        %834 = vmatpush1.bf16.xpose.msra.mxu0 0
        %835 = vmatprep.subr.bf16.mxu0 0
        %836 = vmatpush1.bf16.xpose.msra.mxu0 0
        %837 = vmatprep.subr.bf16.mxu0 0
        %838 = vmatpush1.bf16.xpose.msra.mxu0 0
        %839 = vmatprep.subr.bf16.mxu0 0
        %840 = vmatpush1.bf16.xpose.msra.mxu0 0
        %841 = vmatprep.subr.bf16.mxu0 0
        %842 = vmatpush1.bf16.xpose.msra.mxu0 0
        %843 = vmatprep.subr.bf16.mxu0 0
        %844 = vmatpush1.bf16.xpose.msra.mxu0 0
        %845 = vmatprep.subr.bf16.mxu0 0
        %846 = vmatpush1.bf16.xpose.msra.mxu0 0
        %847 = vmatprep.subr.bf16.mxu0 0
        %848 = vmatpush1.bf16.xpose.msra.mxu0 0
        %849 = vmatprep.mubr.bf16.mxu0 0
        %850 = vmatmul.mubr.bf16.gmra.mrb[0].mxu0 %v812
        %v851 = vpop.f32.mrb[0].mxu0
        %v852 = vadd.f32 0.0, %v851
        %v853 = vpop.f32.mrb[0].mxu0
        %v854 = vpop.f32.mrb[0].mxu0
        %v855 = vpop.f32.mrb[0].mxu0
        %856 = vdwg.mxu0
        %v857 = vmul.f32 %v852, 0.35355338
        %v858 = vadd.f32 %v857, %v743
        %v859 = vsel %vm691, %v858, -inf
        %860 = vmax.xlane.f32.xlu0 %v859
        %v861 = vpop.xlane.xlu0 %860
        %v862 = vsub.f32 %v858, %v861
        %v863 = vmul.f32 %v862, 1.442695
        %v864 = vpow.pop %v863
        %v865 = vsel %vm691, %v864, 0.0
        %866 = vadd.xlane.f32.xlu0 %v865
        %v867 = vpop.xlane.xlu0 %866
        %v868 = vrcp.pop %v867
        %v869 = vmul.f32 %v864, %v868
        %v870 = vpack.c.bf16 %v869, %v869
        %871 = vrot.lane.b32.xlu0 %v687, 56
        %v872 = vpop.permute.xlu0 %871
        %v874 = vsel %vm691, %v870, 0
        %v877 = vsel %vm763, %v872, 0
        %879 = vmatprep.subr.bf16.mxu0 0
        %880 = vmatpush1.bf16.msra.mxu0 %v877
        %881 = vmatprep.subr.bf16.mxu0 0
        %882 = vmatpush1.bf16.msra.mxu0 0
        %883 = vmatprep.subr.bf16.mxu0 0
        %884 = vmatpush1.bf16.msra.mxu0 0
        %885 = vmatprep.subr.bf16.mxu0 0
        %886 = vmatpush1.bf16.msra.mxu0 0
        %887 = vmatprep.subr.bf16.mxu0 0
        %888 = vmatpush1.bf16.msra.mxu0 0
        %889 = vmatprep.subr.bf16.mxu0 0
        %890 = vmatpush1.bf16.msra.mxu0 0
        %891 = vmatprep.subr.bf16.mxu0 0
        %892 = vmatpush1.bf16.msra.mxu0 0
        %893 = vmatprep.subr.bf16.mxu0 0
        %894 = vmatpush1.bf16.msra.mxu0 0
        %895 = vmatprep.subr.bf16.mxu0 0
        %896 = vmatpush1.bf16.msra.mxu0 0
        %897 = vmatprep.subr.bf16.mxu0 0
        %898 = vmatpush1.bf16.msra.mxu0 0
        %899 = vmatprep.subr.bf16.mxu0 0
        %900 = vmatpush1.bf16.msra.mxu0 0
        %901 = vmatprep.subr.bf16.mxu0 0
        %902 = vmatpush1.bf16.msra.mxu0 0
        %903 = vmatprep.subr.bf16.mxu0 0
        %904 = vmatpush1.bf16.msra.mxu0 0
        %905 = vmatprep.subr.bf16.mxu0 0
        %906 = vmatpush1.bf16.msra.mxu0 0
        %907 = vmatprep.subr.bf16.mxu0 0
        %908 = vmatpush1.bf16.msra.mxu0 0
        %909 = vmatprep.subr.bf16.mxu0 0
        %910 = vmatpush1.bf16.msra.mxu0 0
        %911 = vmatprep.mubr.bf16.mxu0 0
        %912 = vmatmul.mubr.bf16.gmra.mrb[0].mxu0 %v874
        %v913 = vpop.f32.mrb[0].mxu0
        %v914 = vadd.f32 0.0, %v913
        %v915 = vpop.f32.mrb[0].mxu0
        %v916 = vpop.f32.mrb[0].mxu0
        %v917 = vpop.f32.mrb[0].mxu0
        %918 = vdwg.mxu0
        %919 = vrot.lane.b32.xlu0 %v687, 112
        %v920 = vpop.permute.xlu0 %919
        %921 = vrot.lane.b32.xlu0 %v687, 80
        %v922 = vpop.permute.xlu0 %921
        %v924 = vsel %vm691, %v920, 0
        %v927 = vsel %vm691, %v922, 0
        %929 = vmatprep.subr.bf16.mxu0 0
        %930 = vmatpush1.bf16.xpose.msra.mxu0 %v927
        %931 = vmatprep.subr.bf16.mxu0 0
        %932 = vmatpush1.bf16.xpose.msra.mxu0 0
        %933 = vmatprep.subr.bf16.mxu0 0
        %934 = vmatpush1.bf16.xpose.msra.mxu0 0
        %935 = vmatprep.subr.bf16.mxu0 0
        %936 = vmatpush1.bf16.xpose.msra.mxu0 0
        %937 = vmatprep.subr.bf16.mxu0 0
        %938 = vmatpush1.bf16.xpose.msra.mxu0 0
        %939 = vmatprep.subr.bf16.mxu0 0
        %940 = vmatpush1.bf16.xpose.msra.mxu0 0
        %941 = vmatprep.subr.bf16.mxu0 0
        %942 = vmatpush1.bf16.xpose.msra.mxu0 0
        %943 = vmatprep.subr.bf16.mxu0 0
        %944 = vmatpush1.bf16.xpose.msra.mxu0 0
        %945 = vmatprep.subr.bf16.mxu0 0
        %946 = vmatpush1.bf16.xpose.msra.mxu0 0
        %947 = vmatprep.subr.bf16.mxu0 0
        %948 = vmatpush1.bf16.xpose.msra.mxu0 0
        %949 = vmatprep.subr.bf16.mxu0 0
        %950 = vmatpush1.bf16.xpose.msra.mxu0 0
        %951 = vmatprep.subr.bf16.mxu0 0
        %952 = vmatpush1.bf16.xpose.msra.mxu0 0
        %953 = vmatprep.subr.bf16.mxu0 0
        %954 = vmatpush1.bf16.xpose.msra.mxu0 0
        %955 = vmatprep.subr.bf16.mxu0 0
        %956 = vmatpush1.bf16.xpose.msra.mxu0 0
        %957 = vmatprep.subr.bf16.mxu0 0
        %958 = vmatpush1.bf16.xpose.msra.mxu0 0
        %959 = vmatprep.subr.bf16.mxu0 0
        %960 = vmatpush1.bf16.xpose.msra.mxu0 0
        %961 = vmatprep.mubr.bf16.mxu0 0
        %962 = vmatmul.mubr.bf16.gmra.mrb[0].mxu0 %v924
        %v963 = vpop.f32.mrb[0].mxu0
        %v964 = vadd.f32 0.0, %v963
        %v965 = vpop.f32.mrb[0].mxu0
        %v966 = vpop.f32.mrb[0].mxu0
        %v967 = vpop.f32.mrb[0].mxu0
        %968 = vdwg.mxu0
        %v969 = vmul.f32 %v964, 0.35355338
        %v970 = vadd.f32 %v969, %v743
        %v971 = vsel %vm691, %v970, -inf
        %972 = vmax.xlane.f32.xlu0 %v971
        %v973 = vpop.xlane.xlu0 %972
        %v974 = vsub.f32 %v970, %v973
        %v975 = vmul.f32 %v974, 1.442695
        %v976 = vpow.pop %v975
        %v977 = vsel %vm691, %v976, 0.0
        %978 = vadd.xlane.f32.xlu0 %v977
        %v979 = vpop.xlane.xlu0 %978
        %v980 = vrcp.pop %v979
        %v981 = vmul.f32 %v976, %v980
        %v982 = vpack.c.bf16 %v981, %v981
        %983 = vrot.lane.b32.xlu0 %v687, 48
        %v984 = vpop.permute.xlu0 %983
        %v986 = vsel %vm691, %v982, 0
        %v989 = vsel %vm763, %v984, 0
        %991 = vmatprep.subr.bf16.mxu0 0
        %992 = vmatpush1.bf16.msra.mxu0 %v989
        %993 = vmatprep.subr.bf16.mxu0 0
        %994 = vmatpush1.bf16.msra.mxu0 0
        %995 = vmatprep.subr.bf16.mxu0 0
        %996 = vmatpush1.bf16.msra.mxu0 0
        %997 = vmatprep.subr.bf16.mxu0 0
        %998 = vmatpush1.bf16.msra.mxu0 0
        %999 = vmatprep.subr.bf16.mxu0 0
        %1000 = vmatpush1.bf16.msra.mxu0 0
        %1001 = vmatprep.subr.bf16.mxu0 0
        %1002 = vmatpush1.bf16.msra.mxu0 0
        %1003 = vmatprep.subr.bf16.mxu0 0
        %1004 = vmatpush1.bf16.msra.mxu0 0
        %1005 = vmatprep.subr.bf16.mxu0 0
        %1006 = vmatpush1.bf16.msra.mxu0 0
        %1007 = vmatprep.subr.bf16.mxu0 0
        %1008 = vmatpush1.bf16.msra.mxu0 0
        %1009 = vmatprep.subr.bf16.mxu0 0
        %1010 = vmatpush1.bf16.msra.mxu0 0
        %1011 = vmatprep.subr.bf16.mxu0 0
        %1012 = vmatpush1.bf16.msra.mxu0 0
        %1013 = vmatprep.subr.bf16.mxu0 0
        %1014 = vmatpush1.bf16.msra.mxu0 0
        %1015 = vmatprep.subr.bf16.mxu0 0
        %1016 = vmatpush1.bf16.msra.mxu0 0
        %1017 = vmatprep.subr.bf16.mxu0 0
        %1018 = vmatpush1.bf16.msra.mxu0 0
        %1019 = vmatprep.subr.bf16.mxu0 0
        %1020 = vmatpush1.bf16.msra.mxu0 0
        %1021 = vmatprep.subr.bf16.mxu0 0
        %1022 = vmatpush1.bf16.msra.mxu0 0
        %1023 = vmatprep.mubr.bf16.mxu0 0
        %1024 = vmatmul.mubr.bf16.gmra.mrb[0].mxu0 %v986
        %v1025 = vpop.f32.mrb[0].mxu0
        %v1026 = vadd.f32 0.0, %v1025
        %v1027 = vpop.f32.mrb[0].mxu0
        %v1028 = vpop.f32.mrb[0].mxu0
        %v1029 = vpop.f32.mrb[0].mxu0
        %1030 = vdwg.mxu0
        %1031 = vrot.lane.b32.xlu0 %v687, 104
        %v1032 = vpop.permute.xlu0 %1031
        %1033 = vrot.lane.b32.xlu0 %v687, 72
        %v1034 = vpop.permute.xlu0 %1033
        %v1036 = vsel %vm691, %v1032, 0
        %v1039 = vsel %vm691, %v1034, 0
        %1041 = vmatprep.subr.bf16.mxu0 0
        %1042 = vmatpush1.bf16.xpose.msra.mxu0 %v1039
        %1043 = vmatprep.subr.bf16.mxu0 0
        %1044 = vmatpush1.bf16.xpose.msra.mxu0 0
        %1045 = vmatprep.subr.bf16.mxu0 0
        %1046 = vmatpush1.bf16.xpose.msra.mxu0 0
        %1047 = vmatprep.subr.bf16.mxu0 0
        %1048 = vmatpush1.bf16.xpose.msra.mxu0 0
        %1049 = vmatprep.subr.bf16.mxu0 0
        %1050 = vmatpush1.bf16.xpose.msra.mxu0 0
        %1051 = vmatprep.subr.bf16.mxu0 0
        %1052 = vmatpush1.bf16.xpose.msra.mxu0 0
        %1053 = vmatprep.subr.bf16.mxu0 0
        %1054 = vmatpush1.bf16.xpose.msra.mxu0 0
        %1055 = vmatprep.subr.bf16.mxu0 0
        %1056 = vmatpush1.bf16.xpose.msra.mxu0 0
        %1057 = vmatprep.subr.bf16.mxu0 0
        %1058 = vmatpush1.bf16.xpose.msra.mxu0 0
        %1059 = vmatprep.subr.bf16.mxu0 0
        %1060 = vmatpush1.bf16.xpose.msra.mxu0 0
        %1061 = vmatprep.subr.bf16.mxu0 0
        %1062 = vmatpush1.bf16.xpose.msra.mxu0 0
        %1063 = vmatprep.subr.bf16.mxu0 0
        %1064 = vmatpush1.bf16.xpose.msra.mxu0 0
        %1065 = vmatprep.subr.bf16.mxu0 0
        %1066 = vmatpush1.bf16.xpose.msra.mxu0 0
        %1067 = vmatprep.subr.bf16.mxu0 0
        %1068 = vmatpush1.bf16.xpose.msra.mxu0 0
        %1069 = vmatprep.subr.bf16.mxu0 0
        %1070 = vmatpush1.bf16.xpose.msra.mxu0 0
        %1071 = vmatprep.subr.bf16.mxu0 0
        %1072 = vmatpush1.bf16.xpose.msra.mxu0 0
        %1073 = vmatprep.mubr.bf16.mxu0 0
        %1074 = vmatmul.mubr.bf16.gmra.mrb[0].mxu0 %v1036
        %v1075 = vpop.f32.mrb[0].mxu0
        %v1076 = vadd.f32 0.0, %v1075
        %v1077 = vpop.f32.mrb[0].mxu0
        %v1078 = vpop.f32.mrb[0].mxu0
        %v1079 = vpop.f32.mrb[0].mxu0
        %1080 = vdwg.mxu0
        %v1081 = vmul.f32 %v1076, 0.35355338
        %v1082 = vadd.f32 %v1081, %v743
        %v1083 = vsel %vm691, %v1082, -inf
        %1084 = vmax.xlane.f32.xlu0 %v1083
        %v1085 = vpop.xlane.xlu0 %1084
        %v1086 = vsub.f32 %v1082, %v1085
        %v1087 = vmul.f32 %v1086, 1.442695
        %v1088 = vpow.pop %v1087
        %v1089 = vsel %vm691, %v1088, 0.0
        %1090 = vadd.xlane.f32.xlu0 %v1089
        %v1091 = vpop.xlane.xlu0 %1090
        %v1092 = vrcp.pop %v1091
        %v1093 = vmul.f32 %v1088, %v1092
        %v1094 = vpack.c.bf16 %v1093, %v1093
        %1095 = vrot.lane.b32.xlu0 %v687, 40
        %v1096 = vpop.permute.xlu0 %1095
        %v1098 = vsel %vm691, %v1094, 0
        %v1101 = vsel %vm763, %v1096, 0
        %1103 = vmatprep.subr.bf16.mxu0 0
        %1104 = vmatpush1.bf16.msra.mxu0 %v1101
        %1105 = vmatprep.subr.bf16.mxu0 0
        %1106 = vmatpush1.bf16.msra.mxu0 0
        %1107 = vmatprep.subr.bf16.mxu0 0
        %1108 = vmatpush1.bf16.msra.mxu0 0
        %1109 = vmatprep.subr.bf16.mxu0 0
        %1110 = vmatpush1.bf16.msra.mxu0 0
        %1111 = vmatprep.subr.bf16.mxu0 0
        %1112 = vmatpush1.bf16.msra.mxu0 0
        %1113 = vmatprep.subr.bf16.mxu0 0
        %1114 = vmatpush1.bf16.msra.mxu0 0
        %1115 = vmatprep.subr.bf16.mxu0 0
        %1116 = vmatpush1.bf16.msra.mxu0 0
        %1117 = vmatprep.subr.bf16.mxu0 0
        %1118 = vmatpush1.bf16.msra.mxu0 0
        %1119 = vmatprep.subr.bf16.mxu0 0
        %1120 = vmatpush1.bf16.msra.mxu0 0
        %1121 = vmatprep.subr.bf16.mxu0 0
        %1122 = vmatpush1.bf16.msra.mxu0 0
        %1123 = vmatprep.subr.bf16.mxu0 0
        %1124 = vmatpush1.bf16.msra.mxu0 0
        %1125 = vmatprep.subr.bf16.mxu0 0
        %1126 = vmatpush1.bf16.msra.mxu0 0
        %1127 = vmatprep.subr.bf16.mxu0 0
        %1128 = vmatpush1.bf16.msra.mxu0 0
        %1129 = vmatprep.subr.bf16.mxu0 0
        %1130 = vmatpush1.bf16.msra.mxu0 0
        %1131 = vmatprep.subr.bf16.mxu0 0
        %1132 = vmatpush1.bf16.msra.mxu0 0
        %1133 = vmatprep.subr.bf16.mxu0 0
        %1134 = vmatpush1.bf16.msra.mxu0 0
        %1135 = vmatprep.mubr.bf16.mxu0 0
        %1136 = vmatmul.mubr.bf16.gmra.mrb[0].mxu0 %v1098
        %v1137 = vpop.f32.mrb[0].mxu0
        %v1138 = vadd.f32 0.0, %v1137
        %v1139 = vpop.f32.mrb[0].mxu0
        %v1140 = vpop.f32.mrb[0].mxu0
        %v1141 = vpop.f32.mrb[0].mxu0
        %1142 = vdwg.mxu0
        %1144 = vrot.lane.b32.xlu0 %v914, 8
        %v1145 = vpop.permute.xlu0 %1144
        %1148 = vrot.lane.b32.xlu0 %v1026, 16
        %v1149 = vpop.permute.xlu0 %1148
        %1152 = vrot.lane.b32.xlu0 %v1138, 24
        %v1153 = vpop.permute.xlu0 %1152
        %v1155 = vsel %vm691, %v802, %v1145
        %vm1156 = vcmask 130048
        %v1157 = vsel %vm1156, %v1155, %v1149
        %vm1158 = vcmask 195584
        %v1159 = vsel %vm1158, %v1157, %v1153
        %v1160 = vld [vmem:[%s6] sm:$0xf]
        %v1161 = vld [vmem:[%s6 + $0x4] sm:$0xf]
        %v1162 = vld [vmem:[%s6 + $0x8] sm:$0xf]
        %v1163 = vld [vmem:[%s6 + $0xc] sm:$0xf]
        %v1164 = vld [vmem:[%s7] sm:$0x1]
        %v1165 = vpack.c.bf16 %v1159, %v1159
        %v1167 = vlaneseq
        %v1168 = vshrl.u32 %v1167, 7
        %v1169 = vsub.s32 0, %v1168
        %v1170 = vrot.slane %v1164, %v1169
        %v1176 = vunpack.c.l.b16 %v1160
        %v1177 = vunpack.c.l.b16 %v1161
        %v1178 = vunpack.c.l.b16 %v1162
        %v1179 = vunpack.c.l.b16 %v1163
        %v1180 = vpack.c.b16 %v1177, %v1176
        %v1181 = vpack.c.b16 %v1179, %v1178
        %v1185 = vsel %vm591, %v1165, 0
        %1187 = vmatprep.subr.bf16.mxu0 0
        %1188 = vmatpush1.bf16.msra.mxu0 %v1180
        %1189 = vmatprep.subr.bf16.mxu0 0
        %1190 = vmatpush1.bf16.msra.mxu0 %v1181
        %1191 = vmatprep.subr.bf16.mxu0 0
        %1192 = vmatpush1.bf16.msra.mxu0 0
        %1193 = vmatprep.subr.bf16.mxu0 0
        %1194 = vmatpush1.bf16.msra.mxu0 0
        %1195 = vmatprep.subr.bf16.mxu0 0
        %1196 = vmatpush1.bf16.msra.mxu0 0
        %1197 = vmatprep.subr.bf16.mxu0 0
        %1198 = vmatpush1.bf16.msra.mxu0 0
        %1199 = vmatprep.subr.bf16.mxu0 0
        %1200 = vmatpush1.bf16.msra.mxu0 0
        %1201 = vmatprep.subr.bf16.mxu0 0
        %1202 = vmatpush1.bf16.msra.mxu0 0
        %1203 = vmatprep.subr.bf16.mxu0 0
        %1204 = vmatpush1.bf16.msra.mxu0 0
        %1205 = vmatprep.subr.bf16.mxu0 0
        %1206 = vmatpush1.bf16.msra.mxu0 0
        %1207 = vmatprep.subr.bf16.mxu0 0
        %1208 = vmatpush1.bf16.msra.mxu0 0
        %1209 = vmatprep.subr.bf16.mxu0 0
        %1210 = vmatpush1.bf16.msra.mxu0 0
        %1211 = vmatprep.subr.bf16.mxu0 0
        %1212 = vmatpush1.bf16.msra.mxu0 0
        %1213 = vmatprep.subr.bf16.mxu0 0
        %1214 = vmatpush1.bf16.msra.mxu0 0
        %1215 = vmatprep.subr.bf16.mxu0 0
        %1216 = vmatpush1.bf16.msra.mxu0 0
        %1217 = vmatprep.subr.bf16.mxu0 0
        %1218 = vmatpush1.bf16.msra.mxu0 0
        %1219 = vmatprep.mubr.bf16.mxu0 0
        %1220 = vmatmul.mubr.bf16.gmra.mrb[0].mxu0 %v1185
        %v1221 = vpop.f32.mrb[0].mxu0
        %v1222 = vadd.f32 %v1170, %v1221
        %v1223 = vpop.f32.mrb[0].mxu0
        %v1224 = vpop.f32.mrb[0].mxu0
        %v1225 = vpop.f32.mrb[0].mxu0
        %1226 = vdwg.mxu0
        %v1227 = vadd.f32 %v1222, %v619
        %v1228 = vld [vmem:[%s8] sm:$0x1]
        %v1229 = vld [vmem:[%s9] sm:$0x1]
        %v1230 = vsel %vm591, %v1227, 0.0
        %1231 = vadd.xlane.f32.xlu0 %v1230
        %v1232 = vpop.xlane.xlu0 %1231
        %v1233 = vmul.f32 %v1232, %v595
        %v1234 = vsub.f32 %v1227, %v1233
        %v1235 = vmul.f32 %v1234, %v1234
        %v1236 = vsel %vm591, %v1235, 0.0
        %1237 = vadd.xlane.f32.xlu0 %v1236
        %v1238 = vpop.xlane.xlu0 %1237
        %v1239 = vmul.f32 %v1238, %v595
        %v1240 = vadd.f32 %v1239, 1e-12
        %v1241 = vrsqrt.pop %v1240
        %v1242 = vmul.f32 %v1234, %v1241
        %v1244 = vlaneseq
        %v1245 = vshrl.u32 %v1244, 7
        %v1246 = vsub.s32 0, %v1245
        %v1247 = vrot.slane %v1228, %v1246
        %v1249 = vmul.f32 %v1242, %v1247
        %v1251 = vlaneseq
        %v1252 = vshrl.u32 %v1251, 7
        %v1253 = vsub.s32 0, %v1252
        %v1254 = vrot.slane %v1229, %v1253
        %v1256 = vadd.f32 %v1249, %v1254
        %v1257 = vld [vmem:[%s10] sm:$0xf]
        %v1258 = vld [vmem:[%s10 + $0x4] sm:$0xf]
        %v1259 = vld [vmem:[%s10 + $0x8] sm:$0xf]
        %v1260 = vld [vmem:[%s10 + $0xc] sm:$0xf]
        %v1261 = vld [vmem:[%s11] sm:$0x1]
        %v1262 = vpack.c.bf16 %v1256, %v1256
        %v1264 = vlaneseq
        %v1265 = vshrl.u32 %v1264, 7
        %v1266 = vsub.s32 0, %v1265
        %v1267 = vrot.slane %v1261, %v1266
        %v1273 = vunpack.c.l.b16 %v1257
        %v1274 = vunpack.c.l.b16 %v1258
        %v1275 = vunpack.c.l.b16 %v1259
        %v1276 = vunpack.c.l.b16 %v1260
        %v1277 = vpack.c.b16 %v1274, %v1273
        %v1278 = vpack.c.b16 %v1276, %v1275
        %v1282 = vsel %vm591, %v1262, 0
        %1284 = vmatprep.subr.bf16.mxu0 0
        %1285 = vmatpush1.bf16.msra.mxu0 %v1277
        %1286 = vmatprep.subr.bf16.mxu0 0
        %1287 = vmatpush1.bf16.msra.mxu0 %v1278
        %1288 = vmatprep.subr.bf16.mxu0 0
        %1289 = vmatpush1.bf16.msra.mxu0 0
        %1290 = vmatprep.subr.bf16.mxu0 0
        %1291 = vmatpush1.bf16.msra.mxu0 0
        %1292 = vmatprep.subr.bf16.mxu0 0
        %1293 = vmatpush1.bf16.msra.mxu0 0
        %1294 = vmatprep.subr.bf16.mxu0 0
        %1295 = vmatpush1.bf16.msra.mxu0 0
        %1296 = vmatprep.subr.bf16.mxu0 0
        %1297 = vmatpush1.bf16.msra.mxu0 0
        %1298 = vmatprep.subr.bf16.mxu0 0
        %1299 = vmatpush1.bf16.msra.mxu0 0
        %1300 = vmatprep.subr.bf16.mxu0 0
        %1301 = vmatpush1.bf16.msra.mxu0 0
        %1302 = vmatprep.subr.bf16.mxu0 0
        %1303 = vmatpush1.bf16.msra.mxu0 0
        %1304 = vmatprep.subr.bf16.mxu0 0
        %1305 = vmatpush1.bf16.msra.mxu0 0
        %1306 = vmatprep.subr.bf16.mxu0 0
        %1307 = vmatpush1.bf16.msra.mxu0 0
        %1308 = vmatprep.subr.bf16.mxu0 0
        %1309 = vmatpush1.bf16.msra.mxu0 0
        %1310 = vmatprep.subr.bf16.mxu0 0
        %1311 = vmatpush1.bf16.msra.mxu0 0
        %1312 = vmatprep.subr.bf16.mxu0 0
        %1313 = vmatpush1.bf16.msra.mxu0 0
        %1314 = vmatprep.subr.bf16.mxu0 0
        %1315 = vmatpush1.bf16.msra.mxu0 0
        %1316 = vmatprep.mubr.bf16.mxu0 0
        %1317 = vmatmul.mubr.bf16.gmra.mrb[0].mxu0 %v1282
        %v1318 = vpop.f32.mrb[0].mxu0
        %v1319 = vadd.f32 %v1267, %v1318
        %v1320 = vpop.f32.mrb[0].mxu0
        %v1321 = vpop.f32.mrb[0].mxu0
        %v1322 = vpop.f32.mrb[0].mxu0
        %1323 = vdwg.mxu0
        %v1324 = vmul.f32 %v1319, %v1319
        %v1325 = vmul.f32 %v1319, %v1324
        %v1326 = vmul.f32 %v1325, 0.044715
        %v1327 = vadd.f32 %v1319, %v1326
        %v1328 = vmul.f32 %v1327, 0.7978846
        %v1329 = vtanh.pop %v1328
        %v1330 = vadd.f32 %v1329, 1.0
        %v1331 = vmul.f32 %v1330, 0.5
        %v1332 = vmul.f32 %v1319, %v1331
        %v1333 = vld [vmem:[%s12] sm:$0xf]
        %v1334 = vld [vmem:[%s12 + $0x4] sm:$0xf]
        %v1335 = vld [vmem:[%s12 + $0x8] sm:$0xf]
        %v1336 = vld [vmem:[%s12 + $0xc] sm:$0xf]
        %v1337 = vld [vmem:[%s12 + $0x10] sm:$0xf]
        %v1338 = vld [vmem:[%s12 + $0x14] sm:$0xf]
        %v1339 = vld [vmem:[%s12 + $0x18] sm:$0xf]
        %v1340 = vld [vmem:[%s12 + $0x1c] sm:$0xf]
        %v1341 = vld [vmem:[%s13] sm:$0x1]
        %v1342 = vpack.c.bf16 %v1332, %v1332
        %v1344 = vlaneseq
        %v1345 = vshrl.u32 %v1344, 7
        %v1346 = vsub.s32 0, %v1345
        %v1347 = vrot.slane %v1341, %v1346
        %v1357 = vunpack.c.l.b16 %v1333
        %v1358 = vunpack.c.l.b16 %v1334
        %v1359 = vunpack.c.l.b16 %v1335
        %v1360 = vunpack.c.l.b16 %v1336
        %v1361 = vunpack.c.l.b16 %v1337
        %v1362 = vunpack.c.l.b16 %v1338
        %v1363 = vunpack.c.l.b16 %v1339
        %v1364 = vunpack.c.l.b16 %v1340
        %v1365 = vpack.c.b16 %v1358, %v1357
        %v1366 = vpack.c.b16 %v1360, %v1359
        %v1367 = vpack.c.b16 %v1362, %v1361
        %v1368 = vpack.c.b16 %v1364, %v1363
        %vm1373 = vcmask 523264
        %v1375 = vsel %vm1373, %v1342, 0
        %1377 = vmatprep.subr.bf16.mxu0 0
        %1378 = vmatpush1.bf16.msra.mxu0 %v1365
        %1379 = vmatprep.subr.bf16.mxu0 0
        %1380 = vmatpush1.bf16.msra.mxu0 %v1366
        %1381 = vmatprep.subr.bf16.mxu0 0
        %1382 = vmatpush1.bf16.msra.mxu0 %v1367
        %1383 = vmatprep.subr.bf16.mxu0 0
        %1384 = vmatpush1.bf16.msra.mxu0 %v1368
        %1385 = vmatprep.subr.bf16.mxu0 0
        %1386 = vmatpush1.bf16.msra.mxu0 0
        %1387 = vmatprep.subr.bf16.mxu0 0
        %1388 = vmatpush1.bf16.msra.mxu0 0
        %1389 = vmatprep.subr.bf16.mxu0 0
        %1390 = vmatpush1.bf16.msra.mxu0 0
        %1391 = vmatprep.subr.bf16.mxu0 0
        %1392 = vmatpush1.bf16.msra.mxu0 0
        %1393 = vmatprep.subr.bf16.mxu0 0
        %1394 = vmatpush1.bf16.msra.mxu0 0
        %1395 = vmatprep.subr.bf16.mxu0 0
        %1396 = vmatpush1.bf16.msra.mxu0 0
        %1397 = vmatprep.subr.bf16.mxu0 0
        %1398 = vmatpush1.bf16.msra.mxu0 0
        %1399 = vmatprep.subr.bf16.mxu0 0
        %1400 = vmatpush1.bf16.msra.mxu0 0
        %1401 = vmatprep.subr.bf16.mxu0 0
        %1402 = vmatpush1.bf16.msra.mxu0 0
        %1403 = vmatprep.subr.bf16.mxu0 0
        %1404 = vmatpush1.bf16.msra.mxu0 0
        %1405 = vmatprep.subr.bf16.mxu0 0
        %1406 = vmatpush1.bf16.msra.mxu0 0
        %1407 = vmatprep.subr.bf16.mxu0 0
        %1408 = vmatpush1.bf16.msra.mxu0 0
        %1409 = vmatprep.mubr.bf16.mxu0 0
        %1410 = vmatmul.mubr.bf16.gmra.mrb[0].mxu0 %v1375
        %v1411 = vpop.f32.mrb[0].mxu0
        %v1412 = vadd.f32 %v1347, %v1411
        %v1413 = vpop.f32.mrb[0].mxu0
        %v1414 = vpop.f32.mrb[0].mxu0
        %v1415 = vpop.f32.mrb[0].mxu0
        %1416 = vdwg.mxu0
        %v1417 = vadd.f32 %v1412, %v1256
        %v1418 = vld [vmem:[%s14] sm:$0x1]
        %v1419 = vld [vmem:[%s15] sm:$0x1]
        %v1420 = vsel %vm591, %v1417, 0.0
        %1421 = vadd.xlane.f32.xlu0 %v1420
        %v1422 = vpop.xlane.xlu0 %1421
        %v1423 = vmul.f32 %v1422, %v595
        %v1424 = vsub.f32 %v1417, %v1423
        %v1425 = vmul.f32 %v1424, %v1424
        %v1426 = vsel %vm591, %v1425, 0.0
        %1427 = vadd.xlane.f32.xlu0 %v1426
        %v1428 = vpop.xlane.xlu0 %1427
        %v1429 = vmul.f32 %v1428, %v595
        %v1430 = vadd.f32 %v1429, 1e-12
        %v1431 = vrsqrt.pop %v1430
        %v1432 = vmul.f32 %v1424, %v1431
        %v1434 = vlaneseq
        %v1435 = vshrl.u32 %v1434, 7
        %v1436 = vsub.s32 0, %v1435
        %v1437 = vrot.slane %v1418, %v1436
        %v1439 = vmul.f32 %v1432, %v1437
        %v1441 = vlaneseq
        %v1442 = vshrl.u32 %v1441, 7
        %v1443 = vsub.s32 0, %v1442
        %v1444 = vrot.slane %v1419, %v1443
        %v1446 = vadd.f32 %v1439, %v1444
        %s1447 = scalar_lea.vmem %s4, 16
        %v1448 = vld [vmem:[%s1447] sm:$0xf]
        %v1449 = vld [vmem:[%s1447 + $0x4] sm:$0xf]
        %v1450 = vld [vmem:[%s1447 + $0x8] sm:$0xf]
        %v1451 = vld [vmem:[%s1447 + $0xc] sm:$0xf]
        %s1452 = scalar_lea.vmem %s5, 1
        %v1453 = vld [vmem:[%s1452] sm:$0x1]
        %v1454 = vpack.c.bf16 %v1446, %v1446
        %v1456 = vlaneseq
        %v1457 = vshrl.u32 %v1456, 7
        %v1458 = vsub.s32 0, %v1457
        %v1459 = vrot.slane %v1453, %v1458
        %v1465 = vunpack.c.l.b16 %v1448
        %v1466 = vunpack.c.l.b16 %v1449
        %v1467 = vunpack.c.l.b16 %v1450
        %v1468 = vunpack.c.l.b16 %v1451
        %v1469 = vpack.c.b16 %v1466, %v1465
        %v1470 = vpack.c.b16 %v1468, %v1467
        %v1474 = vsel %vm591, %v1454, 0
        %1476 = vmatprep.subr.bf16.mxu0 0
        %1477 = vmatpush1.bf16.msra.mxu0 %v1469
        %1478 = vmatprep.subr.bf16.mxu0 0
        %1479 = vmatpush1.bf16.msra.mxu0 %v1470
        %1480 = vmatprep.subr.bf16.mxu0 0
        %1481 = vmatpush1.bf16.msra.mxu0 0
        %1482 = vmatprep.subr.bf16.mxu0 0
        %1483 = vmatpush1.bf16.msra.mxu0 0
        %1484 = vmatprep.subr.bf16.mxu0 0
        %1485 = vmatpush1.bf16.msra.mxu0 0
        %1486 = vmatprep.subr.bf16.mxu0 0
        %1487 = vmatpush1.bf16.msra.mxu0 0
        %1488 = vmatprep.subr.bf16.mxu0 0
        %1489 = vmatpush1.bf16.msra.mxu0 0
        %1490 = vmatprep.subr.bf16.mxu0 0
        %1491 = vmatpush1.bf16.msra.mxu0 0
        %1492 = vmatprep.subr.bf16.mxu0 0
        %1493 = vmatpush1.bf16.msra.mxu0 0
        %1494 = vmatprep.subr.bf16.mxu0 0
        %1495 = vmatpush1.bf16.msra.mxu0 0
        %1496 = vmatprep.subr.bf16.mxu0 0
        %1497 = vmatpush1.bf16.msra.mxu0 0
        %1498 = vmatprep.subr.bf16.mxu0 0
        %1499 = vmatpush1.bf16.msra.mxu0 0
        %1500 = vmatprep.subr.bf16.mxu0 0
        %1501 = vmatpush1.bf16.msra.mxu0 0
        %1502 = vmatprep.subr.bf16.mxu0 0
        %1503 = vmatpush1.bf16.msra.mxu0 0
        %1504 = vmatprep.subr.bf16.mxu0 0
        %1505 = vmatpush1.bf16.msra.mxu0 0
        %1506 = vmatprep.subr.bf16.mxu0 0
        %1507 = vmatpush1.bf16.msra.mxu0 0
        %1508 = vmatprep.mubr.bf16.mxu0 0
        %1509 = vmatmul.mubr.bf16.gmra.mrb[0].mxu0 %v1474
        %v1510 = vpop.f32.mrb[0].mxu0
        %v1511 = vadd.f32 %v1459, %v1510
        %v1512 = vpop.f32.mrb[0].mxu0
        %v1513 = vpop.f32.mrb[0].mxu0
        %v1514 = vpop.f32.mrb[0].mxu0
        %1515 = vdwg.mxu0
        %v1516 = vpack.c.bf16 %v1511, %v1511
        %1518 = vrot.lane.b32.xlu0 %v1516, 96
        %v1519 = vpop.permute.xlu0 %1518
        %v1521 = vsel %vm691, %v1516, 0
        %v1524 = vsel %vm691, %v1519, 0
        %1526 = vmatprep.subr.bf16.mxu0 0
        %1527 = vmatpush1.bf16.xpose.msra.mxu0 %v1524
        %1528 = vmatprep.subr.bf16.mxu0 0
        %1529 = vmatpush1.bf16.xpose.msra.mxu0 0
        %1530 = vmatprep.subr.bf16.mxu0 0
        %1531 = vmatpush1.bf16.xpose.msra.mxu0 0
        %1532 = vmatprep.subr.bf16.mxu0 0
        %1533 = vmatpush1.bf16.xpose.msra.mxu0 0
        %1534 = vmatprep.subr.bf16.mxu0 0
        %1535 = vmatpush1.bf16.xpose.msra.mxu0 0
        %1536 = vmatprep.subr.bf16.mxu0 0
        %1537 = vmatpush1.bf16.xpose.msra.mxu0 0
        %1538 = vmatprep.subr.bf16.mxu0 0
        %1539 = vmatpush1.bf16.xpose.msra.mxu0 0
        %1540 = vmatprep.subr.bf16.mxu0 0
        %1541 = vmatpush1.bf16.xpose.msra.mxu0 0
        %1542 = vmatprep.subr.bf16.mxu0 0
        %1543 = vmatpush1.bf16.xpose.msra.mxu0 0
        %1544 = vmatprep.subr.bf16.mxu0 0
        %1545 = vmatpush1.bf16.xpose.msra.mxu0 0
        %1546 = vmatprep.subr.bf16.mxu0 0
        %1547 = vmatpush1.bf16.xpose.msra.mxu0 0
        %1548 = vmatprep.subr.bf16.mxu0 0
        %1549 = vmatpush1.bf16.xpose.msra.mxu0 0
        %1550 = vmatprep.subr.bf16.mxu0 0
        %1551 = vmatpush1.bf16.xpose.msra.mxu0 0
        %1552 = vmatprep.subr.bf16.mxu0 0
        %1553 = vmatpush1.bf16.xpose.msra.mxu0 0
        %1554 = vmatprep.subr.bf16.mxu0 0
        %1555 = vmatpush1.bf16.xpose.msra.mxu0 0
        %1556 = vmatprep.subr.bf16.mxu0 0
        %1557 = vmatpush1.bf16.xpose.msra.mxu0 0
        %1558 = vmatprep.mubr.bf16.mxu0 0
        %1559 = vmatmul.mubr.bf16.gmra.mrb[0].mxu0 %v1521
        %v1560 = vpop.f32.mrb[0].mxu0
        %v1561 = vadd.f32 0.0, %v1560
        %v1562 = vpop.f32.mrb[0].mxu0
        %v1563 = vpop.f32.mrb[0].mxu0
        %v1564 = vpop.f32.mrb[0].mxu0
        %1565 = vdwg.mxu0
        %v1566 = vmul.f32 %v1561, 0.35355338
        %v1567 = vadd.f32 %v1566, %v743
        %v1568 = vsel %vm691, %v1567, -inf
        %1569 = vmax.xlane.f32.xlu0 %v1568
        %v1570 = vpop.xlane.xlu0 %1569
        %v1571 = vsub.f32 %v1567, %v1570
        %v1572 = vmul.f32 %v1571, 1.442695
        %v1573 = vpow.pop %v1572
        %v1574 = vsel %vm691, %v1573, 0.0
        %1575 = vadd.xlane.f32.xlu0 %v1574
        %v1576 = vpop.xlane.xlu0 %1575
        %v1577 = vrcp.pop %v1576
        %v1578 = vmul.f32 %v1573, %v1577
        %v1579 = vpack.c.bf16 %v1578, %v1578
        %1580 = vrot.lane.b32.xlu0 %v1516, 64
        %v1581 = vpop.permute.xlu0 %1580
        %v1583 = vsel %vm691, %v1579, 0
        %v1586 = vsel %vm763, %v1581, 0
        %1588 = vmatprep.subr.bf16.mxu0 0
        %1589 = vmatpush1.bf16.msra.mxu0 %v1586
        %1590 = vmatprep.subr.bf16.mxu0 0
        %1591 = vmatpush1.bf16.msra.mxu0 0
        %1592 = vmatprep.subr.bf16.mxu0 0
        %1593 = vmatpush1.bf16.msra.mxu0 0
        %1594 = vmatprep.subr.bf16.mxu0 0
        %1595 = vmatpush1.bf16.msra.mxu0 0
        %1596 = vmatprep.subr.bf16.mxu0 0
        %1597 = vmatpush1.bf16.msra.mxu0 0
        %1598 = vmatprep.subr.bf16.mxu0 0
        %1599 = vmatpush1.bf16.msra.mxu0 0
        %1600 = vmatprep.subr.bf16.mxu0 0
        %1601 = vmatpush1.bf16.msra.mxu0 0
        %1602 = vmatprep.subr.bf16.mxu0 0
        %1603 = vmatpush1.bf16.msra.mxu0 0
        %1604 = vmatprep.subr.bf16.mxu0 0
        %1605 = vmatpush1.bf16.msra.mxu0 0
        %1606 = vmatprep.subr.bf16.mxu0 0
        %1607 = vmatpush1.bf16.msra.mxu0 0
        %1608 = vmatprep.subr.bf16.mxu0 0
        %1609 = vmatpush1.bf16.msra.mxu0 0
        %1610 = vmatprep.subr.bf16.mxu0 0
        %1611 = vmatpush1.bf16.msra.mxu0 0
        %1612 = vmatprep.subr.bf16.mxu0 0
        %1613 = vmatpush1.bf16.msra.mxu0 0
        %1614 = vmatprep.subr.bf16.mxu0 0
        %1615 = vmatpush1.bf16.msra.mxu0 0
        %1616 = vmatprep.subr.bf16.mxu0 0
        %1617 = vmatpush1.bf16.msra.mxu0 0
        %1618 = vmatprep.subr.bf16.mxu0 0
        %1619 = vmatpush1.bf16.msra.mxu0 0
        %1620 = vmatprep.mubr.bf16.mxu0 0
        %1621 = vmatmul.mubr.bf16.gmra.mrb[0].mxu0 %v1583
        %v1622 = vpop.f32.mrb[0].mxu0
        %v1623 = vadd.f32 0.0, %v1622
        %v1624 = vpop.f32.mrb[0].mxu0
        %v1625 = vpop.f32.mrb[0].mxu0
        %v1626 = vpop.f32.mrb[0].mxu0
        %1627 = vdwg.mxu0
        %1628 = vrot.lane.b32.xlu0 %v1516, 120
        %v1629 = vpop.permute.xlu0 %1628
        %1630 = vrot.lane.b32.xlu0 %v1516, 88
        %v1631 = vpop.permute.xlu0 %1630
        %v1633 = vsel %vm691, %v1629, 0
        %v1636 = vsel %vm691, %v1631, 0
        %1638 = vmatprep.subr.bf16.mxu0 0
        %1639 = vmatpush1.bf16.xpose.msra.mxu0 %v1636
        %1640 = vmatprep.subr.bf16.mxu0 0
        %1641 = vmatpush1.bf16.xpose.msra.mxu0 0
        %1642 = vmatprep.subr.bf16.mxu0 0
        %1643 = vmatpush1.bf16.xpose.msra.mxu0 0
        %1644 = vmatprep.subr.bf16.mxu0 0
        %1645 = vmatpush1.bf16.xpose.msra.mxu0 0
        %1646 = vmatprep.subr.bf16.mxu0 0
        %1647 = vmatpush1.bf16.xpose.msra.mxu0 0
        %1648 = vmatprep.subr.bf16.mxu0 0
        %1649 = vmatpush1.bf16.xpose.msra.mxu0 0
        %1650 = vmatprep.subr.bf16.mxu0 0
        %1651 = vmatpush1.bf16.xpose.msra.mxu0 0
        %1652 = vmatprep.subr.bf16.mxu0 0
        %1653 = vmatpush1.bf16.xpose.msra.mxu0 0
        %1654 = vmatprep.subr.bf16.mxu0 0
        %1655 = vmatpush1.bf16.xpose.msra.mxu0 0
        %1656 = vmatprep.subr.bf16.mxu0 0
        %1657 = vmatpush1.bf16.xpose.msra.mxu0 0
        %1658 = vmatprep.subr.bf16.mxu0 0
        %1659 = vmatpush1.bf16.xpose.msra.mxu0 0
        %1660 = vmatprep.subr.bf16.mxu0 0
        %1661 = vmatpush1.bf16.xpose.msra.mxu0 0
        %1662 = vmatprep.subr.bf16.mxu0 0
        %1663 = vmatpush1.bf16.xpose.msra.mxu0 0
        %1664 = vmatprep.subr.bf16.mxu0 0
        %1665 = vmatpush1.bf16.xpose.msra.mxu0 0
        %1666 = vmatprep.subr.bf16.mxu0 0
        %1667 = vmatpush1.bf16.xpose.msra.mxu0 0
        %1668 = vmatprep.subr.bf16.mxu0 0
        %1669 = vmatpush1.bf16.xpose.msra.mxu0 0
        %1670 = vmatprep.mubr.bf16.mxu0 0
        %1671 = vmatmul.mubr.bf16.gmra.mrb[0].mxu0 %v1633
        %v1672 = vpop.f32.mrb[0].mxu0
        %v1673 = vadd.f32 0.0, %v1672
        %v1674 = vpop.f32.mrb[0].mxu0
        %v1675 = vpop.f32.mrb[0].mxu0
        %v1676 = vpop.f32.mrb[0].mxu0
        %1677 = vdwg.mxu0
        %v1678 = vmul.f32 %v1673, 0.35355338
        %v1679 = vadd.f32 %v1678, %v743
        %v1680 = vsel %vm691, %v1679, -inf
        %1681 = vmax.xlane.f32.xlu0 %v1680
        %v1682 = vpop.xlane.xlu0 %1681
        %v1683 = vsub.f32 %v1679, %v1682
        %v1684 = vmul.f32 %v1683, 1.442695
        %v1685 = vpow.pop %v1684
        %v1686 = vsel %vm691, %v1685, 0.0
        %1687 = vadd.xlane.f32.xlu0 %v1686
        %v1688 = vpop.xlane.xlu0 %1687
        %v1689 = vrcp.pop %v1688
        %v1690 = vmul.f32 %v1685, %v1689
        %v1691 = vpack.c.bf16 %v1690, %v1690
        %1692 = vrot.lane.b32.xlu0 %v1516, 56
        %v1693 = vpop.permute.xlu0 %1692
        %v1695 = vsel %vm691, %v1691, 0
        %v1698 = vsel %vm763, %v1693, 0
        %1700 = vmatprep.subr.bf16.mxu0 0
        %1701 = vmatpush1.bf16.msra.mxu0 %v1698
        %1702 = vmatprep.subr.bf16.mxu0 0
        %1703 = vmatpush1.bf16.msra.mxu0 0
        %1704 = vmatprep.subr.bf16.mxu0 0
        %1705 = vmatpush1.bf16.msra.mxu0 0
        %1706 = vmatprep.subr.bf16.mxu0 0
        %1707 = vmatpush1.bf16.msra.mxu0 0
        %1708 = vmatprep.subr.bf16.mxu0 0
        %1709 = vmatpush1.bf16.msra.mxu0 0
        %1710 = vmatprep.subr.bf16.mxu0 0
        %1711 = vmatpush1.bf16.msra.mxu0 0
        %1712 = vmatprep.subr.bf16.mxu0 0
        %1713 = vmatpush1.bf16.msra.mxu0 0
        %1714 = vmatprep.subr.bf16.mxu0 0
        %1715 = vmatpush1.bf16.msra.mxu0 0
        %1716 = vmatprep.subr.bf16.mxu0 0
        %1717 = vmatpush1.bf16.msra.mxu0 0
        %1718 = vmatprep.subr.bf16.mxu0 0
        %1719 = vmatpush1.bf16.msra.mxu0 0
        %1720 = vmatprep.subr.bf16.mxu0 0
        %1721 = vmatpush1.bf16.msra.mxu0 0
        %1722 = vmatprep.subr.bf16.mxu0 0
        %1723 = vmatpush1.bf16.msra.mxu0 0
        %1724 = vmatprep.subr.bf16.mxu0 0
        %1725 = vmatpush1.bf16.msra.mxu0 0
        %1726 = vmatprep.subr.bf16.mxu0 0
        %1727 = vmatpush1.bf16.msra.mxu0 0
        %1728 = vmatprep.subr.bf16.mxu0 0
        %1729 = vmatpush1.bf16.msra.mxu0 0
        %1730 = vmatprep.subr.bf16.mxu0 0
        %1731 = vmatpush1.bf16.msra.mxu0 0
        %1732 = vmatprep.mubr.bf16.mxu0 0
        %1733 = vmatmul.mubr.bf16.gmra.mrb[0].mxu0 %v1695
        %v1734 = vpop.f32.mrb[0].mxu0
        %v1735 = vadd.f32 0.0, %v1734
        %v1736 = vpop.f32.mrb[0].mxu0
        %v1737 = vpop.f32.mrb[0].mxu0
        %v1738 = vpop.f32.mrb[0].mxu0
        %1739 = vdwg.mxu0
        %1740 = vrot.lane.b32.xlu0 %v1516, 112
        %v1741 = vpop.permute.xlu0 %1740
        %1742 = vrot.lane.b32.xlu0 %v1516, 80
        %v1743 = vpop.permute.xlu0 %1742
        %v1745 = vsel %vm691, %v1741, 0
        %v1748 = vsel %vm691, %v1743, 0
        %1750 = vmatprep.subr.bf16.mxu0 0
        %1751 = vmatpush1.bf16.xpose.msra.mxu0 %v1748
        %1752 = vmatprep.subr.bf16.mxu0 0
        %1753 = vmatpush1.bf16.xpose.msra.mxu0 0
        %1754 = vmatprep.subr.bf16.mxu0 0
        %1755 = vmatpush1.bf16.xpose.msra.mxu0 0
        %1756 = vmatprep.subr.bf16.mxu0 0
        %1757 = vmatpush1.bf16.xpose.msra.mxu0 0
        %1758 = vmatprep.subr.bf16.mxu0 0
        %1759 = vmatpush1.bf16.xpose.msra.mxu0 0
        %1760 = vmatprep.subr.bf16.mxu0 0
        %1761 = vmatpush1.bf16.xpose.msra.mxu0 0
        %1762 = vmatprep.subr.bf16.mxu0 0
        %1763 = vmatpush1.bf16.xpose.msra.mxu0 0
        %1764 = vmatprep.subr.bf16.mxu0 0
        %1765 = vmatpush1.bf16.xpose.msra.mxu0 0
        %1766 = vmatprep.subr.bf16.mxu0 0
        %1767 = vmatpush1.bf16.xpose.msra.mxu0 0
        %1768 = vmatprep.subr.bf16.mxu0 0
        %1769 = vmatpush1.bf16.xpose.msra.mxu0 0
        %1770 = vmatprep.subr.bf16.mxu0 0
        %1771 = vmatpush1.bf16.xpose.msra.mxu0 0
        %1772 = vmatprep.subr.bf16.mxu0 0
        %1773 = vmatpush1.bf16.xpose.msra.mxu0 0
        %1774 = vmatprep.subr.bf16.mxu0 0
        %1775 = vmatpush1.bf16.xpose.msra.mxu0 0
        %1776 = vmatprep.subr.bf16.mxu0 0
        %1777 = vmatpush1.bf16.xpose.msra.mxu0 0
        %1778 = vmatprep.subr.bf16.mxu0 0
        %1779 = vmatpush1.bf16.xpose.msra.mxu0 0
        %1780 = vmatprep.subr.bf16.mxu0 0
        %1781 = vmatpush1.bf16.xpose.msra.mxu0 0
        %1782 = vmatprep.mubr.bf16.mxu0 0
        %1783 = vmatmul.mubr.bf16.gmra.mrb[0].mxu0 %v1745
        %v1784 = vpop.f32.mrb[0].mxu0
        %v1785 = vadd.f32 0.0, %v1784
        %v1786 = vpop.f32.mrb[0].mxu0
        %v1787 = vpop.f32.mrb[0].mxu0
        %v1788 = vpop.f32.mrb[0].mxu0
        %1789 = vdwg.mxu0
        %v1790 = vmul.f32 %v1785, 0.35355338
        %v1791 = vadd.f32 %v1790, %v743
        %v1792 = vsel %vm691, %v1791, -inf
        %1793 = vmax.xlane.f32.xlu0 %v1792
        %v1794 = vpop.xlane.xlu0 %1793
        %v1795 = vsub.f32 %v1791, %v1794
        %v1796 = vmul.f32 %v1795, 1.442695
        %v1797 = vpow.pop %v1796
        %v1798 = vsel %vm691, %v1797, 0.0
        %1799 = vadd.xlane.f32.xlu0 %v1798
        %v1800 = vpop.xlane.xlu0 %1799
        %v1801 = vrcp.pop %v1800
        %v1802 = vmul.f32 %v1797, %v1801
        %v1803 = vpack.c.bf16 %v1802, %v1802
        %1804 = vrot.lane.b32.xlu0 %v1516, 48
        %v1805 = vpop.permute.xlu0 %1804
        %v1807 = vsel %vm691, %v1803, 0
        %v1810 = vsel %vm763, %v1805, 0
        %1812 = vmatprep.subr.bf16.mxu0 0
        %1813 = vmatpush1.bf16.msra.mxu0 %v1810
        %1814 = vmatprep.subr.bf16.mxu0 0
        %1815 = vmatpush1.bf16.msra.mxu0 0
        %1816 = vmatprep.subr.bf16.mxu0 0
        %1817 = vmatpush1.bf16.msra.mxu0 0
        %1818 = vmatprep.subr.bf16.mxu0 0
        %1819 = vmatpush1.bf16.msra.mxu0 0
        %1820 = vmatprep.subr.bf16.mxu0 0
        %1821 = vmatpush1.bf16.msra.mxu0 0
        %1822 = vmatprep.subr.bf16.mxu0 0
        %1823 = vmatpush1.bf16.msra.mxu0 0
        %1824 = vmatprep.subr.bf16.mxu0 0
        %1825 = vmatpush1.bf16.msra.mxu0 0
        %1826 = vmatprep.subr.bf16.mxu0 0
        %1827 = vmatpush1.bf16.msra.mxu0 0
        %1828 = vmatprep.subr.bf16.mxu0 0
        %1829 = vmatpush1.bf16.msra.mxu0 0
        %1830 = vmatprep.subr.bf16.mxu0 0
        %1831 = vmatpush1.bf16.msra.mxu0 0
        %1832 = vmatprep.subr.bf16.mxu0 0
        %1833 = vmatpush1.bf16.msra.mxu0 0
        %1834 = vmatprep.subr.bf16.mxu0 0
        %1835 = vmatpush1.bf16.msra.mxu0 0
        %1836 = vmatprep.subr.bf16.mxu0 0
        %1837 = vmatpush1.bf16.msra.mxu0 0
        %1838 = vmatprep.subr.bf16.mxu0 0
        %1839 = vmatpush1.bf16.msra.mxu0 0
        %1840 = vmatprep.subr.bf16.mxu0 0
        %1841 = vmatpush1.bf16.msra.mxu0 0
        %1842 = vmatprep.subr.bf16.mxu0 0
        %1843 = vmatpush1.bf16.msra.mxu0 0
        %1844 = vmatprep.mubr.bf16.mxu0 0
        %1845 = vmatmul.mubr.bf16.gmra.mrb[0].mxu0 %v1807
        %v1846 = vpop.f32.mrb[0].mxu0
        %v1847 = vadd.f32 0.0, %v1846
        %v1848 = vpop.f32.mrb[0].mxu0
        %v1849 = vpop.f32.mrb[0].mxu0
        %v1850 = vpop.f32.mrb[0].mxu0
        %1851 = vdwg.mxu0
        %1852 = vrot.lane.b32.xlu0 %v1516, 104
        %v1853 = vpop.permute.xlu0 %1852
        %1854 = vrot.lane.b32.xlu0 %v1516, 72
        %v1855 = vpop.permute.xlu0 %1854
        %v1857 = vsel %vm691, %v1853, 0
        %v1860 = vsel %vm691, %v1855, 0
        %1862 = vmatprep.subr.bf16.mxu0 0
        %1863 = vmatpush1.bf16.xpose.msra.mxu0 %v1860
        %1864 = vmatprep.subr.bf16.mxu0 0
        %1865 = vmatpush1.bf16.xpose.msra.mxu0 0
        %1866 = vmatprep.subr.bf16.mxu0 0
        %1867 = vmatpush1.bf16.xpose.msra.mxu0 0
        %1868 = vmatprep.subr.bf16.mxu0 0
        %1869 = vmatpush1.bf16.xpose.msra.mxu0 0
        %1870 = vmatprep.subr.bf16.mxu0 0
        %1871 = vmatpush1.bf16.xpose.msra.mxu0 0
        %1872 = vmatprep.subr.bf16.mxu0 0
        %1873 = vmatpush1.bf16.xpose.msra.mxu0 0
        %1874 = vmatprep.subr.bf16.mxu0 0
        %1875 = vmatpush1.bf16.xpose.msra.mxu0 0
        %1876 = vmatprep.subr.bf16.mxu0 0
        %1877 = vmatpush1.bf16.xpose.msra.mxu0 0
        %1878 = vmatprep.subr.bf16.mxu0 0
        %1879 = vmatpush1.bf16.xpose.msra.mxu0 0
        %1880 = vmatprep.subr.bf16.mxu0 0
        %1881 = vmatpush1.bf16.xpose.msra.mxu0 0
        %1882 = vmatprep.subr.bf16.mxu0 0
        %1883 = vmatpush1.bf16.xpose.msra.mxu0 0
        %1884 = vmatprep.subr.bf16.mxu0 0
        %1885 = vmatpush1.bf16.xpose.msra.mxu0 0
        %1886 = vmatprep.subr.bf16.mxu0 0
        %1887 = vmatpush1.bf16.xpose.msra.mxu0 0
        %1888 = vmatprep.subr.bf16.mxu0 0
        %1889 = vmatpush1.bf16.xpose.msra.mxu0 0
        %1890 = vmatprep.subr.bf16.mxu0 0
        %1891 = vmatpush1.bf16.xpose.msra.mxu0 0
        %1892 = vmatprep.subr.bf16.mxu0 0
        %1893 = vmatpush1.bf16.xpose.msra.mxu0 0
        %1894 = vmatprep.mubr.bf16.mxu0 0
        %1895 = vmatmul.mubr.bf16.gmra.mrb[0].mxu0 %v1857
        %v1896 = vpop.f32.mrb[0].mxu0
        %v1897 = vadd.f32 0.0, %v1896
        %v1898 = vpop.f32.mrb[0].mxu0
        %v1899 = vpop.f32.mrb[0].mxu0
        %v1900 = vpop.f32.mrb[0].mxu0
        %1901 = vdwg.mxu0
        %v1902 = vmul.f32 %v1897, 0.35355338
        %v1903 = vadd.f32 %v1902, %v743
        %v1904 = vsel %vm691, %v1903, -inf
        %1905 = vmax.xlane.f32.xlu0 %v1904
        %v1906 = vpop.xlane.xlu0 %1905
        %v1907 = vsub.f32 %v1903, %v1906
        %v1908 = vmul.f32 %v1907, 1.442695
        %v1909 = vpow.pop %v1908
        %v1910 = vsel %vm691, %v1909, 0.0
        %1911 = vadd.xlane.f32.xlu0 %v1910
        %v1912 = vpop.xlane.xlu0 %1911
        %v1913 = vrcp.pop %v1912
        %v1914 = vmul.f32 %v1909, %v1913
        %v1915 = vpack.c.bf16 %v1914, %v1914
        %1916 = vrot.lane.b32.xlu0 %v1516, 40
        %v1917 = vpop.permute.xlu0 %1916
        %v1919 = vsel %vm691, %v1915, 0
        %v1922 = vsel %vm763, %v1917, 0
        %1924 = vmatprep.subr.bf16.mxu0 0
        %1925 = vmatpush1.bf16.msra.mxu0 %v1922
        %1926 = vmatprep.subr.bf16.mxu0 0
        %1927 = vmatpush1.bf16.msra.mxu0 0
        %1928 = vmatprep.subr.bf16.mxu0 0
        %1929 = vmatpush1.bf16.msra.mxu0 0
        %1930 = vmatprep.subr.bf16.mxu0 0
        %1931 = vmatpush1.bf16.msra.mxu0 0
        %1932 = vmatprep.subr.bf16.mxu0 0
        %1933 = vmatpush1.bf16.msra.mxu0 0
        %1934 = vmatprep.subr.bf16.mxu0 0
        %1935 = vmatpush1.bf16.msra.mxu0 0
        %1936 = vmatprep.subr.bf16.mxu0 0
        %1937 = vmatpush1.bf16.msra.mxu0 0
        %1938 = vmatprep.subr.bf16.mxu0 0
        %1939 = vmatpush1.bf16.msra.mxu0 0
        %1940 = vmatprep.subr.bf16.mxu0 0
        %1941 = vmatpush1.bf16.msra.mxu0 0
        %1942 = vmatprep.subr.bf16.mxu0 0
        %1943 = vmatpush1.bf16.msra.mxu0 0
        %1944 = vmatprep.subr.bf16.mxu0 0
        %1945 = vmatpush1.bf16.msra.mxu0 0
        %1946 = vmatprep.subr.bf16.mxu0 0
        %1947 = vmatpush1.bf16.msra.mxu0 0
        %1948 = vmatprep.subr.bf16.mxu0 0
        %1949 = vmatpush1.bf16.msra.mxu0 0
        %1950 = vmatprep.subr.bf16.mxu0 0
        %1951 = vmatpush1.bf16.msra.mxu0 0
        %1952 = vmatprep.subr.bf16.mxu0 0
        %1953 = vmatpush1.bf16.msra.mxu0 0
        %1954 = vmatprep.subr.bf16.mxu0 0
        %1955 = vmatpush1.bf16.msra.mxu0 0
        %1956 = vmatprep.mubr.bf16.mxu0 0
        %1957 = vmatmul.mubr.bf16.gmra.mrb[0].mxu0 %v1919
        %v1958 = vpop.f32.mrb[0].mxu0
        %v1959 = vadd.f32 0.0, %v1958
        %v1960 = vpop.f32.mrb[0].mxu0
        %v1961 = vpop.f32.mrb[0].mxu0
        %v1962 = vpop.f32.mrb[0].mxu0
        %1963 = vdwg.mxu0
        %1965 = vrot.lane.b32.xlu0 %v1735, 8
        %v1966 = vpop.permute.xlu0 %1965
        %1969 = vrot.lane.b32.xlu0 %v1847, 16
        %v1970 = vpop.permute.xlu0 %1969
        %1973 = vrot.lane.b32.xlu0 %v1959, 24
        %v1974 = vpop.permute.xlu0 %1973
        %v1976 = vsel %vm691, %v1623, %v1966
        %v1977 = vsel %vm1156, %v1976, %v1970
        %v1978 = vsel %vm1158, %v1977, %v1974
        %s1979 = scalar_lea.vmem %s6, 16
        %v1980 = vld [vmem:[%s1979] sm:$0xf]
        %v1981 = vld [vmem:[%s1979 + $0x4] sm:$0xf]
        %v1982 = vld [vmem:[%s1979 + $0x8] sm:$0xf]
        %v1983 = vld [vmem:[%s1979 + $0xc] sm:$0xf]
        %s1984 = scalar_lea.vmem %s7, 1
        %v1985 = vld [vmem:[%s1984] sm:$0x1]
        %v1986 = vpack.c.bf16 %v1978, %v1978
        %v1988 = vlaneseq
        %v1989 = vshrl.u32 %v1988, 7
        %v1990 = vsub.s32 0, %v1989
        %v1991 = vrot.slane %v1985, %v1990
        %v1997 = vunpack.c.l.b16 %v1980
        %v1998 = vunpack.c.l.b16 %v1981
        %v1999 = vunpack.c.l.b16 %v1982
        %v2000 = vunpack.c.l.b16 %v1983
        %v2001 = vpack.c.b16 %v1998, %v1997
        %v2002 = vpack.c.b16 %v2000, %v1999
        %v2006 = vsel %vm591, %v1986, 0
        %2008 = vmatprep.subr.bf16.mxu0 0
        %2009 = vmatpush1.bf16.msra.mxu0 %v2001
        %2010 = vmatprep.subr.bf16.mxu0 0
        %2011 = vmatpush1.bf16.msra.mxu0 %v2002
        %2012 = vmatprep.subr.bf16.mxu0 0
        %2013 = vmatpush1.bf16.msra.mxu0 0
        %2014 = vmatprep.subr.bf16.mxu0 0
        %2015 = vmatpush1.bf16.msra.mxu0 0
        %2016 = vmatprep.subr.bf16.mxu0 0
        %2017 = vmatpush1.bf16.msra.mxu0 0
        %2018 = vmatprep.subr.bf16.mxu0 0
        %2019 = vmatpush1.bf16.msra.mxu0 0
        %2020 = vmatprep.subr.bf16.mxu0 0
        %2021 = vmatpush1.bf16.msra.mxu0 0
        %2022 = vmatprep.subr.bf16.mxu0 0
        %2023 = vmatpush1.bf16.msra.mxu0 0
        %2024 = vmatprep.subr.bf16.mxu0 0
        %2025 = vmatpush1.bf16.msra.mxu0 0
        %2026 = vmatprep.subr.bf16.mxu0 0
        %2027 = vmatpush1.bf16.msra.mxu0 0
        %2028 = vmatprep.subr.bf16.mxu0 0
        %2029 = vmatpush1.bf16.msra.mxu0 0
        %2030 = vmatprep.subr.bf16.mxu0 0
        %2031 = vmatpush1.bf16.msra.mxu0 0
        %2032 = vmatprep.subr.bf16.mxu0 0
        %2033 = vmatpush1.bf16.msra.mxu0 0
        %2034 = vmatprep.subr.bf16.mxu0 0
        %2035 = vmatpush1.bf16.msra.mxu0 0
        %2036 = vmatprep.subr.bf16.mxu0 0
        %2037 = vmatpush1.bf16.msra.mxu0 0
        %2038 = vmatprep.subr.bf16.mxu0 0
        %2039 = vmatpush1.bf16.msra.mxu0 0
        %2040 = vmatprep.mubr.bf16.mxu0 0
        %2041 = vmatmul.mubr.bf16.gmra.mrb[0].mxu0 %v2006
        %v2042 = vpop.f32.mrb[0].mxu0
        %v2043 = vadd.f32 %v1991, %v2042
        %v2044 = vpop.f32.mrb[0].mxu0
        %v2045 = vpop.f32.mrb[0].mxu0
        %v2046 = vpop.f32.mrb[0].mxu0
        %2047 = vdwg.mxu0
        %v2048 = vadd.f32 %v2043, %v1446
        %s2049 = scalar_lea.vmem %s8, 1
        %v2050 = vld [vmem:[%s2049] sm:$0x1]
        %s2051 = scalar_lea.vmem %s9, 1
        %v2052 = vld [vmem:[%s2051] sm:$0x1]
        %v2053 = vsel %vm591, %v2048, 0.0
        %2054 = vadd.xlane.f32.xlu0 %v2053
        %v2055 = vpop.xlane.xlu0 %2054
        %v2056 = vmul.f32 %v2055, %v595
        %v2057 = vsub.f32 %v2048, %v2056
        %v2058 = vmul.f32 %v2057, %v2057
        %v2059 = vsel %vm591, %v2058, 0.0
        %2060 = vadd.xlane.f32.xlu0 %v2059
        %v2061 = vpop.xlane.xlu0 %2060
        %v2062 = vmul.f32 %v2061, %v595
        %v2063 = vadd.f32 %v2062, 1e-12
        %v2064 = vrsqrt.pop %v2063
        %v2065 = vmul.f32 %v2057, %v2064
        %v2067 = vlaneseq
        %v2068 = vshrl.u32 %v2067, 7
        %v2069 = vsub.s32 0, %v2068
        %v2070 = vrot.slane %v2050, %v2069
        %v2072 = vmul.f32 %v2065, %v2070
        %v2074 = vlaneseq
        %v2075 = vshrl.u32 %v2074, 7
        %v2076 = vsub.s32 0, %v2075
        %v2077 = vrot.slane %v2052, %v2076
        %v2079 = vadd.f32 %v2072, %v2077
        %s2080 = scalar_lea.vmem %s10, 16
        %v2081 = vld [vmem:[%s2080] sm:$0xf]
        %v2082 = vld [vmem:[%s2080 + $0x4] sm:$0xf]
        %v2083 = vld [vmem:[%s2080 + $0x8] sm:$0xf]
        %v2084 = vld [vmem:[%s2080 + $0xc] sm:$0xf]
        %s2085 = scalar_lea.vmem %s11, 1
        %v2086 = vld [vmem:[%s2085] sm:$0x1]
        %v2087 = vpack.c.bf16 %v2079, %v2079
        %v2089 = vlaneseq
        %v2090 = vshrl.u32 %v2089, 7
        %v2091 = vsub.s32 0, %v2090
        %v2092 = vrot.slane %v2086, %v2091
        %v2098 = vunpack.c.l.b16 %v2081
        %v2099 = vunpack.c.l.b16 %v2082
        %v2100 = vunpack.c.l.b16 %v2083
        %v2101 = vunpack.c.l.b16 %v2084
        %v2102 = vpack.c.b16 %v2099, %v2098
        %v2103 = vpack.c.b16 %v2101, %v2100
        %v2107 = vsel %vm591, %v2087, 0
        %2109 = vmatprep.subr.bf16.mxu0 0
        %2110 = vmatpush1.bf16.msra.mxu0 %v2102
        %2111 = vmatprep.subr.bf16.mxu0 0
        %2112 = vmatpush1.bf16.msra.mxu0 %v2103
        %2113 = vmatprep.subr.bf16.mxu0 0
        %2114 = vmatpush1.bf16.msra.mxu0 0
        %2115 = vmatprep.subr.bf16.mxu0 0
        %2116 = vmatpush1.bf16.msra.mxu0 0
        %2117 = vmatprep.subr.bf16.mxu0 0
        %2118 = vmatpush1.bf16.msra.mxu0 0
        %2119 = vmatprep.subr.bf16.mxu0 0
        %2120 = vmatpush1.bf16.msra.mxu0 0
        %2121 = vmatprep.subr.bf16.mxu0 0
        %2122 = vmatpush1.bf16.msra.mxu0 0
        %2123 = vmatprep.subr.bf16.mxu0 0
        %2124 = vmatpush1.bf16.msra.mxu0 0
        %2125 = vmatprep.subr.bf16.mxu0 0
        %2126 = vmatpush1.bf16.msra.mxu0 0
        %2127 = vmatprep.subr.bf16.mxu0 0
        %2128 = vmatpush1.bf16.msra.mxu0 0
        %2129 = vmatprep.subr.bf16.mxu0 0
        %2130 = vmatpush1.bf16.msra.mxu0 0
        %2131 = vmatprep.subr.bf16.mxu0 0
        %2132 = vmatpush1.bf16.msra.mxu0 0
        %2133 = vmatprep.subr.bf16.mxu0 0
        %2134 = vmatpush1.bf16.msra.mxu0 0
        %2135 = vmatprep.subr.bf16.mxu0 0
        %2136 = vmatpush1.bf16.msra.mxu0 0
        %2137 = vmatprep.subr.bf16.mxu0 0
        %2138 = vmatpush1.bf16.msra.mxu0 0
        %2139 = vmatprep.subr.bf16.mxu0 0
        %2140 = vmatpush1.bf16.msra.mxu0 0
        %2141 = vmatprep.mubr.bf16.mxu0 0
        %2142 = vmatmul.mubr.bf16.gmra.mrb[0].mxu0 %v2107
        %v2143 = vpop.f32.mrb[0].mxu0
        %v2144 = vadd.f32 %v2092, %v2143
        %v2145 = vpop.f32.mrb[0].mxu0
        %v2146 = vpop.f32.mrb[0].mxu0
        %v2147 = vpop.f32.mrb[0].mxu0
        %2148 = vdwg.mxu0
        %v2149 = vmul.f32 %v2144, %v2144
        %v2150 = vmul.f32 %v2144, %v2149
        %v2151 = vmul.f32 %v2150, 0.044715
        %v2152 = vadd.f32 %v2144, %v2151
        %v2153 = vmul.f32 %v2152, 0.7978846
        %v2154 = vtanh.pop %v2153
        %v2155 = vadd.f32 %v2154, 1.0
        %v2156 = vmul.f32 %v2155, 0.5
        %v2157 = vmul.f32 %v2144, %v2156
        %s2158 = scalar_lea.vmem %s12, 32
        %v2159 = vld [vmem:[%s2158] sm:$0xf]
        %v2160 = vld [vmem:[%s2158 + $0x4] sm:$0xf]
        %v2161 = vld [vmem:[%s2158 + $0x8] sm:$0xf]
        %v2162 = vld [vmem:[%s2158 + $0xc] sm:$0xf]
        %v2163 = vld [vmem:[%s2158 + $0x10] sm:$0xf]
        %v2164 = vld [vmem:[%s2158 + $0x14] sm:$0xf]
        %v2165 = vld [vmem:[%s2158 + $0x18] sm:$0xf]
        %v2166 = vld [vmem:[%s2158 + $0x1c] sm:$0xf]
        %s2167 = scalar_lea.vmem %s13, 1
        %v2168 = vld [vmem:[%s2167] sm:$0x1]
        %v2169 = vpack.c.bf16 %v2157, %v2157
        %v2171 = vlaneseq
        %v2172 = vshrl.u32 %v2171, 7
        %v2173 = vsub.s32 0, %v2172
        %v2174 = vrot.slane %v2168, %v2173
        %v2184 = vunpack.c.l.b16 %v2159
        %v2185 = vunpack.c.l.b16 %v2160
        %v2186 = vunpack.c.l.b16 %v2161
        %v2187 = vunpack.c.l.b16 %v2162
        %v2188 = vunpack.c.l.b16 %v2163
        %v2189 = vunpack.c.l.b16 %v2164
        %v2190 = vunpack.c.l.b16 %v2165
        %v2191 = vunpack.c.l.b16 %v2166
        %v2192 = vpack.c.b16 %v2185, %v2184
        %v2193 = vpack.c.b16 %v2187, %v2186
        %v2194 = vpack.c.b16 %v2189, %v2188
        %v2195 = vpack.c.b16 %v2191, %v2190
        %v2201 = vsel %vm1373, %v2169, 0
        %2203 = vmatprep.subr.bf16.mxu0 0
        %2204 = vmatpush1.bf16.msra.mxu0 %v2192
        %2205 = vmatprep.subr.bf16.mxu0 0
        %2206 = vmatpush1.bf16.msra.mxu0 %v2193
        %2207 = vmatprep.subr.bf16.mxu0 0
        %2208 = vmatpush1.bf16.msra.mxu0 %v2194
        %2209 = vmatprep.subr.bf16.mxu0 0
        %2210 = vmatpush1.bf16.msra.mxu0 %v2195
        %2211 = vmatprep.subr.bf16.mxu0 0
        %2212 = vmatpush1.bf16.msra.mxu0 0
        %2213 = vmatprep.subr.bf16.mxu0 0
        %2214 = vmatpush1.bf16.msra.mxu0 0
        %2215 = vmatprep.subr.bf16.mxu0 0
        %2216 = vmatpush1.bf16.msra.mxu0 0
        %2217 = vmatprep.subr.bf16.mxu0 0
        %2218 = vmatpush1.bf16.msra.mxu0 0
        %2219 = vmatprep.subr.bf16.mxu0 0
        %2220 = vmatpush1.bf16.msra.mxu0 0
        %2221 = vmatprep.subr.bf16.mxu0 0
        %2222 = vmatpush1.bf16.msra.mxu0 0
        %2223 = vmatprep.subr.bf16.mxu0 0
        %2224 = vmatpush1.bf16.msra.mxu0 0
        %2225 = vmatprep.subr.bf16.mxu0 0
        %2226 = vmatpush1.bf16.msra.mxu0 0
        %2227 = vmatprep.subr.bf16.mxu0 0
        %2228 = vmatpush1.bf16.msra.mxu0 0
        %2229 = vmatprep.subr.bf16.mxu0 0
        %2230 = vmatpush1.bf16.msra.mxu0 0
        %2231 = vmatprep.subr.bf16.mxu0 0
        %2232 = vmatpush1.bf16.msra.mxu0 0
        %2233 = vmatprep.subr.bf16.mxu0 0
        %2234 = vmatpush1.bf16.msra.mxu0 0
        %2235 = vmatprep.mubr.bf16.mxu0 0
        %2236 = vmatmul.mubr.bf16.gmra.mrb[0].mxu0 %v2201
        %v2237 = vpop.f32.mrb[0].mxu0
        %v2238 = vadd.f32 %v2174, %v2237
        %v2239 = vpop.f32.mrb[0].mxu0
        %v2240 = vpop.f32.mrb[0].mxu0
        %v2241 = vpop.f32.mrb[0].mxu0
        %2242 = vdwg.mxu0
        %v2243 = vadd.f32 %v2238, %v2079
        %s2244 = scalar_lea.vmem %s14, 1
        %v2245 = vld [vmem:[%s2244] sm:$0x1]
        %s2246 = scalar_lea.vmem %s15, 1
        %v2247 = vld [vmem:[%s2246] sm:$0x1]
        %v2248 = vsel %vm591, %v2243, 0.0
        %2249 = vadd.xlane.f32.xlu0 %v2248
        %v2250 = vpop.xlane.xlu0 %2249
        %v2251 = vmul.f32 %v2250, %v595
        %v2252 = vsub.f32 %v2243, %v2251
        %v2253 = vmul.f32 %v2252, %v2252
        %v2254 = vsel %vm591, %v2253, 0.0
        %2255 = vadd.xlane.f32.xlu0 %v2254
        %v2256 = vpop.xlane.xlu0 %2255
        %v2257 = vmul.f32 %v2256, %v595
        %v2258 = vadd.f32 %v2257, 1e-12
        %v2259 = vrsqrt.pop %v2258
        %v2260 = vmul.f32 %v2252, %v2259
        %v2262 = vlaneseq
        %v2263 = vshrl.u32 %v2262, 7
        %v2264 = vsub.s32 0, %v2263
        %v2265 = vrot.slane %v2245, %v2264
        %v2267 = vmul.f32 %v2260, %v2265
        %v2269 = vlaneseq
        %v2270 = vshrl.u32 %v2269, 7
        %v2271 = vsub.s32 0, %v2270
        %v2272 = vrot.slane %v2247, %v2271
        %v2274 = vadd.f32 %v2267, %v2272
        %v2275 = vld [vmem:[%s16] sm:$0xf]
        %v2276 = vld [vmem:[%s16 + $0x4] sm:$0xf]
        %v2277 = vld [vmem:[%s16 + $0x8] sm:$0xf]
        %v2278 = vld [vmem:[%s16 + $0xc] sm:$0xf]
        %v2279 = vld [vmem:[%s17] sm:$0x1]
        %v2280 = vpack.c.bf16 %v2274, %v2274
        %v2285 = vunpack.c.l.b16 %v2275
        %v2286 = vunpack.c.l.b16 %v2276
        %v2287 = vunpack.c.l.b16 %v2277
        %v2288 = vunpack.c.l.b16 %v2278
        %v2289 = vpack.c.b16 %v2286, %v2285
        %v2290 = vpack.c.b16 %v2288, %v2287
        %v2294 = vsel %vm591, %v2280, 0
        %2296 = vmatprep.subr.bf16.mxu0 0
        %2297 = vmatpush1.bf16.msra.mxu0 %v2289
        %2298 = vmatprep.subr.bf16.mxu0 0
        %2299 = vmatpush1.bf16.msra.mxu0 %v2290
        %2300 = vmatprep.subr.bf16.mxu0 0
        %2301 = vmatpush1.bf16.msra.mxu0 0
        %2302 = vmatprep.subr.bf16.mxu0 0
        %2303 = vmatpush1.bf16.msra.mxu0 0
        %2304 = vmatprep.subr.bf16.mxu0 0
        %2305 = vmatpush1.bf16.msra.mxu0 0
        %2306 = vmatprep.subr.bf16.mxu0 0
        %2307 = vmatpush1.bf16.msra.mxu0 0
        %2308 = vmatprep.subr.bf16.mxu0 0
        %2309 = vmatpush1.bf16.msra.mxu0 0
        %2310 = vmatprep.subr.bf16.mxu0 0
        %2311 = vmatpush1.bf16.msra.mxu0 0
        %2312 = vmatprep.subr.bf16.mxu0 0
        %2313 = vmatpush1.bf16.msra.mxu0 0
        %2314 = vmatprep.subr.bf16.mxu0 0
        %2315 = vmatpush1.bf16.msra.mxu0 0
        %2316 = vmatprep.subr.bf16.mxu0 0
        %2317 = vmatpush1.bf16.msra.mxu0 0
        %2318 = vmatprep.subr.bf16.mxu0 0
        %2319 = vmatpush1.bf16.msra.mxu0 0
        %2320 = vmatprep.subr.bf16.mxu0 0
        %2321 = vmatpush1.bf16.msra.mxu0 0
        %2322 = vmatprep.subr.bf16.mxu0 0
        %2323 = vmatpush1.bf16.msra.mxu0 0
        %2324 = vmatprep.subr.bf16.mxu0 0
        %2325 = vmatpush1.bf16.msra.mxu0 0
        %2326 = vmatprep.subr.bf16.mxu0 0
        %2327 = vmatpush1.bf16.msra.mxu0 0
        %2328 = vmatprep.mubr.bf16.mxu0 0
        %2329 = vmatmul.mubr.bf16.gmra.mrb[0].mxu0 %v2294
        %v2330 = vpop.f32.mrb[0].mxu0
        %v2331 = vadd.f32 %v2279, %v2330
        %v2332 = vpop.f32.mrb[0].mxu0
        %v2333 = vpop.f32.mrb[0].mxu0
        %v2334 = vpop.f32.mrb[0].mxu0
        %2335 = vdwg.mxu0
        %v2336 = vtanh.pop %v2331
        %vm2337 = vcmask 253952
        %v2338 = vsel %vm2337, %v2336, 0.0
        %2339 = vadd.xlane.f32.xlu0 %v2338
        %v2340 = vpop.xlane.xlu0 %2339
        %v2341 = vrot.slane %v2340, 4
        %v2342 = vadd.f32 %v2340, %v2341
        %v2343 = vrot.slane %v2342, 2
        %v2344 = vadd.f32 %v2342, %v2343
        %v2345 = vrot.slane %v2344, 1
        %v2346 = vadd.f32 %v2344, %v2345
        %s2347 = vtos %v2346
        %v2348 = vstv %s2347
        %v2349 = vmul.f32 %v2348, 0.0
        %v2350 = vadd.f32 %v2274, %v2349
        %2351 = vst.msk [vmem:[%s576] sm:$0x1] %vm2337, %v2350
        %s2352 = sand.u32 %s428, 1
        %s2353 = scalar_lea.sflag [#allocation3], %s2352
        %s2354 = sand.u32 %s428, 1
        %s2355 = scalar_lea.vmem [#allocation2], %s2354
        // Predicated region
        $region93: #{_two_tower_forward.2} parent=91 // pred_check
          %p2356 = pneg %p438
        $region94: #{_two_tower_forward.2} parent=91 // pred_check_branch
          %2358 = sbr.rel (%p2356) target = $region96
        $region95: #{_two_tower_forward.2} parent=91 // pred_region
          %s2360 = ssub.s32 16, 16
          %2361 = vsyncadd %s2353, %s2360
          %s2362 = smul.addr %s32, 16
          %s2363 = scalar_lea.hbm %s18, %s2362
          %s2365 = sshll.u32 %s2355, 4
          %s2366 = int_to_ptr.vmem [resolvable:$true] %s2365
          %2368 = dma.vmem_to_hbm [thread:$0]  %s2366, 16, %s2363, %s2353
        $region96: #{_two_tower_forward.2} parent=91 // pred_fallthru
          _
      $region92: #{_two_tower_forward.2} parent=5 // pred_fallthru
        _
      %p2369 = scmp.le.s32.totalorder 2, %s27
      // Predicated region
      $region97: #{_two_tower_forward.2} parent=5 // pred_check
        %p2370 = pneg %p2369
      $region98: #{_two_tower_forward.2} parent=5 // pred_check_branch
        %2372 = sbr.rel (%p2370) target = $region100
      $region99: #{_two_tower_forward.2} parent=5 // pred_region
        %s2373 = ssub.s32 %s27, 2
        // Predicated region
        $region101: #{_two_tower_forward.2} parent=99 // pred_check
          %p2374 = pneg %p444
        $region102: #{_two_tower_forward.2} parent=99 // pred_check_branch
          %2376 = sbr.rel (%p2374) target = $region104
        $region103: #{_two_tower_forward.2} parent=99 // pred_region
          %s2377 = sand.u32 %s429, 1
          %s2378 = scalar_lea.sflag [#allocation3], %s2377
          %s2379 = sand.u32 %s429, 1
          %s2380 = scalar_lea.vmem [#allocation2], %s2379
          %2381 = dma.done %s2378, 16
        $region104: #{_two_tower_forward.2} parent=99 // pred_fallthru
          _
      $region100: #{_two_tower_forward.2} parent=5 // pred_fallthru
        _
    $region6: #{_two_tower_forward.2} parent=1 // loop_footer
      %s31 = sadd.s32 1, %s27
    $region7: #{_two_tower_forward.2} parent=1 // loop_footer_branch
      %26 = sbr.rel target = $region3
    $region8: #{_two_tower_forward.2} parent=1 // loop_exit
      _
    %2382 = vsyncpa [#allocation3], 1
    %s2383 = scalar_lea.sflag [#allocation3], 1
    %2384 = vsyncpa %s2383, 1

</llo_original>
